<compile_context>
chip_gen: v6e
topology: v6e:2x2x1
jax: 0.10.0
libtpu: 0.0.40
codegen_flags: <defaults>
</compile_context>

<pallas_src>
import functools

import jax
import jax.numpy as jnp
import numpy as np
from jax.experimental import pallas as pl
from jax.experimental.pallas import tpu as pltpu

_SQRT_2_OVER_PI = 0.7978845608028654
_NEG_BIG = -1e9  # softmax "mask out" value for the padded output channels


def ssgnet_kernel(x_ref, mask_ref,
                  w1_ref, g1_ref, b1_ref,
                  w2_ref, g2_ref, b2_ref,
                  w21_ref, g21_ref, b21_ref,
                  w22_ref, g22_ref, b22_ref,
                  wd1_ref, gd1_ref, bd1_ref,
                  o_ref, *, wp, n_lanes, eps):
    """One grid step = `fold` images laid side by side on the lane axis."""
    mask = mask_ref[...]                                # (1, N) f32, 1 on valid pixels

    def conv3x3(a, w_ref_):
        # a: (Cin, N) f32; padding-ring / lane-pad / cross-image positions are 0.
        # w_ref_: (Cout, 9*Cin) bf16 with column index t*Cin + c, t = kh*3 + kw.
        # Each tap is a static lane roll (XLU).  Wrapped values can only land on
        # positions that `mask` re-zeroes, so valid pixels always read in-image
        # data (no 128-lane flank-width limit any more).
        taps = []
        for t in range(9):
            kh, kw = divmod(t, 3)
            s = (kh - 1) * wp + (kw - 1)                # shift in padded-flat coords
            xs = a if s == 0 else pltpu.roll(a, shift=(-s) % n_lanes, axis=1)
            taps.append(xs.astype(jnp.bfloat16))
        stacked = jnp.concatenate(taps, axis=0)         # (9*Cin, N) bf16
        # Single wide-K bf16 MXU matmul, f32 accumulation (no per-tap VPU adds).
        return jnp.dot(w_ref_[...], stacked, preferred_element_type=jnp.float32)

    def layer_norm(y, g, b, n_ch):
        # channels_first LayerNorm == stats over the channel (sublane) axis.
        # Independent sum / sum-of-squares -> the two reductions can overlap.
        inv = 1.0 / n_ch
        s1 = jnp.sum(y, axis=0, keepdims=True) * inv
        s2 = jnp.sum(y * y, axis=0, keepdims=True) * inv
        var = jnp.maximum(s2 - s1 * s1, 0.0)
        return g * ((y - s1) * jax.lax.rsqrt(var + eps)) + b

    def gelu(x):
        # tanh-form GELU: transcendental on the EUP, ~half the VALU ops of erf.
        # TODO(synk): PyTorch nn.GELU is exact erf; this is the standard tanh approx.
        return 0.5 * x * (1.0 + jnp.tanh(_SQRT_2_OVER_PI * (x + 0.044715 * (x * x * x))))

    def block(a, w_ref_, g_ref_, b_ref_):
        y = conv3x3(a, w_ref_)
        y = layer_norm(y, g_ref_[...], b_ref_[...], y.shape[0])
        return gelu(y) * mask                           # re-zero padding for next conv

    x = x_ref[0]                                        # (16, N) f32, channels 3..15 == 0
    a1 = block(x, w1_ref, g1_ref, b1_ref)               # (32, N)
    a2 = block(a1, w2_ref, g2_ref, b2_ref)              # (64, N)
    a3 = block(a2, w21_ref, g21_ref, b21_ref)           # (32, N)
    cat = jnp.concatenate([a3, a1], axis=0)             # torch.cat([deconv2, conv1], dim=1)
    a4 = block(cat, w22_ref, g22_ref, b22_ref)          # (32, N)

    # deconv1: 1x1 conv + LN + Softmax(dim=1) over channels (sublane axis).
    # Channel dim is padded 3 -> 8 host-side (weight rows 3..7 zero, gamma 0,
    # beta -1e9): LN stats use the true 3 channels (pad rows are exactly 0),
    # exp(pad) underflows to exactly 0, and the store is an unmasked 8-row vst.
    y = jnp.dot(wd1_ref[...], a4.astype(jnp.bfloat16),
                preferred_element_type=jnp.float32)     # (8, N)
    y = layer_norm(y, gd1_ref[...], bd1_ref[...], 3)
    m = jnp.max(y, axis=0, keepdims=True)
    e = jnp.exp(y - m)
    # exact division (approx reciprocal would break the sum-to-1 property at 1e-5)
    o_ref[0] = e / jnp.sum(e, axis=0, keepdims=True)


def _prep_conv_w(w, cin_pad=None):
    """(Cout, Cin, 3, 3) -> bf16 (Cout, 9*Cin'); column index t*Cin' + c, t = kh*3+kw."""
    cout, cin = w.shape[0], w.shape[1]
    w = jnp.asarray(w, jnp.float32)
    if cin_pad is not None and cin_pad > cin:
        w = jnp.pad(w, ((0, 0), (0, cin_pad - cin), (0, 0), (0, 0)))
        cin = cin_pad
    return jnp.transpose(w, (0, 2, 3, 1)).reshape(cout, 9 * cin).astype(jnp.bfloat16)


def _const_spec(a):
    zeros = (0,) * a.ndim
    return pl.BlockSpec(a.shape, lambda b, _z=zeros: _z)


def ssgnet_forward(x_nchw, p, *, eps=1e-6, fold=None):
    """SSGNet.forward; NCHW in, NCHW out (softmax over channels)."""
    B, cin, H, W = x_nchw.shape
    hp, wp = H + 2, W + 2
    mp = hp * wp
    mpad = ((mp + 127) // 128) * 128                    # lane-pad each image to 128 mult
    assert wp + 1 < mpad                                # max |tap shift| stays in-image

    # Fold a few images onto the lane axis of one grid step, but keep >= 2 grid
    # steps whenever B >= 2 so ("parallel",) can shard across v7x's two TCs.
    if fold is None:
        fold = min(8, max(1, B // 2))
    n_steps = -(-B // fold)
    b_pad = n_steps * fold
    n_lanes = fold * mpad

    cin_p = 16  # pad 3->16 input channels: keeps the bf16 tap stack sublane-aligned
    xpad = jnp.pad(jnp.asarray(x_nchw, jnp.float32),
                   ((0, b_pad - B), (0, cin_p - cin), (1, 1), (1, 1)))
    xpad = xpad.reshape(b_pad, cin_p, mp)
    xpad = jnp.pad(xpad, ((0, 0), (0, 0), (0, mpad - mp)))
    xf = xpad.reshape(n_steps, fold, cin_p, mpad).transpose(0, 2, 1, 3)
    xf = xf.reshape(n_steps, cin_p, n_lanes)

    # Interior (valid pixel) mask in padded-flat coordinates, tiled across the fold.
    yy, xx = np.meshgrid(np.arange(hp), np.arange(wp), indexing="ij")
    valid = ((yy >= 1) & (yy <= H) & (xx >= 1) & (xx <= W)).reshape(mp)
    m_np = np.zeros((mpad,), np.float32)
    m_np[:mp] = valid.astype(np.float32)
    mask = jnp.asarray(np.tile(m_np, fold)[None, :])    # (1, N)

    col = lambda a: jnp.asarray(a, jnp.float32).reshape(-1, 1)
    # deconv1 (1x1) padded to 8 output channels for the unmasked store.
    wd1 = jnp.pad(jnp.asarray(p["d1_w"], jnp.float32).reshape(3, 32),
                  ((0, 5), (0, 0))).astype(jnp.bfloat16)            # (8, 32)
    gd1 = jnp.pad(col(p["d1_g"]), ((0, 5), (0, 0)))                 # pad gamma = 0
    bd1 = jnp.pad(col(p["d1_b"]), ((0, 5), (0, 0)),
                  constant_values=_NEG_BIG)                         # pad beta = -1e9

    operands = (
        xf, mask,
        _prep_conv_w(p["conv1_w"], cin_pad=cin_p), col(p["conv1_g"]), col(p["conv1_b"]),
        _prep_conv_w(p["conv2_w"]), col(p["conv2_g"]), col(p["conv2_b"]),
        _prep_conv_w(p["d21_w"]), col(p["d21_g"]), col(p["d21_b"]),
        _prep_conv_w(p["d22_w"]), col(p["d22_g"]), col(p["d22_b"]),
        wd1, gd1, bd1,
    )

    in_specs = [pl.BlockSpec((1, cin_p, n_lanes), lambda b: (b, 0, 0))]
    in_specs += [_const_spec(a) for a in operands[1:]]

    kern = functools.partial(ssgnet_kernel, wp=wp, n_lanes=n_lanes, eps=eps)
    out = pl.pallas_call(
        kern,
        out_shape=jax.ShapeDtypeStruct((n_steps, 8, n_lanes), jnp.float32),
        grid=(n_steps,),
        in_specs=in_specs,
        out_specs=pl.BlockSpec((1, 8, n_lanes), lambda b: (b, 0, 0)),
        compiler_params=pltpu.CompilerParams(dimension_semantics=("parallel",)),
    )(*operands)

    out = out[:, :3, :].reshape(n_steps, 3, fold, mpad).transpose(0, 2, 1, 3)
    out = out.reshape(b_pad, 3, mpad)[:B, :, :mp].reshape(B, 3, hp, wp)
    return out[:, :, 1:H + 1, 1:W + 1]


# ----------------------------------------------------------------------------
# Pure-JAX reference of the same forward pass (for validation only).
# `match_kernel=True` mirrors the kernel's sanctioned numerics (bf16 MXU
# operands with f32 accumulation, tanh-form GELU) so the comparison isolates
# layout / structural correctness of the Pallas kernel.
# ----------------------------------------------------------------------------
def _ref_block(x, w, g, b, *, padding, act, eps=1e-6, match_kernel=False):
    xc, wc = (x, jnp.asarray(w, jnp.float32))
    if match_kernel:
        xc, wc = xc.astype(jnp.bfloat16), wc.astype(jnp.bfloat16)
    y = jax.lax.conv_general_dilated(
        xc, wc, window_strides=(1, 1),
        padding=((padding, padding), (padding, padding)),
        dimension_numbers=("NCHW", "OIHW", "NCHW"),
        preferred_element_type=jnp.float32,
        precision=jax.lax.Precision.HIGHEST)
    u = jnp.mean(y, axis=1, keepdims=True)
    s = jnp.mean((y - u) ** 2, axis=1, keepdims=True)
    y = (y - u) / jnp.sqrt(s + eps)
    y = g[None, :, None, None] * y + b[None, :, None, None]
    if act == "gelu":
        if match_kernel:
            return 0.5 * y * (1.0 + jnp.tanh(_SQRT_2_OVER_PI * (y + 0.044715 * y ** 3)))
        return jax.nn.gelu(y, approximate=False)
    return jax.nn.softmax(y, axis=1)


def ssgnet_reference(x, p, *, match_kernel=False):
    mk = dict(match_kernel=match_kernel)
    c1 = _ref_block(x, p["conv1_w"], p["conv1_g"], p["conv1_b"], padding=1, act="gelu", **mk)
    c2 = _ref_block(c1, p["conv2_w"], p["conv2_g"], p["conv2_b"], padding=1, act="gelu", **mk)
    d = _ref_block(c2, p["d21_w"], p["d21_g"], p["d21_b"], padding=1, act="gelu", **mk)
    d = _ref_block(jnp.concatenate([d, c1], axis=1),
                   p["d22_w"], p["d22_g"], p["d22_b"], padding=1, act="gelu", **mk)
    return _ref_block(d, p["d1_w"], p["d1_g"], p["d1_b"], padding=0, act="softmax", **mk)


def init_params(key):
    """Deterministic synthetic parameters (shapes from SSGNet.__init__)."""
    def conv_w(k, cout, cin, ks):
        bound = 1.0 / jnp.sqrt(jnp.float32(cin * ks * ks))  # torch default-ish
        return jax.random.uniform(k, (cout, cin, ks, ks), jnp.float32, -bound, bound)

    ks = jax.random.split(key, 5)
    p = {}
    p["conv1_w"], p["conv1_g"], p["conv1_b"] = conv_w(ks[0], 32, 3, 3), jnp.ones(32), jnp.zeros(32)
    p["conv2_w"], p["conv2_g"], p["conv2_b"] = conv_w(ks[1], 64, 32, 3), jnp.ones(64), jnp.zeros(64)
    p["d21_w"], p["d21_g"], p["d21_b"] = conv_w(ks[2], 32, 64, 3), jnp.ones(32), jnp.zeros(32)
    p["d22_w"], p["d22_g"], p["d22_b"] = conv_w(ks[3], 32, 64, 3), jnp.ones(32), jnp.zeros(32)
    p["d1_w"], p["d1_g"], p["d1_b"] = conv_w(ks[4], 3, 32, 1), jnp.ones(3), jnp.zeros(3)
    return p


if __name__ == "__main__":
    key = jax.random.PRNGKey(0)
    kx, kp = jax.random.split(key)
    x = jax.random.normal(kx, (2, 3, 16, 16), jnp.float32)   # NCHW like PyTorch
    params = init_params(kp)

    y = jax.jit(ssgnet_forward)(x, params)
    jax.block_until_ready(y)

    assert y.shape == (2, 3, 16, 16)
    assert bool(jnp.all(jnp.isfinite(y)))
    # Softmax(dim=1) -> channels sum to 1.
    assert bool(jnp.allclose(jnp.sum(y, axis=1), 1.0, atol=1e-5))

    # Structural / layout check: reference mirroring the kernel's sanctioned
    # numerics (bf16 MXU operands, tanh GELU); residual diffs are summation
    # order only.
    y_match = ssgnet_reference(x, params, match_kernel=True)
    err_match = float(jnp.max(jnp.abs(y - y_match)))
    assert err_match < 2e-2, err_match

    # Numerics sanity vs the exact f32 / exact-erf reference.  Mean abs error:
    # the final LayerNorm is over only 3 channels, so a handful of
    # near-degenerate pixels can amplify the intentional bf16/tanh
    # approximation arbitrarily in a max-norm.
    y_exact = ssgnet_reference(x, params, match_kernel=False)
    mean_err = float(jnp.mean(jnp.abs(y - y_exact)))
    assert mean_err < 2e-2, mean_err

    print("KERNEL_OK")
</pallas_src>

<mosaic_0001>
module attributes {stable_mosaic.version = 11 : i64} {
  func.func @ssgnet_kernel(%arg0: i32, %arg1: memref<1x16x384xf32, #tpu.memory_space<vmem>>, %arg2: memref<1x384xf32, #tpu.memory_space<vmem>>, %arg3: memref<32x144xbf16, #tpu.memory_space<vmem>>, %arg4: memref<32x1xf32, #tpu.memory_space<vmem>>, %arg5: memref<32x1xf32, #tpu.memory_space<vmem>>, %arg6: memref<64x288xbf16, #tpu.memory_space<vmem>>, %arg7: memref<64x1xf32, #tpu.memory_space<vmem>>, %arg8: memref<64x1xf32, #tpu.memory_space<vmem>>, %arg9: memref<32x576xbf16, #tpu.memory_space<vmem>>, %arg10: memref<32x1xf32, #tpu.memory_space<vmem>>, %arg11: memref<32x1xf32, #tpu.memory_space<vmem>>, %arg12: memref<32x576xbf16, #tpu.memory_space<vmem>>, %arg13: memref<32x1xf32, #tpu.memory_space<vmem>>, %arg14: memref<32x1xf32, #tpu.memory_space<vmem>>, %arg15: memref<8x32xbf16, #tpu.memory_space<vmem>>, %arg16: memref<8x1xf32, #tpu.memory_space<vmem>>, %arg17: memref<8x1xf32, #tpu.memory_space<vmem>>, %arg18: memref<1x8x384xf32, #tpu.memory_space<vmem>>) attributes {dimension_semantics = [#tpu.dimension_semantics<parallel>], iteration_bounds = array<i64: 2>, scalar_prefetch = 0 : i64, scratch_operands = 0 : i64, tpu.core_type = #tpu.core_type<tc>, window_params = [{transform_indices = @transform_0, window_bounds = array<i64: 1, 16, 384>}, {pipeline_mode = #tpu.pipeline_mode<synchronous>, transform_indices = @transform_1, window_bounds = array<i64: 1, 384>}, {pipeline_mode = #tpu.pipeline_mode<synchronous>, transform_indices = @transform_2, window_bounds = array<i64: 32, 144>}, {pipeline_mode = #tpu.pipeline_mode<synchronous>, transform_indices = @transform_3, window_bounds = array<i64: 32, 1>}, {pipeline_mode = #tpu.pipeline_mode<synchronous>, transform_indices = @transform_4, window_bounds = array<i64: 32, 1>}, {pipeline_mode = #tpu.pipeline_mode<synchronous>, transform_indices = @transform_5, window_bounds = array<i64: 64, 288>}, {pipeline_mode = #tpu.pipeline_mode<synchronous>, transform_indices = @transform_6, window_bounds = array<i64: 64, 1>}, {pipeline_mode = #tpu.pipeline_mode<synchronous>, transform_indices = @transform_7, window_bounds = array<i64: 64, 1>}, {pipeline_mode = #tpu.pipeline_mode<synchronous>, transform_indices = @transform_8, window_bounds = array<i64: 32, 576>}, {pipeline_mode = #tpu.pipeline_mode<synchronous>, transform_indices = @transform_9, window_bounds = array<i64: 32, 1>}, {pipeline_mode = #tpu.pipeline_mode<synchronous>, transform_indices = @transform_10, window_bounds = array<i64: 32, 1>}, {pipeline_mode = #tpu.pipeline_mode<synchronous>, transform_indices = @transform_11, window_bounds = array<i64: 32, 576>}, {pipeline_mode = #tpu.pipeline_mode<synchronous>, transform_indices = @transform_12, window_bounds = array<i64: 32, 1>}, {pipeline_mode = #tpu.pipeline_mode<synchronous>, transform_indices = @transform_13, window_bounds = array<i64: 32, 1>}, {pipeline_mode = #tpu.pipeline_mode<synchronous>, transform_indices = @transform_14, window_bounds = array<i64: 8, 32>}, {pipeline_mode = #tpu.pipeline_mode<synchronous>, transform_indices = @transform_15, window_bounds = array<i64: 8, 1>}, {pipeline_mode = #tpu.pipeline_mode<synchronous>, transform_indices = @transform_16, window_bounds = array<i64: 8, 1>}, {transform_indices = @transform_17, window_bounds = array<i64: 1, 8, 384>}]} {
    %c0 = arith.constant 0 : index
    %c0_0 = arith.constant 0 : index
    %0 = vector.load %arg2[%c0, %c0_0] : memref<1x384xf32, #tpu.memory_space<vmem>>, vector<1x384xf32>
    %c0_1 = arith.constant 0 : index
    %c0_2 = arith.constant 0 : index
    %c0_3 = arith.constant 0 : index
    %1 = vector.load %arg1[%c0_1, %c0_2, %c0_3] : memref<1x16x384xf32, #tpu.memory_space<vmem>>, vector<1x16x384xf32>
    %2 = vector.shape_cast %1 : vector<1x16x384xf32> to vector<16x384xf32>
    %c19_i32 = arith.constant 19 : i32
    %3 = tpu.dynamic_rotate %2 by %c19_i32 dim 1 : vector<16x384xf32>, i32 -> vector<16x384xf32>
    %4 = arith.truncf %3 : vector<16x384xf32> to vector<16x384xbf16>
    %c18_i32 = arith.constant 18 : i32
    %5 = tpu.dynamic_rotate %2 by %c18_i32 dim 1 : vector<16x384xf32>, i32 -> vector<16x384xf32>
    %6 = arith.truncf %5 : vector<16x384xf32> to vector<16x384xbf16>
    %c17_i32 = arith.constant 17 : i32
    %7 = tpu.dynamic_rotate %2 by %c17_i32 dim 1 : vector<16x384xf32>, i32 -> vector<16x384xf32>
    %8 = arith.truncf %7 : vector<16x384xf32> to vector<16x384xbf16>
    %c1_i32 = arith.constant 1 : i32
    %9 = tpu.dynamic_rotate %2 by %c1_i32 dim 1 : vector<16x384xf32>, i32 -> vector<16x384xf32>
    %10 = arith.truncf %9 : vector<16x384xf32> to vector<16x384xbf16>
    %11 = arith.truncf %2 : vector<16x384xf32> to vector<16x384xbf16>
    %c383_i32 = arith.constant 383 : i32
    %12 = tpu.dynamic_rotate %2 by %c383_i32 dim 1 : vector<16x384xf32>, i32 -> vector<16x384xf32>
    %13 = arith.truncf %12 : vector<16x384xf32> to vector<16x384xbf16>
    %c367_i32 = arith.constant 367 : i32
    %14 = tpu.dynamic_rotate %2 by %c367_i32 dim 1 : vector<16x384xf32>, i32 -> vector<16x384xf32>
    %15 = arith.truncf %14 : vector<16x384xf32> to vector<16x384xbf16>
    %c366_i32 = arith.constant 366 : i32
    %16 = tpu.dynamic_rotate %2 by %c366_i32 dim 1 : vector<16x384xf32>, i32 -> vector<16x384xf32>
    %17 = arith.truncf %16 : vector<16x384xf32> to vector<16x384xbf16>
    %c365_i32 = arith.constant 365 : i32
    %18 = tpu.dynamic_rotate %2 by %c365_i32 dim 1 : vector<16x384xf32>, i32 -> vector<16x384xf32>
    %19 = arith.truncf %18 : vector<16x384xf32> to vector<16x384xbf16>
    %20 = tpu.concatenate %4, %6, %8, %10, %11, %13, %15, %17, %19 in 0 : vector<16x384xbf16>, vector<16x384xbf16>, vector<16x384xbf16>, vector<16x384xbf16>, vector<16x384xbf16>, vector<16x384xbf16>, vector<16x384xbf16>, vector<16x384xbf16>, vector<16x384xbf16> -> vector<144x384xbf16>
    %c0_4 = arith.constant 0 : index
    %c0_5 = arith.constant 0 : index
    %21 = vector.load %arg3[%c0_4, %c0_5] : memref<32x144xbf16, #tpu.memory_space<vmem>>, vector<32x144xbf16>
    %cst = arith.constant dense<0.000000e+00> : vector<32x384xf32>
    %22 = tpu.matmul %21, %20, %cst {dimension_numbers = #tpu.dot_dimension_numbers<[1], [0], [0], [1], [0, 0, 1, 1], [], []>} : vector<32x144xbf16>, vector<144x384xbf16>, vector<32x384xf32> -> vector<32x384xf32>
    %c0_6 = arith.constant 0 : index
    %c0_7 = arith.constant 0 : index
    %23 = vector.load %arg4[%c0_6, %c0_7] : memref<32x1xf32, #tpu.memory_space<vmem>>, vector<32x1xf32>
    %c0_8 = arith.constant 0 : index
    %c0_9 = arith.constant 0 : index
    %24 = vector.load %arg5[%c0_8, %c0_9] : memref<32x1xf32, #tpu.memory_space<vmem>>, vector<32x1xf32>
    %cst_10 = arith.constant dense<0.000000e+00> : vector<384xf32>
    %25 = vector.multi_reduction <add>, %22, %cst_10 [0] : vector<32x384xf32> to vector<384xf32>
    %26 = vector.shape_cast %25 : vector<384xf32> to vector<1x384xf32>
    %cst_11 = arith.constant 3.125000e-02 : f32
    %27 = vector.broadcast %cst_11 : f32 to vector<1x384xf32>
    %28 = arith.mulf %26, %27 : vector<1x384xf32>
    %29 = arith.mulf %22, %22 : vector<32x384xf32>
    %cst_12 = arith.constant dense<0.000000e+00> : vector<384xf32>
    %30 = vector.multi_reduction <add>, %29, %cst_12 [0] : vector<32x384xf32> to vector<384xf32>
    %31 = vector.shape_cast %30 : vector<384xf32> to vector<1x384xf32>
    %cst_13 = arith.constant 3.125000e-02 : f32
    %32 = vector.broadcast %cst_13 : f32 to vector<1x384xf32>
    %33 = arith.mulf %31, %32 : vector<1x384xf32>
    %34 = arith.mulf %28, %28 : vector<1x384xf32>
    %35 = arith.subf %33, %34 : vector<1x384xf32>
    %cst_14 = arith.constant 0.000000e+00 : f32
    %36 = vector.broadcast %cst_14 : f32 to vector<1x384xf32>
    %37 = arith.maximumf %35, %36 : vector<1x384xf32>
    %38 = vector.broadcast %28 : vector<1x384xf32> to vector<32x384xf32>
    %39 = arith.subf %22, %38 : vector<32x384xf32>
    %cst_15 = arith.constant 9.99999997E-7 : f32
    %40 = vector.broadcast %cst_15 : f32 to vector<1x384xf32>
    %41 = arith.addf %37, %40 : vector<1x384xf32>
    %42 = math.rsqrt %41 : vector<1x384xf32>
    %43 = vector.broadcast %42 : vector<1x384xf32> to vector<32x384xf32>
    %44 = arith.mulf %39, %43 : vector<32x384xf32>
    %45 = vector.broadcast %23 : vector<32x1xf32> to vector<32x384xf32>
    %46 = arith.mulf %45, %44 : vector<32x384xf32>
    %47 = vector.broadcast %24 : vector<32x1xf32> to vector<32x384xf32>
    %48 = arith.addf %46, %47 : vector<32x384xf32>
    %cst_16 = arith.constant 5.000000e-01 : f32
    %49 = vector.broadcast %cst_16 : f32 to vector<32x384xf32>
    %50 = arith.mulf %49, %48 : vector<32x384xf32>
    %51 = arith.mulf %48, %48 : vector<32x384xf32>
    %52 = arith.mulf %51, %48 : vector<32x384xf32>
    %cst_17 = arith.constant 4.471500e-02 : f32
    %53 = vector.broadcast %cst_17 : f32 to vector<32x384xf32>
    %54 = arith.mulf %53, %52 : vector<32x384xf32>
    %55 = arith.addf %48, %54 : vector<32x384xf32>
    %cst_18 = arith.constant 0.797884583 : f32
    %56 = vector.broadcast %cst_18 : f32 to vector<32x384xf32>
    %57 = arith.mulf %56, %55 : vector<32x384xf32>
    %58 = math.tanh %57 : vector<32x384xf32>
    %cst_19 = arith.constant 1.000000e+00 : f32
    %59 = vector.broadcast %cst_19 : f32 to vector<32x384xf32>
    %60 = arith.addf %59, %58 : vector<32x384xf32>
    %61 = arith.mulf %50, %60 : vector<32x384xf32>
    %62 = vector.broadcast %0 : vector<1x384xf32> to vector<32x384xf32>
    %63 = arith.mulf %61, %62 : vector<32x384xf32>
    %c19_i32_20 = arith.constant 19 : i32
    %64 = tpu.dynamic_rotate %63 by %c19_i32_20 dim 1 : vector<32x384xf32>, i32 -> vector<32x384xf32>
    %65 = arith.truncf %64 : vector<32x384xf32> to vector<32x384xbf16>
    %c18_i32_21 = arith.constant 18 : i32
    %66 = tpu.dynamic_rotate %63 by %c18_i32_21 dim 1 : vector<32x384xf32>, i32 -> vector<32x384xf32>
    %67 = arith.truncf %66 : vector<32x384xf32> to vector<32x384xbf16>
    %c17_i32_22 = arith.constant 17 : i32
    %68 = tpu.dynamic_rotate %63 by %c17_i32_22 dim 1 : vector<32x384xf32>, i32 -> vector<32x384xf32>
    %69 = arith.truncf %68 : vector<32x384xf32> to vector<32x384xbf16>
    %c1_i32_23 = arith.constant 1 : i32
    %70 = tpu.dynamic_rotate %63 by %c1_i32_23 dim 1 : vector<32x384xf32>, i32 -> vector<32x384xf32>
    %71 = arith.truncf %70 : vector<32x384xf32> to vector<32x384xbf16>
    %72 = arith.truncf %63 : vector<32x384xf32> to vector<32x384xbf16>
    %c383_i32_24 = arith.constant 383 : i32
    %73 = tpu.dynamic_rotate %63 by %c383_i32_24 dim 1 : vector<32x384xf32>, i32 -> vector<32x384xf32>
    %74 = arith.truncf %73 : vector<32x384xf32> to vector<32x384xbf16>
    %c367_i32_25 = arith.constant 367 : i32
    %75 = tpu.dynamic_rotate %63 by %c367_i32_25 dim 1 : vector<32x384xf32>, i32 -> vector<32x384xf32>
    %76 = arith.truncf %75 : vector<32x384xf32> to vector<32x384xbf16>
    %c366_i32_26 = arith.constant 366 : i32
    %77 = tpu.dynamic_rotate %63 by %c366_i32_26 dim 1 : vector<32x384xf32>, i32 -> vector<32x384xf32>
    %78 = arith.truncf %77 : vector<32x384xf32> to vector<32x384xbf16>
    %c365_i32_27 = arith.constant 365 : i32
    %79 = tpu.dynamic_rotate %63 by %c365_i32_27 dim 1 : vector<32x384xf32>, i32 -> vector<32x384xf32>
    %80 = arith.truncf %79 : vector<32x384xf32> to vector<32x384xbf16>
    %81 = tpu.concatenate %65, %67, %69, %71, %72, %74, %76, %78, %80 in 0 : vector<32x384xbf16>, vector<32x384xbf16>, vector<32x384xbf16>, vector<32x384xbf16>, vector<32x384xbf16>, vector<32x384xbf16>, vector<32x384xbf16>, vector<32x384xbf16>, vector<32x384xbf16> -> vector<288x384xbf16>
    %c0_28 = arith.constant 0 : index
    %c0_29 = arith.constant 0 : index
    %82 = vector.load %arg6[%c0_28, %c0_29] : memref<64x288xbf16, #tpu.memory_space<vmem>>, vector<64x288xbf16>
    %cst_30 = arith.constant dense<0.000000e+00> : vector<64x384xf32>
    %83 = tpu.matmul %82, %81, %cst_30 {dimension_numbers = #tpu.dot_dimension_numbers<[1], [0], [0], [1], [0, 0, 1, 1], [], []>} : vector<64x288xbf16>, vector<288x384xbf16>, vector<64x384xf32> -> vector<64x384xf32>
    %c0_31 = arith.constant 0 : index
    %c0_32 = arith.constant 0 : index
    %84 = vector.load %arg7[%c0_31, %c0_32] : memref<64x1xf32, #tpu.memory_space<vmem>>, vector<64x1xf32>
    %c0_33 = arith.constant 0 : index
    %c0_34 = arith.constant 0 : index
    %85 = vector.load %arg8[%c0_33, %c0_34] : memref<64x1xf32, #tpu.memory_space<vmem>>, vector<64x1xf32>
    %cst_35 = arith.constant dense<0.000000e+00> : vector<384xf32>
    %86 = vector.multi_reduction <add>, %83, %cst_35 [0] : vector<64x384xf32> to vector<384xf32>
    %87 = vector.shape_cast %86 : vector<384xf32> to vector<1x384xf32>
    %cst_36 = arith.constant 1.562500e-02 : f32
    %88 = vector.broadcast %cst_36 : f32 to vector<1x384xf32>
    %89 = arith.mulf %87, %88 : vector<1x384xf32>
    %90 = arith.mulf %83, %83 : vector<64x384xf32>
    %cst_37 = arith.constant dense<0.000000e+00> : vector<384xf32>
    %91 = vector.multi_reduction <add>, %90, %cst_37 [0] : vector<64x384xf32> to vector<384xf32>
    %92 = vector.shape_cast %91 : vector<384xf32> to vector<1x384xf32>
    %cst_38 = arith.constant 1.562500e-02 : f32
    %93 = vector.broadcast %cst_38 : f32 to vector<1x384xf32>
    %94 = arith.mulf %92, %93 : vector<1x384xf32>
    %95 = arith.mulf %89, %89 : vector<1x384xf32>
    %96 = arith.subf %94, %95 : vector<1x384xf32>
    %cst_39 = arith.constant 0.000000e+00 : f32
    %97 = vector.broadcast %cst_39 : f32 to vector<1x384xf32>
    %98 = arith.maximumf %96, %97 : vector<1x384xf32>
    %99 = vector.broadcast %89 : vector<1x384xf32> to vector<64x384xf32>
    %100 = arith.subf %83, %99 : vector<64x384xf32>
    %cst_40 = arith.constant 9.99999997E-7 : f32
    %101 = vector.broadcast %cst_40 : f32 to vector<1x384xf32>
    %102 = arith.addf %98, %101 : vector<1x384xf32>
    %103 = math.rsqrt %102 : vector<1x384xf32>
    %104 = vector.broadcast %103 : vector<1x384xf32> to vector<64x384xf32>
    %105 = arith.mulf %100, %104 : vector<64x384xf32>
    %106 = vector.broadcast %84 : vector<64x1xf32> to vector<64x384xf32>
    %107 = arith.mulf %106, %105 : vector<64x384xf32>
    %108 = vector.broadcast %85 : vector<64x1xf32> to vector<64x384xf32>
    %109 = arith.addf %107, %108 : vector<64x384xf32>
    %cst_41 = arith.constant 5.000000e-01 : f32
    %110 = vector.broadcast %cst_41 : f32 to vector<64x384xf32>
    %111 = arith.mulf %110, %109 : vector<64x384xf32>
    %112 = arith.mulf %109, %109 : vector<64x384xf32>
    %113 = arith.mulf %112, %109 : vector<64x384xf32>
    %cst_42 = arith.constant 4.471500e-02 : f32
    %114 = vector.broadcast %cst_42 : f32 to vector<64x384xf32>
    %115 = arith.mulf %114, %113 : vector<64x384xf32>
    %116 = arith.addf %109, %115 : vector<64x384xf32>
    %cst_43 = arith.constant 0.797884583 : f32
    %117 = vector.broadcast %cst_43 : f32 to vector<64x384xf32>
    %118 = arith.mulf %117, %116 : vector<64x384xf32>
    %119 = math.tanh %118 : vector<64x384xf32>
    %cst_44 = arith.constant 1.000000e+00 : f32
    %120 = vector.broadcast %cst_44 : f32 to vector<64x384xf32>
    %121 = arith.addf %120, %119 : vector<64x384xf32>
    %122 = arith.mulf %111, %121 : vector<64x384xf32>
    %123 = vector.broadcast %0 : vector<1x384xf32> to vector<64x384xf32>
    %124 = arith.mulf %122, %123 : vector<64x384xf32>
    %c19_i32_45 = arith.constant 19 : i32
    %125 = tpu.dynamic_rotate %124 by %c19_i32_45 dim 1 : vector<64x384xf32>, i32 -> vector<64x384xf32>
    %126 = arith.truncf %125 : vector<64x384xf32> to vector<64x384xbf16>
    %c18_i32_46 = arith.constant 18 : i32
    %127 = tpu.dynamic_rotate %124 by %c18_i32_46 dim 1 : vector<64x384xf32>, i32 -> vector<64x384xf32>
    %128 = arith.truncf %127 : vector<64x384xf32> to vector<64x384xbf16>
    %c17_i32_47 = arith.constant 17 : i32
    %129 = tpu.dynamic_rotate %124 by %c17_i32_47 dim 1 : vector<64x384xf32>, i32 -> vector<64x384xf32>
    %130 = arith.truncf %129 : vector<64x384xf32> to vector<64x384xbf16>
    %c1_i32_48 = arith.constant 1 : i32
    %131 = tpu.dynamic_rotate %124 by %c1_i32_48 dim 1 : vector<64x384xf32>, i32 -> vector<64x384xf32>
    %132 = arith.truncf %131 : vector<64x384xf32> to vector<64x384xbf16>
    %133 = arith.truncf %124 : vector<64x384xf32> to vector<64x384xbf16>
    %c383_i32_49 = arith.constant 383 : i32
    %134 = tpu.dynamic_rotate %124 by %c383_i32_49 dim 1 : vector<64x384xf32>, i32 -> vector<64x384xf32>
    %135 = arith.truncf %134 : vector<64x384xf32> to vector<64x384xbf16>
    %c367_i32_50 = arith.constant 367 : i32
    %136 = tpu.dynamic_rotate %124 by %c367_i32_50 dim 1 : vector<64x384xf32>, i32 -> vector<64x384xf32>
    %137 = arith.truncf %136 : vector<64x384xf32> to vector<64x384xbf16>
    %c366_i32_51 = arith.constant 366 : i32
    %138 = tpu.dynamic_rotate %124 by %c366_i32_51 dim 1 : vector<64x384xf32>, i32 -> vector<64x384xf32>
    %139 = arith.truncf %138 : vector<64x384xf32> to vector<64x384xbf16>
    %c365_i32_52 = arith.constant 365 : i32
    %140 = tpu.dynamic_rotate %124 by %c365_i32_52 dim 1 : vector<64x384xf32>, i32 -> vector<64x384xf32>
    %141 = arith.truncf %140 : vector<64x384xf32> to vector<64x384xbf16>
    %142 = tpu.concatenate %126, %128, %130, %132, %133, %135, %137, %139, %141 in 0 : vector<64x384xbf16>, vector<64x384xbf16>, vector<64x384xbf16>, vector<64x384xbf16>, vector<64x384xbf16>, vector<64x384xbf16>, vector<64x384xbf16>, vector<64x384xbf16>, vector<64x384xbf16> -> vector<576x384xbf16>
    %c0_53 = arith.constant 0 : index
    %c0_54 = arith.constant 0 : index
    %143 = vector.load %arg9[%c0_53, %c0_54] : memref<32x576xbf16, #tpu.memory_space<vmem>>, vector<32x576xbf16>
    %cst_55 = arith.constant dense<0.000000e+00> : vector<32x384xf32>
    %144 = tpu.matmul %143, %142, %cst_55 {dimension_numbers = #tpu.dot_dimension_numbers<[1], [0], [0], [1], [0, 0, 1, 1], [], []>} : vector<32x576xbf16>, vector<576x384xbf16>, vector<32x384xf32> -> vector<32x384xf32>
    %c0_56 = arith.constant 0 : index
    %c0_57 = arith.constant 0 : index
    %145 = vector.load %arg10[%c0_56, %c0_57] : memref<32x1xf32, #tpu.memory_space<vmem>>, vector<32x1xf32>
    %c0_58 = arith.constant 0 : index
    %c0_59 = arith.constant 0 : index
    %146 = vector.load %arg11[%c0_58, %c0_59] : memref<32x1xf32, #tpu.memory_space<vmem>>, vector<32x1xf32>
    %cst_60 = arith.constant dense<0.000000e+00> : vector<384xf32>
    %147 = vector.multi_reduction <add>, %144, %cst_60 [0] : vector<32x384xf32> to vector<384xf32>
    %148 = vector.shape_cast %147 : vector<384xf32> to vector<1x384xf32>
    %cst_61 = arith.constant 3.125000e-02 : f32
    %149 = vector.broadcast %cst_61 : f32 to vector<1x384xf32>
    %150 = arith.mulf %148, %149 : vector<1x384xf32>
    %151 = arith.mulf %144, %144 : vector<32x384xf32>
    %cst_62 = arith.constant dense<0.000000e+00> : vector<384xf32>
    %152 = vector.multi_reduction <add>, %151, %cst_62 [0] : vector<32x384xf32> to vector<384xf32>
    %153 = vector.shape_cast %152 : vector<384xf32> to vector<1x384xf32>
    %cst_63 = arith.constant 3.125000e-02 : f32
    %154 = vector.broadcast %cst_63 : f32 to vector<1x384xf32>
    %155 = arith.mulf %153, %154 : vector<1x384xf32>
    %156 = arith.mulf %150, %150 : vector<1x384xf32>
    %157 = arith.subf %155, %156 : vector<1x384xf32>
    %cst_64 = arith.constant 0.000000e+00 : f32
    %158 = vector.broadcast %cst_64 : f32 to vector<1x384xf32>
    %159 = arith.maximumf %157, %158 : vector<1x384xf32>
    %160 = vector.broadcast %150 : vector<1x384xf32> to vector<32x384xf32>
    %161 = arith.subf %144, %160 : vector<32x384xf32>
    %cst_65 = arith.constant 9.99999997E-7 : f32
    %162 = vector.broadcast %cst_65 : f32 to vector<1x384xf32>
    %163 = arith.addf %159, %162 : vector<1x384xf32>
    %164 = math.rsqrt %163 : vector<1x384xf32>
    %165 = vector.broadcast %164 : vector<1x384xf32> to vector<32x384xf32>
    %166 = arith.mulf %161, %165 : vector<32x384xf32>
    %167 = vector.broadcast %145 : vector<32x1xf32> to vector<32x384xf32>
    %168 = arith.mulf %167, %166 : vector<32x384xf32>
    %169 = vector.broadcast %146 : vector<32x1xf32> to vector<32x384xf32>
    %170 = arith.addf %168, %169 : vector<32x384xf32>
    %cst_66 = arith.constant 5.000000e-01 : f32
    %171 = vector.broadcast %cst_66 : f32 to vector<32x384xf32>
    %172 = arith.mulf %171, %170 : vector<32x384xf32>
    %173 = arith.mulf %170, %170 : vector<32x384xf32>
    %174 = arith.mulf %173, %170 : vector<32x384xf32>
    %cst_67 = arith.constant 4.471500e-02 : f32
    %175 = vector.broadcast %cst_67 : f32 to vector<32x384xf32>
    %176 = arith.mulf %175, %174 : vector<32x384xf32>
    %177 = arith.addf %170, %176 : vector<32x384xf32>
    %cst_68 = arith.constant 0.797884583 : f32
    %178 = vector.broadcast %cst_68 : f32 to vector<32x384xf32>
    %179 = arith.mulf %178, %177 : vector<32x384xf32>
    %180 = math.tanh %179 : vector<32x384xf32>
    %cst_69 = arith.constant 1.000000e+00 : f32
    %181 = vector.broadcast %cst_69 : f32 to vector<32x384xf32>
    %182 = arith.addf %181, %180 : vector<32x384xf32>
    %183 = arith.mulf %172, %182 : vector<32x384xf32>
    %184 = vector.broadcast %0 : vector<1x384xf32> to vector<32x384xf32>
    %185 = arith.mulf %183, %184 : vector<32x384xf32>
    %186 = tpu.concatenate %185, %63 in 0 : vector<32x384xf32>, vector<32x384xf32> -> vector<64x384xf32>
    %c19_i32_70 = arith.constant 19 : i32
    %187 = tpu.dynamic_rotate %186 by %c19_i32_70 dim 1 : vector<64x384xf32>, i32 -> vector<64x384xf32>
    %188 = arith.truncf %187 : vector<64x384xf32> to vector<64x384xbf16>
    %c18_i32_71 = arith.constant 18 : i32
    %189 = tpu.dynamic_rotate %186 by %c18_i32_71 dim 1 : vector<64x384xf32>, i32 -> vector<64x384xf32>
    %190 = arith.truncf %189 : vector<64x384xf32> to vector<64x384xbf16>
    %c17_i32_72 = arith.constant 17 : i32
    %191 = tpu.dynamic_rotate %186 by %c17_i32_72 dim 1 : vector<64x384xf32>, i32 -> vector<64x384xf32>
    %192 = arith.truncf %191 : vector<64x384xf32> to vector<64x384xbf16>
    %c1_i32_73 = arith.constant 1 : i32
    %193 = tpu.dynamic_rotate %186 by %c1_i32_73 dim 1 : vector<64x384xf32>, i32 -> vector<64x384xf32>
    %194 = arith.truncf %193 : vector<64x384xf32> to vector<64x384xbf16>
    %195 = arith.truncf %186 : vector<64x384xf32> to vector<64x384xbf16>
    %c383_i32_74 = arith.constant 383 : i32
    %196 = tpu.dynamic_rotate %186 by %c383_i32_74 dim 1 : vector<64x384xf32>, i32 -> vector<64x384xf32>
    %197 = arith.truncf %196 : vector<64x384xf32> to vector<64x384xbf16>
    %c367_i32_75 = arith.constant 367 : i32
    %198 = tpu.dynamic_rotate %186 by %c367_i32_75 dim 1 : vector<64x384xf32>, i32 -> vector<64x384xf32>
    %199 = arith.truncf %198 : vector<64x384xf32> to vector<64x384xbf16>
    %c366_i32_76 = arith.constant 366 : i32
    %200 = tpu.dynamic_rotate %186 by %c366_i32_76 dim 1 : vector<64x384xf32>, i32 -> vector<64x384xf32>
    %201 = arith.truncf %200 : vector<64x384xf32> to vector<64x384xbf16>
    %c365_i32_77 = arith.constant 365 : i32
    %202 = tpu.dynamic_rotate %186 by %c365_i32_77 dim 1 : vector<64x384xf32>, i32 -> vector<64x384xf32>
    %203 = arith.truncf %202 : vector<64x384xf32> to vector<64x384xbf16>
    %204 = tpu.concatenate %188, %190, %192, %194, %195, %197, %199, %201, %203 in 0 : vector<64x384xbf16>, vector<64x384xbf16>, vector<64x384xbf16>, vector<64x384xbf16>, vector<64x384xbf16>, vector<64x384xbf16>, vector<64x384xbf16>, vector<64x384xbf16>, vector<64x384xbf16> -> vector<576x384xbf16>
    %c0_78 = arith.constant 0 : index
    %c0_79 = arith.constant 0 : index
    %205 = vector.load %arg12[%c0_78, %c0_79] : memref<32x576xbf16, #tpu.memory_space<vmem>>, vector<32x576xbf16>
    %cst_80 = arith.constant dense<0.000000e+00> : vector<32x384xf32>
    %206 = tpu.matmul %205, %204, %cst_80 {dimension_numbers = #tpu.dot_dimension_numbers<[1], [0], [0], [1], [0, 0, 1, 1], [], []>} : vector<32x576xbf16>, vector<576x384xbf16>, vector<32x384xf32> -> vector<32x384xf32>
    %c0_81 = arith.constant 0 : index
    %c0_82 = arith.constant 0 : index
    %207 = vector.load %arg13[%c0_81, %c0_82] : memref<32x1xf32, #tpu.memory_space<vmem>>, vector<32x1xf32>
    %c0_83 = arith.constant 0 : index
    %c0_84 = arith.constant 0 : index
    %208 = vector.load %arg14[%c0_83, %c0_84] : memref<32x1xf32, #tpu.memory_space<vmem>>, vector<32x1xf32>
    %cst_85 = arith.constant dense<0.000000e+00> : vector<384xf32>
    %209 = vector.multi_reduction <add>, %206, %cst_85 [0] : vector<32x384xf32> to vector<384xf32>
    %210 = vector.shape_cast %209 : vector<384xf32> to vector<1x384xf32>
    %cst_86 = arith.constant 3.125000e-02 : f32
    %211 = vector.broadcast %cst_86 : f32 to vector<1x384xf32>
    %212 = arith.mulf %210, %211 : vector<1x384xf32>
    %213 = arith.mulf %206, %206 : vector<32x384xf32>
    %cst_87 = arith.constant dense<0.000000e+00> : vector<384xf32>
    %214 = vector.multi_reduction <add>, %213, %cst_87 [0] : vector<32x384xf32> to vector<384xf32>
    %215 = vector.shape_cast %214 : vector<384xf32> to vector<1x384xf32>
    %cst_88 = arith.constant 3.125000e-02 : f32
    %216 = vector.broadcast %cst_88 : f32 to vector<1x384xf32>
    %217 = arith.mulf %215, %216 : vector<1x384xf32>
    %218 = arith.mulf %212, %212 : vector<1x384xf32>
    %219 = arith.subf %217, %218 : vector<1x384xf32>
    %cst_89 = arith.constant 0.000000e+00 : f32
    %220 = vector.broadcast %cst_89 : f32 to vector<1x384xf32>
    %221 = arith.maximumf %219, %220 : vector<1x384xf32>
    %222 = vector.broadcast %212 : vector<1x384xf32> to vector<32x384xf32>
    %223 = arith.subf %206, %222 : vector<32x384xf32>
    %cst_90 = arith.constant 9.99999997E-7 : f32
    %224 = vector.broadcast %cst_90 : f32 to vector<1x384xf32>
    %225 = arith.addf %221, %224 : vector<1x384xf32>
    %226 = math.rsqrt %225 : vector<1x384xf32>
    %227 = vector.broadcast %226 : vector<1x384xf32> to vector<32x384xf32>
    %228 = arith.mulf %223, %227 : vector<32x384xf32>
    %229 = vector.broadcast %207 : vector<32x1xf32> to vector<32x384xf32>
    %230 = arith.mulf %229, %228 : vector<32x384xf32>
    %231 = vector.broadcast %208 : vector<32x1xf32> to vector<32x384xf32>
    %232 = arith.addf %230, %231 : vector<32x384xf32>
    %cst_91 = arith.constant 5.000000e-01 : f32
    %233 = vector.broadcast %cst_91 : f32 to vector<32x384xf32>
    %234 = arith.mulf %233, %232 : vector<32x384xf32>
    %235 = arith.mulf %232, %232 : vector<32x384xf32>
    %236 = arith.mulf %235, %232 : vector<32x384xf32>
    %cst_92 = arith.constant 4.471500e-02 : f32
    %237 = vector.broadcast %cst_92 : f32 to vector<32x384xf32>
    %238 = arith.mulf %237, %236 : vector<32x384xf32>
    %239 = arith.addf %232, %238 : vector<32x384xf32>
    %cst_93 = arith.constant 0.797884583 : f32
    %240 = vector.broadcast %cst_93 : f32 to vector<32x384xf32>
    %241 = arith.mulf %240, %239 : vector<32x384xf32>
    %242 = math.tanh %241 : vector<32x384xf32>
    %cst_94 = arith.constant 1.000000e+00 : f32
    %243 = vector.broadcast %cst_94 : f32 to vector<32x384xf32>
    %244 = arith.addf %243, %242 : vector<32x384xf32>
    %245 = arith.mulf %234, %244 : vector<32x384xf32>
    %246 = vector.broadcast %0 : vector<1x384xf32> to vector<32x384xf32>
    %247 = arith.mulf %245, %246 : vector<32x384xf32>
    %c0_95 = arith.constant 0 : index
    %c0_96 = arith.constant 0 : index
    %248 = vector.load %arg15[%c0_95, %c0_96] : memref<8x32xbf16, #tpu.memory_space<vmem>>, vector<8x32xbf16>
    %249 = arith.truncf %247 : vector<32x384xf32> to vector<32x384xbf16>
    %cst_97 = arith.constant dense<0.000000e+00> : vector<8x384xf32>
    %250 = tpu.matmul %248, %249, %cst_97 {dimension_numbers = #tpu.dot_dimension_numbers<[1], [0], [0], [1], [0, 0, 1, 1], [], []>} : vector<8x32xbf16>, vector<32x384xbf16>, vector<8x384xf32> -> vector<8x384xf32>
    %c0_98 = arith.constant 0 : index
    %c0_99 = arith.constant 0 : index
    %251 = vector.load %arg16[%c0_98, %c0_99] : memref<8x1xf32, #tpu.memory_space<vmem>>, vector<8x1xf32>
    %c0_100 = arith.constant 0 : index
    %c0_101 = arith.constant 0 : index
    %252 = vector.load %arg17[%c0_100, %c0_101] : memref<8x1xf32, #tpu.memory_space<vmem>>, vector<8x1xf32>
    %cst_102 = arith.constant dense<0.000000e+00> : vector<384xf32>
    %253 = vector.multi_reduction <add>, %250, %cst_102 [0] : vector<8x384xf32> to vector<384xf32>
    %254 = vector.shape_cast %253 : vector<384xf32> to vector<1x384xf32>
    %cst_103 = arith.constant 0.333333343 : f32
    %255 = vector.broadcast %cst_103 : f32 to vector<1x384xf32>
    %256 = arith.mulf %254, %255 : vector<1x384xf32>
    %257 = arith.mulf %250, %250 : vector<8x384xf32>
    %cst_104 = arith.constant dense<0.000000e+00> : vector<384xf32>
    %258 = vector.multi_reduction <add>, %257, %cst_104 [0] : vector<8x384xf32> to vector<384xf32>
    %259 = vector.shape_cast %258 : vector<384xf32> to vector<1x384xf32>
    %cst_105 = arith.constant 0.333333343 : f32
    %260 = vector.broadcast %cst_105 : f32 to vector<1x384xf32>
    %261 = arith.mulf %259, %260 : vector<1x384xf32>
    %262 = arith.mulf %256, %256 : vector<1x384xf32>
    %263 = arith.subf %261, %262 : vector<1x384xf32>
    %cst_106 = arith.constant 0.000000e+00 : f32
    %264 = vector.broadcast %cst_106 : f32 to vector<1x384xf32>
    %265 = arith.maximumf %263, %264 : vector<1x384xf32>
    %266 = vector.broadcast %256 : vector<1x384xf32> to vector<8x384xf32>
    %267 = arith.subf %250, %266 : vector<8x384xf32>
    %cst_107 = arith.constant 9.99999997E-7 : f32
    %268 = vector.broadcast %cst_107 : f32 to vector<1x384xf32>
    %269 = arith.addf %265, %268 : vector<1x384xf32>
    %270 = math.rsqrt %269 : vector<1x384xf32>
    %271 = vector.broadcast %270 : vector<1x384xf32> to vector<8x384xf32>
    %272 = arith.mulf %267, %271 : vector<8x384xf32>
    %273 = vector.broadcast %251 : vector<8x1xf32> to vector<8x384xf32>
    %274 = arith.mulf %273, %272 : vector<8x384xf32>
    %275 = vector.broadcast %252 : vector<8x1xf32> to vector<8x384xf32>
    %276 = arith.addf %274, %275 : vector<8x384xf32>
    %cst_108 = arith.constant dense<0xFF800000> : vector<384xf32>
    %277 = vector.multi_reduction <maximumf>, %276, %cst_108 [0] : vector<8x384xf32> to vector<384xf32>
    %278 = vector.shape_cast %277 : vector<384xf32> to vector<1x384xf32>
    %279 = vector.broadcast %278 : vector<1x384xf32> to vector<8x384xf32>
    %280 = arith.subf %276, %279 : vector<8x384xf32>
    %281 = math.exp %280 : vector<8x384xf32>
    %cst_109 = arith.constant dense<0.000000e+00> : vector<384xf32>
    %282 = vector.multi_reduction <add>, %281, %cst_109 [0] : vector<8x384xf32> to vector<384xf32>
    %283 = vector.shape_cast %282 : vector<384xf32> to vector<1x384xf32>
    %284 = vector.broadcast %283 : vector<1x384xf32> to vector<8x384xf32>
    %285 = arith.divf %281, %284 : vector<8x384xf32>
    %c0_110 = arith.constant 0 : index
    %c0_111 = arith.constant 0 : index
    %c0_112 = arith.constant 0 : index
    %286 = vector.load %arg18[%c0_110, %c0_111, %c0_112] : memref<1x8x384xf32, #tpu.memory_space<vmem>>, vector<1x8x384xf32>
    %287 = vector.shape_cast %286 : vector<1x8x384xf32> to vector<8x384xf32>
    %288 = vector.shape_cast %285 : vector<8x384xf32> to vector<1x8x384xf32>
    tpu.vector_store %arg18[%c0_110, %c0_111, %c0_112], %288 {strides = array<i32>} : memref<1x8x384xf32, #tpu.memory_space<vmem>>, vector<1x8x384xf32>,
    return
  }
  func.func @transform_0(%arg0: i32) -> (i32, i32, i32) {
    %c0_i32 = arith.constant 0 : i32
    %c0_i32_0 = arith.constant 0 : i32
    %c0_i32_1 = arith.constant 0 : i32
    return %arg0, %c0_i32, %c0_i32_0 : i32, i32, i32
  }
  func.func @transform_1(%arg0: i32) -> (i32, i32) {
    %c0_i32 = arith.constant 0 : i32
    %c0_i32_0 = arith.constant 0 : i32
    %c0_i32_1 = arith.constant 0 : i32
    return %c0_i32, %c0_i32_0 : i32, i32
  }
  func.func @transform_2(%arg0: i32) -> (i32, i32) {
    %c0_i32 = arith.constant 0 : i32
    %c0_i32_0 = arith.constant 0 : i32
    %c0_i32_1 = arith.constant 0 : i32
    return %c0_i32, %c0_i32_0 : i32, i32
  }
  func.func @transform_3(%arg0: i32) -> (i32, i32) {
    %c0_i32 = arith.constant 0 : i32
    %c0_i32_0 = arith.constant 0 : i32
    %c0_i32_1 = arith.constant 0 : i32
    return %c0_i32, %c0_i32_0 : i32, i32
  }
  func.func @transform_4(%arg0: i32) -> (i32, i32) {
    %c0_i32 = arith.constant 0 : i32
    %c0_i32_0 = arith.constant 0 : i32
    %c0_i32_1 = arith.constant 0 : i32
    return %c0_i32, %c0_i32_0 : i32, i32
  }
  func.func @transform_5(%arg0: i32) -> (i32, i32) {
    %c0_i32 = arith.constant 0 : i32
    %c0_i32_0 = arith.constant 0 : i32
    %c0_i32_1 = arith.constant 0 : i32
    return %c0_i32, %c0_i32_0 : i32, i32
  }
  func.func @transform_6(%arg0: i32) -> (i32, i32) {
    %c0_i32 = arith.constant 0 : i32
    %c0_i32_0 = arith.constant 0 : i32
    %c0_i32_1 = arith.constant 0 : i32
    return %c0_i32, %c0_i32_0 : i32, i32
  }
  func.func @transform_7(%arg0: i32) -> (i32, i32) {
    %c0_i32 = arith.constant 0 : i32
    %c0_i32_0 = arith.constant 0 : i32
    %c0_i32_1 = arith.constant 0 : i32
    return %c0_i32, %c0_i32_0 : i32, i32
  }
  func.func @transform_8(%arg0: i32) -> (i32, i32) {
    %c0_i32 = arith.constant 0 : i32
    %c0_i32_0 = arith.constant 0 : i32
    %c0_i32_1 = arith.constant 0 : i32
    return %c0_i32, %c0_i32_0 : i32, i32
  }
  func.func @transform_9(%arg0: i32) -> (i32, i32) {
    %c0_i32 = arith.constant 0 : i32
    %c0_i32_0 = arith.constant 0 : i32
    %c0_i32_1 = arith.constant 0 : i32
    return %c0_i32, %c0_i32_0 : i32, i32
  }
  func.func @transform_10(%arg0: i32) -> (i32, i32) {
    %c0_i32 = arith.constant 0 : i32
    %c0_i32_0 = arith.constant 0 : i32
    %c0_i32_1 = arith.constant 0 : i32
    return %c0_i32, %c0_i32_0 : i32, i32
  }
  func.func @transform_11(%arg0: i32) -> (i32, i32) {
    %c0_i32 = arith.constant 0 : i32
    %c0_i32_0 = arith.constant 0 : i32
    %c0_i32_1 = arith.constant 0 : i32
    return %c0_i32, %c0_i32_0 : i32, i32
  }
  func.func @transform_12(%arg0: i32) -> (i32, i32) {
    %c0_i32 = arith.constant 0 : i32
    %c0_i32_0 = arith.constant 0 : i32
    %c0_i32_1 = arith.constant 0 : i32
    return %c0_i32, %c0_i32_0 : i32, i32
  }
  func.func @transform_13(%arg0: i32) -> (i32, i32) {
    %c0_i32 = arith.constant 0 : i32
    %c0_i32_0 = arith.constant 0 : i32
    %c0_i32_1 = arith.constant 0 : i32
    return %c0_i32, %c0_i32_0 : i32, i32
  }
  func.func @transform_14(%arg0: i32) -> (i32, i32) {
    %c0_i32 = arith.constant 0 : i32
    %c0_i32_0 = arith.constant 0 : i32
    %c0_i32_1 = arith.constant 0 : i32
    return %c0_i32, %c0_i32_0 : i32, i32
  }
  func.func @transform_15(%arg0: i32) -> (i32, i32) {
    %c0_i32 = arith.constant 0 : i32
    %c0_i32_0 = arith.constant 0 : i32
    %c0_i32_1 = arith.constant 0 : i32
    return %c0_i32, %c0_i32_0 : i32, i32
  }
  func.func @transform_16(%arg0: i32) -> (i32, i32) {
    %c0_i32 = arith.constant 0 : i32
    %c0_i32_0 = arith.constant 0 : i32
    %c0_i32_1 = arith.constant 0 : i32
    return %c0_i32, %c0_i32_0 : i32, i32
  }
  func.func @transform_17(%arg0: i32) -> (i32, i32, i32) {
    %c0_i32 = arith.constant 0 : i32
    %c0_i32_0 = arith.constant 0 : i32
    %c0_i32_1 = arith.constant 0 : i32
    return %arg0, %c0_i32, %c0_i32_0 : i32, i32, i32
  }
}

</mosaic_0001>

<llo_original>
// kernel: ssgnet_forward.1
$region0: #{ssgnet_forward.1}
  #allocation0 [shape = 'u32[]', space=smem, size = 0x4, offset = 0x4, fixed_abs, tag = 'smem constant byte address 0x4 - core index']
  #allocation1 [shape = 'u32[144,128]{1,0:T(1,128)}', space=vmem, size = 0x12000, scoped, tag = 'internal scratch']
  %s0 = inlined_call_operand.vmem [shape: f32[2,16,384], index: 0, kind: input, shape index: {}]
  %s1 = inlined_call_operand.vmem [shape: f32[1,384], index: 1, kind: input, shape index: {}]
  %s2 = inlined_call_operand.vmem [shape: bf16[32,144], index: 2, kind: input, shape index: {}]
  %s3 = inlined_call_operand.vmem [shape: f32[32,1], index: 3, kind: input, shape index: {}]
  %s4 = inlined_call_operand.vmem [shape: f32[32,1], index: 4, kind: input, shape index: {}]
  %s5 = inlined_call_operand.vmem [shape: bf16[64,288], index: 5, kind: input, shape index: {}]
  %s6 = inlined_call_operand.vmem [shape: f32[64,1], index: 6, kind: input, shape index: {}]
  %s7 = inlined_call_operand.vmem [shape: f32[64,1], index: 7, kind: input, shape index: {}]
  %s8 = inlined_call_operand.vmem [shape: bf16[32,576], index: 8, kind: input, shape index: {}]
  %s9 = inlined_call_operand.vmem [shape: f32[32,1], index: 9, kind: input, shape index: {}]
  %s10 = inlined_call_operand.vmem [shape: f32[32,1], index: 10, kind: input, shape index: {}]
  %s11 = inlined_call_operand.vmem [shape: bf16[32,576], index: 11, kind: input, shape index: {}]
  %s12 = inlined_call_operand.vmem [shape: f32[32,1], index: 12, kind: input, shape index: {}]
  %s13 = inlined_call_operand.vmem [shape: f32[32,1], index: 13, kind: input, shape index: {}]
  %s14 = inlined_call_operand.vmem [shape: bf16[8,32], index: 14, kind: input, shape index: {}]
  %s15 = inlined_call_operand.vmem [shape: f32[8,1], index: 15, kind: input, shape index: {}]
  %s16 = inlined_call_operand.vmem [shape: f32[8,1], index: 16, kind: input, shape index: {}]
  %s17 = inlined_call_operand.vmem [shape: f32[2,8,384], index: 17, kind: output, shape index: {}]
  %s18 = sld [smem:[#allocation0]]
  $region101: #{ssgnet_forward.1} parent=0
    _
  %s20 = ssub.s32 1, %s18
  %s21 = scalar_select 0, %s20, %s18
  loop: start=0, step=1, limit=4
  $region2: #{ssgnet_forward.1} parent=0 // loop_pre_header
    _
  $region3: #{ssgnet_forward.1} parent=0 // loop_header
    %s23 = sphi 0, %s27
    %p24 = scmp.ge.s32.totalorder %s23, 4
    %s33 = sphi 0, %s35
    %s36 = sphi 0, %s33
    %s37 = sphi 0, %s36
    %s53 = sphi 0, %s37
    %s57 = sphi 0, %s57
    %s59 = sphi 0, %s57
    %s60 = sphi 0, %s59
    %s74 = sphi 0, %s60
    %s78 = sphi 0, %s78
    %s80 = sphi 0, %s78
    %s81 = sphi 0, %s80
    %s95 = sphi 0, %s81
    %s99 = sphi 0, %s99
    %s101 = sphi 0, %s99
    %s102 = sphi 0, %s101
    %s116 = sphi 0, %s102
    %s120 = sphi 0, %s120
    %s122 = sphi 0, %s120
    %s123 = sphi 0, %s122
    %s137 = sphi 0, %s123
    %s141 = sphi 0, %s141
    %s143 = sphi 0, %s141
    %s144 = sphi 0, %s143
    %s158 = sphi 0, %s144
    %s162 = sphi 0, %s162
    %s164 = sphi 0, %s162
    %s165 = sphi 0, %s164
    %s179 = sphi 0, %s165
    %s183 = sphi 0, %s183
    %s185 = sphi 0, %s183
    %s186 = sphi 0, %s185
    %s200 = sphi 0, %s186
    %s204 = sphi 0, %s204
    %s206 = sphi 0, %s204
    %s207 = sphi 0, %s206
    %s221 = sphi 0, %s207
    %s225 = sphi 0, %s225
    %s227 = sphi 0, %s225
    %s228 = sphi 0, %s227
    %s242 = sphi 0, %s228
    %s246 = sphi 0, %s246
    %s248 = sphi 0, %s246
    %s249 = sphi 0, %s248
    %s263 = sphi 0, %s249
    %s267 = sphi 0, %s267
    %s269 = sphi 0, %s267
    %s270 = sphi 0, %s269
    %s284 = sphi 0, %s270
    %s288 = sphi 0, %s288
    %s290 = sphi 0, %s288
    %s291 = sphi 0, %s290
    %s305 = sphi 0, %s291
    %s309 = sphi 0, %s309
    %s311 = sphi 0, %s309
    %s312 = sphi 0, %s311
    %s326 = sphi 0, %s312
    %s330 = sphi 0, %s330
    %s332 = sphi 0, %s330
    %s333 = sphi 0, %s332
    %s347 = sphi 0, %s333
    %s351 = sphi 0, %s351
    %s353 = sphi 0, %s351
    %s354 = sphi 0, %s353
    %s368 = sphi 0, %s354
    %s372 = sphi 0, %s372
    %s374 = sphi 0, %s372
    %s375 = sphi 0, %s374
    %s389 = sphi 0, %s375
    %s395 = sphi 0, %s397
    %s398 = sphi 0, %s395
    %s399 = sphi 0, %s398
    %s415 = sphi 0, %s399
  $region4: #{ssgnet_forward.1} parent=0 // loop_header_branch
    %26 = sbr.rel (%p24) target = $region8
  $region5: #{ssgnet_forward.1} parent=0 // loop_body
    %s28 = ssub.s32 %s23, 1
    %s29 = ssub.s32 %s23, 2
    %s30 = sadd.s32 %s23, 1
    %s31 = ssub.s32 %s23, %s30
    %p32 = scmp.eq.s32.totalorder %s31, 0
    %s34 = sadd.s32 %s33, 1
    %s35 = scalar_select %p32, %s33, %s34
    %p38 = pneg %p32
    %p39 = scmp.eq.s32.totalorder %s23, 1
    %p40 = por %p38, %p39
    %p41 = scmp.ne.s32.totalorder %s33, %s36
    %p42 = scmp.eq.s32.totalorder %s23, 0
    %p43 = por %p41, %p42
    %p44 = scmp.ne.s32.totalorder %s33, %s36
    %p45 = scmp.eq.s32.totalorder %s28, 1
    %p46 = por %p44, %p45
    %p47 = scmp.ne.s32.totalorder %s36, %s37
    %p48 = scmp.eq.s32.totalorder %s28, 0
    %p49 = por %p47, %p48
    %p50 = scmp.ne.s32.totalorder %s36, %s37
    %p51 = scmp.eq.s32.totalorder %s29, 1
    %p52 = por %p50, %p51
    %p54 = scmp.ne.s32.totalorder %s37, %s53
    %p55 = scmp.eq.s32.totalorder %s29, 0
    %p56 = por %p54, %p55
    %s58 = sadd.s32 %s57, 1
    %p61 = scmp.eq.s32.totalorder %s23, 1
    %p62 = scmp.ne.s32.totalorder %s57, %s59
    %p63 = scmp.eq.s32.totalorder %s23, 0
    %p64 = por %p62, %p63
    %p65 = scmp.ne.s32.totalorder %s57, %s59
    %p66 = scmp.eq.s32.totalorder %s28, 1
    %p67 = por %p65, %p66
    %p68 = scmp.ne.s32.totalorder %s59, %s60
    %p69 = scmp.eq.s32.totalorder %s28, 0
    %p70 = por %p68, %p69
    %p71 = scmp.ne.s32.totalorder %s59, %s60
    %p72 = scmp.eq.s32.totalorder %s29, 1
    %p73 = por %p71, %p72
    %p75 = scmp.ne.s32.totalorder %s60, %s74
    %p76 = scmp.eq.s32.totalorder %s29, 0
    %p77 = por %p75, %p76
    %s79 = sadd.s32 %s78, 1
    %p82 = scmp.eq.s32.totalorder %s23, 1
    %p83 = scmp.ne.s32.totalorder %s78, %s80
    %p84 = scmp.eq.s32.totalorder %s23, 0
    %p85 = por %p83, %p84
    %p86 = scmp.ne.s32.totalorder %s78, %s80
    %p87 = scmp.eq.s32.totalorder %s28, 1
    %p88 = por %p86, %p87
    %p89 = scmp.ne.s32.totalorder %s80, %s81
    %p90 = scmp.eq.s32.totalorder %s28, 0
    %p91 = por %p89, %p90
    %p92 = scmp.ne.s32.totalorder %s80, %s81
    %p93 = scmp.eq.s32.totalorder %s29, 1
    %p94 = por %p92, %p93
    %p96 = scmp.ne.s32.totalorder %s81, %s95
    %p97 = scmp.eq.s32.totalorder %s29, 0
    %p98 = por %p96, %p97
    %s100 = sadd.s32 %s99, 1
    %p103 = scmp.eq.s32.totalorder %s23, 1
    %p104 = scmp.ne.s32.totalorder %s99, %s101
    %p105 = scmp.eq.s32.totalorder %s23, 0
    %p106 = por %p104, %p105
    %p107 = scmp.ne.s32.totalorder %s99, %s101
    %p108 = scmp.eq.s32.totalorder %s28, 1
    %p109 = por %p107, %p108
    %p110 = scmp.ne.s32.totalorder %s101, %s102
    %p111 = scmp.eq.s32.totalorder %s28, 0
    %p112 = por %p110, %p111
    %p113 = scmp.ne.s32.totalorder %s101, %s102
    %p114 = scmp.eq.s32.totalorder %s29, 1
    %p115 = por %p113, %p114
    %p117 = scmp.ne.s32.totalorder %s102, %s116
    %p118 = scmp.eq.s32.totalorder %s29, 0
    %p119 = por %p117, %p118
    %s121 = sadd.s32 %s120, 1
    %p124 = scmp.eq.s32.totalorder %s23, 1
    %p125 = scmp.ne.s32.totalorder %s120, %s122
    %p126 = scmp.eq.s32.totalorder %s23, 0
    %p127 = por %p125, %p126
    %p128 = scmp.ne.s32.totalorder %s120, %s122
    %p129 = scmp.eq.s32.totalorder %s28, 1
    %p130 = por %p128, %p129
    %p131 = scmp.ne.s32.totalorder %s122, %s123
    %p132 = scmp.eq.s32.totalorder %s28, 0
    %p133 = por %p131, %p132
    %p134 = scmp.ne.s32.totalorder %s122, %s123
    %p135 = scmp.eq.s32.totalorder %s29, 1
    %p136 = por %p134, %p135
    %p138 = scmp.ne.s32.totalorder %s123, %s137
    %p139 = scmp.eq.s32.totalorder %s29, 0
    %p140 = por %p138, %p139
    %s142 = sadd.s32 %s141, 1
    %p145 = scmp.eq.s32.totalorder %s23, 1
    %p146 = scmp.ne.s32.totalorder %s141, %s143
    %p147 = scmp.eq.s32.totalorder %s23, 0
    %p148 = por %p146, %p147
    %p149 = scmp.ne.s32.totalorder %s141, %s143
    %p150 = scmp.eq.s32.totalorder %s28, 1
    %p151 = por %p149, %p150
    %p152 = scmp.ne.s32.totalorder %s143, %s144
    %p153 = scmp.eq.s32.totalorder %s28, 0
    %p154 = por %p152, %p153
    %p155 = scmp.ne.s32.totalorder %s143, %s144
    %p156 = scmp.eq.s32.totalorder %s29, 1
    %p157 = por %p155, %p156
    %p159 = scmp.ne.s32.totalorder %s144, %s158
    %p160 = scmp.eq.s32.totalorder %s29, 0
    %p161 = por %p159, %p160
    %s163 = sadd.s32 %s162, 1
    %p166 = scmp.eq.s32.totalorder %s23, 1
    %p167 = scmp.ne.s32.totalorder %s162, %s164
    %p168 = scmp.eq.s32.totalorder %s23, 0
    %p169 = por %p167, %p168
    %p170 = scmp.ne.s32.totalorder %s162, %s164
    %p171 = scmp.eq.s32.totalorder %s28, 1
    %p172 = por %p170, %p171
    %p173 = scmp.ne.s32.totalorder %s164, %s165
    %p174 = scmp.eq.s32.totalorder %s28, 0
    %p175 = por %p173, %p174
    %p176 = scmp.ne.s32.totalorder %s164, %s165
    %p177 = scmp.eq.s32.totalorder %s29, 1
    %p178 = por %p176, %p177
    %p180 = scmp.ne.s32.totalorder %s165, %s179
    %p181 = scmp.eq.s32.totalorder %s29, 0
    %p182 = por %p180, %p181
    %s184 = sadd.s32 %s183, 1
    %p187 = scmp.eq.s32.totalorder %s23, 1
    %p188 = scmp.ne.s32.totalorder %s183, %s185
    %p189 = scmp.eq.s32.totalorder %s23, 0
    %p190 = por %p188, %p189
    %p191 = scmp.ne.s32.totalorder %s183, %s185
    %p192 = scmp.eq.s32.totalorder %s28, 1
    %p193 = por %p191, %p192
    %p194 = scmp.ne.s32.totalorder %s185, %s186
    %p195 = scmp.eq.s32.totalorder %s28, 0
    %p196 = por %p194, %p195
    %p197 = scmp.ne.s32.totalorder %s185, %s186
    %p198 = scmp.eq.s32.totalorder %s29, 1
    %p199 = por %p197, %p198
    %p201 = scmp.ne.s32.totalorder %s186, %s200
    %p202 = scmp.eq.s32.totalorder %s29, 0
    %p203 = por %p201, %p202
    %s205 = sadd.s32 %s204, 1
    %p208 = scmp.eq.s32.totalorder %s23, 1
    %p209 = scmp.ne.s32.totalorder %s204, %s206
    %p210 = scmp.eq.s32.totalorder %s23, 0
    %p211 = por %p209, %p210
    %p212 = scmp.ne.s32.totalorder %s204, %s206
    %p213 = scmp.eq.s32.totalorder %s28, 1
    %p214 = por %p212, %p213
    %p215 = scmp.ne.s32.totalorder %s206, %s207
    %p216 = scmp.eq.s32.totalorder %s28, 0
    %p217 = por %p215, %p216
    %p218 = scmp.ne.s32.totalorder %s206, %s207
    %p219 = scmp.eq.s32.totalorder %s29, 1
    %p220 = por %p218, %p219
    %p222 = scmp.ne.s32.totalorder %s207, %s221
    %p223 = scmp.eq.s32.totalorder %s29, 0
    %p224 = por %p222, %p223
    %s226 = sadd.s32 %s225, 1
    %p229 = scmp.eq.s32.totalorder %s23, 1
    %p230 = scmp.ne.s32.totalorder %s225, %s227
    %p231 = scmp.eq.s32.totalorder %s23, 0
    %p232 = por %p230, %p231
    %p233 = scmp.ne.s32.totalorder %s225, %s227
    %p234 = scmp.eq.s32.totalorder %s28, 1
    %p235 = por %p233, %p234
    %p236 = scmp.ne.s32.totalorder %s227, %s228
    %p237 = scmp.eq.s32.totalorder %s28, 0
    %p238 = por %p236, %p237
    %p239 = scmp.ne.s32.totalorder %s227, %s228
    %p240 = scmp.eq.s32.totalorder %s29, 1
    %p241 = por %p239, %p240
    %p243 = scmp.ne.s32.totalorder %s228, %s242
    %p244 = scmp.eq.s32.totalorder %s29, 0
    %p245 = por %p243, %p244
    %s247 = sadd.s32 %s246, 1
    %p250 = scmp.eq.s32.totalorder %s23, 1
    %p251 = scmp.ne.s32.totalorder %s246, %s248
    %p252 = scmp.eq.s32.totalorder %s23, 0
    %p253 = por %p251, %p252
    %p254 = scmp.ne.s32.totalorder %s246, %s248
    %p255 = scmp.eq.s32.totalorder %s28, 1
    %p256 = por %p254, %p255
    %p257 = scmp.ne.s32.totalorder %s248, %s249
    %p258 = scmp.eq.s32.totalorder %s28, 0
    %p259 = por %p257, %p258
    %p260 = scmp.ne.s32.totalorder %s248, %s249
    %p261 = scmp.eq.s32.totalorder %s29, 1
    %p262 = por %p260, %p261
    %p264 = scmp.ne.s32.totalorder %s249, %s263
    %p265 = scmp.eq.s32.totalorder %s29, 0
    %p266 = por %p264, %p265
    %s268 = sadd.s32 %s267, 1
    %p271 = scmp.eq.s32.totalorder %s23, 1
    %p272 = scmp.ne.s32.totalorder %s267, %s269
    %p273 = scmp.eq.s32.totalorder %s23, 0
    %p274 = por %p272, %p273
    %p275 = scmp.ne.s32.totalorder %s267, %s269
    %p276 = scmp.eq.s32.totalorder %s28, 1
    %p277 = por %p275, %p276
    %p278 = scmp.ne.s32.totalorder %s269, %s270
    %p279 = scmp.eq.s32.totalorder %s28, 0
    %p280 = por %p278, %p279
    %p281 = scmp.ne.s32.totalorder %s269, %s270
    %p282 = scmp.eq.s32.totalorder %s29, 1
    %p283 = por %p281, %p282
    %p285 = scmp.ne.s32.totalorder %s270, %s284
    %p286 = scmp.eq.s32.totalorder %s29, 0
    %p287 = por %p285, %p286
    %s289 = sadd.s32 %s288, 1
    %p292 = scmp.eq.s32.totalorder %s23, 1
    %p293 = scmp.ne.s32.totalorder %s288, %s290
    %p294 = scmp.eq.s32.totalorder %s23, 0
    %p295 = por %p293, %p294
    %p296 = scmp.ne.s32.totalorder %s288, %s290
    %p297 = scmp.eq.s32.totalorder %s28, 1
    %p298 = por %p296, %p297
    %p299 = scmp.ne.s32.totalorder %s290, %s291
    %p300 = scmp.eq.s32.totalorder %s28, 0
    %p301 = por %p299, %p300
    %p302 = scmp.ne.s32.totalorder %s290, %s291
    %p303 = scmp.eq.s32.totalorder %s29, 1
    %p304 = por %p302, %p303
    %p306 = scmp.ne.s32.totalorder %s291, %s305
    %p307 = scmp.eq.s32.totalorder %s29, 0
    %p308 = por %p306, %p307
    %s310 = sadd.s32 %s309, 1
    %p313 = scmp.eq.s32.totalorder %s23, 1
    %p314 = scmp.ne.s32.totalorder %s309, %s311
    %p315 = scmp.eq.s32.totalorder %s23, 0
    %p316 = por %p314, %p315
    %p317 = scmp.ne.s32.totalorder %s309, %s311
    %p318 = scmp.eq.s32.totalorder %s28, 1
    %p319 = por %p317, %p318
    %p320 = scmp.ne.s32.totalorder %s311, %s312
    %p321 = scmp.eq.s32.totalorder %s28, 0
    %p322 = por %p320, %p321
    %p323 = scmp.ne.s32.totalorder %s311, %s312
    %p324 = scmp.eq.s32.totalorder %s29, 1
    %p325 = por %p323, %p324
    %p327 = scmp.ne.s32.totalorder %s312, %s326
    %p328 = scmp.eq.s32.totalorder %s29, 0
    %p329 = por %p327, %p328
    %s331 = sadd.s32 %s330, 1
    %p334 = scmp.eq.s32.totalorder %s23, 1
    %p335 = scmp.ne.s32.totalorder %s330, %s332
    %p336 = scmp.eq.s32.totalorder %s23, 0
    %p337 = por %p335, %p336
    %p338 = scmp.ne.s32.totalorder %s330, %s332
    %p339 = scmp.eq.s32.totalorder %s28, 1
    %p340 = por %p338, %p339
    %p341 = scmp.ne.s32.totalorder %s332, %s333
    %p342 = scmp.eq.s32.totalorder %s28, 0
    %p343 = por %p341, %p342
    %p344 = scmp.ne.s32.totalorder %s332, %s333
    %p345 = scmp.eq.s32.totalorder %s29, 1
    %p346 = por %p344, %p345
    %p348 = scmp.ne.s32.totalorder %s333, %s347
    %p349 = scmp.eq.s32.totalorder %s29, 0
    %p350 = por %p348, %p349
    %s352 = sadd.s32 %s351, 1
    %p355 = scmp.eq.s32.totalorder %s23, 1
    %p356 = scmp.ne.s32.totalorder %s351, %s353
    %p357 = scmp.eq.s32.totalorder %s23, 0
    %p358 = por %p356, %p357
    %p359 = scmp.ne.s32.totalorder %s351, %s353
    %p360 = scmp.eq.s32.totalorder %s28, 1
    %p361 = por %p359, %p360
    %p362 = scmp.ne.s32.totalorder %s353, %s354
    %p363 = scmp.eq.s32.totalorder %s28, 0
    %p364 = por %p362, %p363
    %p365 = scmp.ne.s32.totalorder %s353, %s354
    %p366 = scmp.eq.s32.totalorder %s29, 1
    %p367 = por %p365, %p366
    %p369 = scmp.ne.s32.totalorder %s354, %s368
    %p370 = scmp.eq.s32.totalorder %s29, 0
    %p371 = por %p369, %p370
    %s373 = sadd.s32 %s372, 1
    %p376 = scmp.eq.s32.totalorder %s23, 1
    %p377 = scmp.ne.s32.totalorder %s372, %s374
    %p378 = scmp.eq.s32.totalorder %s23, 0
    %p379 = por %p377, %p378
    %p380 = scmp.ne.s32.totalorder %s372, %s374
    %p381 = scmp.eq.s32.totalorder %s28, 1
    %p382 = por %p380, %p381
    %p383 = scmp.ne.s32.totalorder %s374, %s375
    %p384 = scmp.eq.s32.totalorder %s28, 0
    %p385 = por %p383, %p384
    %p386 = scmp.ne.s32.totalorder %s374, %s375
    %p387 = scmp.eq.s32.totalorder %s29, 1
    %p388 = por %p386, %p387
    %p390 = scmp.ne.s32.totalorder %s375, %s389
    %p391 = scmp.eq.s32.totalorder %s29, 0
    %p392 = por %p390, %p391
    %s393 = ssub.s32 %s23, %s30
    %p394 = scmp.eq.s32.totalorder %s393, 0
    %s396 = sadd.s32 %s395, 1
    %s397 = scalar_select %p394, %s395, %s396
    %p400 = pneg %p394
    %p401 = scmp.eq.s32.totalorder %s23, 1
    %p402 = por %p400, %p401
    %p403 = scmp.ne.s32.totalorder %s395, %s398
    %p404 = scmp.eq.s32.totalorder %s23, 0
    %p405 = por %p403, %p404
    %p406 = scmp.ne.s32.totalorder %s395, %s398
    %p407 = scmp.eq.s32.totalorder %s28, 1
    %p408 = por %p406, %p407
    %p409 = scmp.ne.s32.totalorder %s398, %s399
    %p410 = scmp.eq.s32.totalorder %s28, 0
    %p411 = por %p409, %p410
    %p412 = scmp.ne.s32.totalorder %s398, %s399
    %p413 = scmp.eq.s32.totalorder %s29, 1
    %p414 = por %p412, %p413
    %p416 = scmp.ne.s32.totalorder %s399, %s415
    %p417 = scmp.eq.s32.totalorder %s29, 0
    %p418 = por %p416, %p417
    %p419 = scmp.le.s32.totalorder 1, %s23
    %p420 = scmp.lt.s32.totalorder %s23, 3
    %p421 = pnand %p419, %p420
    %p422 = pneg %p421
    // Predicated region
    $region9: #{ssgnet_forward.1} parent=5 // pred_check
      _
    $region10: #{ssgnet_forward.1} parent=5 // pred_check_branch
      %424 = sbr.rel (%p421) target = $region12
    $region11: #{ssgnet_forward.1} parent=5 // pred_region
      %s425 = ssub.s32 %s23, 1
      // Predicated region
      $region13: #{ssgnet_forward.1} parent=11 // pred_check
        %p426 = pneg %p70
      $region14: #{ssgnet_forward.1} parent=11 // pred_check_branch
        %428 = sbr.rel (%p426) target = $region16
      $region15: #{ssgnet_forward.1} parent=11 // pred_region
        _
      $region16: #{ssgnet_forward.1} parent=11 // pred_fallthru
        _
      // Predicated region
      $region17: #{ssgnet_forward.1} parent=11 // pred_check
        %p429 = pneg %p91
      $region18: #{ssgnet_forward.1} parent=11 // pred_check_branch
        %431 = sbr.rel (%p429) target = $region20
      $region19: #{ssgnet_forward.1} parent=11 // pred_region
        _
      $region20: #{ssgnet_forward.1} parent=11 // pred_fallthru
        _
      // Predicated region
      $region21: #{ssgnet_forward.1} parent=11 // pred_check
        %p432 = pneg %p112
      $region22: #{ssgnet_forward.1} parent=11 // pred_check_branch
        %434 = sbr.rel (%p432) target = $region24
      $region23: #{ssgnet_forward.1} parent=11 // pred_region
        _
      $region24: #{ssgnet_forward.1} parent=11 // pred_fallthru
        _
      // Predicated region
      $region25: #{ssgnet_forward.1} parent=11 // pred_check
        %p435 = pneg %p133
      $region26: #{ssgnet_forward.1} parent=11 // pred_check_branch
        %437 = sbr.rel (%p435) target = $region28
      $region27: #{ssgnet_forward.1} parent=11 // pred_region
        _
      $region28: #{ssgnet_forward.1} parent=11 // pred_fallthru
        _
      // Predicated region
      $region29: #{ssgnet_forward.1} parent=11 // pred_check
        %p438 = pneg %p154
      $region30: #{ssgnet_forward.1} parent=11 // pred_check_branch
        %440 = sbr.rel (%p438) target = $region32
      $region31: #{ssgnet_forward.1} parent=11 // pred_region
        _
      $region32: #{ssgnet_forward.1} parent=11 // pred_fallthru
        _
      // Predicated region
      $region33: #{ssgnet_forward.1} parent=11 // pred_check
        %p441 = pneg %p175
      $region34: #{ssgnet_forward.1} parent=11 // pred_check_branch
        %443 = sbr.rel (%p441) target = $region36
      $region35: #{ssgnet_forward.1} parent=11 // pred_region
        _
      $region36: #{ssgnet_forward.1} parent=11 // pred_fallthru
        _
      // Predicated region
      $region37: #{ssgnet_forward.1} parent=11 // pred_check
        %p444 = pneg %p196
      $region38: #{ssgnet_forward.1} parent=11 // pred_check_branch
        %446 = sbr.rel (%p444) target = $region40
      $region39: #{ssgnet_forward.1} parent=11 // pred_region
        _
      $region40: #{ssgnet_forward.1} parent=11 // pred_fallthru
        _
      // Predicated region
      $region41: #{ssgnet_forward.1} parent=11 // pred_check
        %p447 = pneg %p217
      $region42: #{ssgnet_forward.1} parent=11 // pred_check_branch
        %449 = sbr.rel (%p447) target = $region44
      $region43: #{ssgnet_forward.1} parent=11 // pred_region
        _
      $region44: #{ssgnet_forward.1} parent=11 // pred_fallthru
        _
      // Predicated region
      $region45: #{ssgnet_forward.1} parent=11 // pred_check
        %p450 = pneg %p238
      $region46: #{ssgnet_forward.1} parent=11 // pred_check_branch
        %452 = sbr.rel (%p450) target = $region48
      $region47: #{ssgnet_forward.1} parent=11 // pred_region
        _
      $region48: #{ssgnet_forward.1} parent=11 // pred_fallthru
        _
      // Predicated region
      $region49: #{ssgnet_forward.1} parent=11 // pred_check
        %p453 = pneg %p259
      $region50: #{ssgnet_forward.1} parent=11 // pred_check_branch
        %455 = sbr.rel (%p453) target = $region52
      $region51: #{ssgnet_forward.1} parent=11 // pred_region
        _
      $region52: #{ssgnet_forward.1} parent=11 // pred_fallthru
        _
      // Predicated region
      $region53: #{ssgnet_forward.1} parent=11 // pred_check
        %p456 = pneg %p280
      $region54: #{ssgnet_forward.1} parent=11 // pred_check_branch
        %458 = sbr.rel (%p456) target = $region56
      $region55: #{ssgnet_forward.1} parent=11 // pred_region
        _
      $region56: #{ssgnet_forward.1} parent=11 // pred_fallthru
        _
      // Predicated region
      $region57: #{ssgnet_forward.1} parent=11 // pred_check
        %p459 = pneg %p301
      $region58: #{ssgnet_forward.1} parent=11 // pred_check_branch
        %461 = sbr.rel (%p459) target = $region60
      $region59: #{ssgnet_forward.1} parent=11 // pred_region
        _
      $region60: #{ssgnet_forward.1} parent=11 // pred_fallthru
        _
      // Predicated region
      $region61: #{ssgnet_forward.1} parent=11 // pred_check
        %p462 = pneg %p322
      $region62: #{ssgnet_forward.1} parent=11 // pred_check_branch
        %464 = sbr.rel (%p462) target = $region64
      $region63: #{ssgnet_forward.1} parent=11 // pred_region
        _
      $region64: #{ssgnet_forward.1} parent=11 // pred_fallthru
        _
      // Predicated region
      $region65: #{ssgnet_forward.1} parent=11 // pred_check
        %p465 = pneg %p343
      $region66: #{ssgnet_forward.1} parent=11 // pred_check_branch
        %467 = sbr.rel (%p465) target = $region68
      $region67: #{ssgnet_forward.1} parent=11 // pred_region
        _
      $region68: #{ssgnet_forward.1} parent=11 // pred_fallthru
        _
      // Predicated region
      $region69: #{ssgnet_forward.1} parent=11 // pred_check
        %p468 = pneg %p364
      $region70: #{ssgnet_forward.1} parent=11 // pred_check_branch
        %470 = sbr.rel (%p468) target = $region72
      $region71: #{ssgnet_forward.1} parent=11 // pred_region
        _
      $region72: #{ssgnet_forward.1} parent=11 // pred_fallthru
        _
      // Predicated region
      $region73: #{ssgnet_forward.1} parent=11 // pred_check
        %p471 = pneg %p385
      $region74: #{ssgnet_forward.1} parent=11 // pred_check_branch
        %473 = sbr.rel (%p471) target = $region76
      $region75: #{ssgnet_forward.1} parent=11 // pred_region
        _
      $region76: #{ssgnet_forward.1} parent=11 // pred_fallthru
        _
    $region12: #{ssgnet_forward.1} parent=5 // pred_fallthru
      _
    %p474 = scmp.lt.s32.totalorder %s23, 2
    // Predicated region
    $region77: #{ssgnet_forward.1} parent=5 // pred_check
      %p475 = pneg %p474
    $region78: #{ssgnet_forward.1} parent=5 // pred_check_branch
      %477 = sbr.rel (%p475) target = $region80
    $region79: #{ssgnet_forward.1} parent=5 // pred_region
      // Predicated region
      $region81: #{ssgnet_forward.1} parent=79 // pred_check
        %p478 = pneg %p43
      $region82: #{ssgnet_forward.1} parent=79 // pred_check_branch
        %480 = sbr.rel (%p478) target = $region84
      $region83: #{ssgnet_forward.1} parent=79 // pred_region
        %p481 = scmp.lt.s32.totalorder %s23, 1
        %s482 = scalar_select %p481, %s23, 1
        %s483 = smul.addr %s482, 6
        %s484 = smul.addr %s483, 8
        %s485 = scalar_lea.vmem %s0, %s484
      $region84: #{ssgnet_forward.1} parent=79 // pred_fallthru
        _
    $region80: #{ssgnet_forward.1} parent=5 // pred_fallthru
      _
    %p486 = scmp.le.s32.totalorder 1, %s23
    %p487 = scmp.lt.s32.totalorder %s23, 3
    %p488 = pnand %p486, %p487
    %p489 = pneg %p488
    // Predicated region
    $region85: #{ssgnet_forward.1} parent=5 // pred_check
      _
    $region86: #{ssgnet_forward.1} parent=5 // pred_check_branch
      %491 = sbr.rel (%p488) target = $region88
    $region87: #{ssgnet_forward.1} parent=5 // pred_region
      %s492 = ssub.s32 %s23, 1
      %p493 = scmp.lt.s32.totalorder %s28, 1
      %s494 = scalar_select %p493, %s28, 1
      %s495 = smul.addr %s494, 6
      %s496 = smul.addr %s495, 8
      %s497 = scalar_lea.vmem %s0, %s496
      %p498 = pneg %p49
      %p499 = pneg %p46
      %p500 = pneg %p70
      %p501 = pneg %p67
      %p502 = pneg %p91
      %p503 = pneg %p88
      %p504 = pneg %p112
      %p505 = pneg %p109
      %p506 = pneg %p133
      %p507 = pneg %p130
      %p508 = pneg %p154
      %p509 = pneg %p151
      %p510 = pneg %p175
      %p511 = pneg %p172
      %p512 = pneg %p196
      %p513 = pneg %p193
      %p514 = pneg %p217
      %p515 = pneg %p214
      %p516 = pneg %p238
      %p517 = pneg %p235
      %p518 = pneg %p259
      %p519 = pneg %p256
      %p520 = pneg %p280
      %p521 = pneg %p277
      %p522 = pneg %p301
      %p523 = pneg %p298
      %p524 = pneg %p322
      %p525 = pneg %p319
      %p526 = pneg %p343
      %p527 = pneg %p340
      %p528 = pneg %p364
      %p529 = pneg %p361
      %p530 = pneg %p385
      %p531 = pneg %p382
      %p532 = pneg %p411
      %p533 = pneg %p408
      %p534 = scmp.lt.s32.totalorder %s28, 1
      %s535 = scalar_select %p534, %s28, 1
      %s536 = smul.addr %s535, 3
      %s537 = smul.addr %s536, 8
      %s538 = scalar_lea.vmem %s17, %s537
      %p539 = scmp.lt.s32.totalorder %s28, 1
      %s540 = scalar_select %p539, %s28, 1
      %s541 = smul.addr %s540, 6
      %s542 = smul.addr %s541, 8
      %s543 = scalar_lea.vmem %s0, %s542
      %p544 = scmp.lt.s32.totalorder %s28, 1
      %s545 = scalar_select %p544, %s28, 1
      %s546 = smul.addr %s545, 3
      %s547 = smul.addr %s546, 8
      %s548 = scalar_lea.vmem %s17, %s547
      %v550 = vld [vmem:[%s1] sm:$0x7]
      %v551 = vld [vmem:[%s543] sm:$0xff]
      %v552 = vld [vmem:[%s543 + $0x8] sm:$0xff]
      %v553 = vld [vmem:[%s543 + $0x10] sm:$0xff]
      %v554 = vld [vmem:[%s543 + $0x18] sm:$0xff]
      %v555 = vld [vmem:[%s543 + $0x20] sm:$0xff]
      %v556 = vld [vmem:[%s543 + $0x28] sm:$0xff]
      %557 = vrot.lane.b32.xlu0 %v551, 19
      %v558 = vpop.permute.xlu0 %557
      %559 = vrot.lane.b32.xlu0 %v554, 19
      %v560 = vpop.permute.xlu0 %559
      %561 = vrot.lane.b32.xlu0 %v552, 19
      %v562 = vpop.permute.xlu0 %561
      %563 = vrot.lane.b32.xlu0 %v555, 19
      %v564 = vpop.permute.xlu0 %563
      %565 = vrot.lane.b32.xlu0 %v553, 19
      %v566 = vpop.permute.xlu0 %565
      %567 = vrot.lane.b32.xlu0 %v556, 19
      %v568 = vpop.permute.xlu0 %567
      %v569 = vlaneseq
      %v570 = vand.u32 %v569, 127
      %vm571 = vcmp.lt.s32.totalorder %v570, 19
      %v572 = vsel %vm571, %v562, %v566
      %v573 = vsel %vm571, %v564, %v568
      %v574 = vsel %vm571, %v558, %v562
      %v575 = vsel %vm571, %v560, %v564
      %v576 = vsel %vm571, %v566, %v558
      %v577 = vsel %vm571, %v568, %v560
      %v578 = vpack.c.bf16 %v577, %v576
      %v579 = vpack.c.bf16 %v575, %v574
      %v580 = vpack.c.bf16 %v573, %v572
      %581 = vrot.lane.b32.xlu0 %v551, 18
      %v582 = vpop.permute.xlu0 %581
      %583 = vrot.lane.b32.xlu0 %v554, 18
      %v584 = vpop.permute.xlu0 %583
      %585 = vrot.lane.b32.xlu0 %v552, 18
      %v586 = vpop.permute.xlu0 %585
      %587 = vrot.lane.b32.xlu0 %v555, 18
      %v588 = vpop.permute.xlu0 %587
      %589 = vrot.lane.b32.xlu0 %v553, 18
      %v590 = vpop.permute.xlu0 %589
      %591 = vrot.lane.b32.xlu0 %v556, 18
      %v592 = vpop.permute.xlu0 %591
      %vm593 = vcmp.lt.s32.totalorder %v570, 18
      %v594 = vsel %vm593, %v586, %v590
      %v595 = vsel %vm593, %v588, %v592
      %v596 = vsel %vm593, %v582, %v586
      %v597 = vsel %vm593, %v584, %v588
      %v598 = vsel %vm593, %v590, %v582
      %v599 = vsel %vm593, %v592, %v584
      %v600 = vpack.c.bf16 %v599, %v598
      %v601 = vpack.c.bf16 %v597, %v596
      %v602 = vpack.c.bf16 %v595, %v594
      %603 = vrot.lane.b32.xlu0 %v551, 17
      %v604 = vpop.permute.xlu0 %603
      %605 = vrot.lane.b32.xlu0 %v554, 17
      %v606 = vpop.permute.xlu0 %605
      %607 = vrot.lane.b32.xlu0 %v552, 17
      %v608 = vpop.permute.xlu0 %607
      %609 = vrot.lane.b32.xlu0 %v555, 17
      %v610 = vpop.permute.xlu0 %609
      %611 = vrot.lane.b32.xlu0 %v553, 17
      %v612 = vpop.permute.xlu0 %611
      %613 = vrot.lane.b32.xlu0 %v556, 17
      %v614 = vpop.permute.xlu0 %613
      %vm615 = vcmp.lt.s32.totalorder %v570, 17
      %v616 = vsel %vm615, %v608, %v612
      %v617 = vsel %vm615, %v610, %v614
      %v618 = vsel %vm615, %v604, %v608
      %v619 = vsel %vm615, %v606, %v610
      %v620 = vsel %vm615, %v612, %v604
      %v621 = vsel %vm615, %v614, %v606
      %v622 = vpack.c.bf16 %v621, %v620
      %v623 = vpack.c.bf16 %v619, %v618
      %v624 = vpack.c.bf16 %v617, %v616
      %625 = vrot.lane.b32.xlu0 %v551, 1
      %v626 = vpop.permute.xlu0 %625
      %627 = vrot.lane.b32.xlu0 %v554, 1
      %v628 = vpop.permute.xlu0 %627
      %629 = vrot.lane.b32.xlu0 %v552, 1
      %v630 = vpop.permute.xlu0 %629
      %631 = vrot.lane.b32.xlu0 %v555, 1
      %v632 = vpop.permute.xlu0 %631
      %633 = vrot.lane.b32.xlu0 %v553, 1
      %v634 = vpop.permute.xlu0 %633
      %635 = vrot.lane.b32.xlu0 %v556, 1
      %v636 = vpop.permute.xlu0 %635
      %vm637 = vcmp.lt.s32.totalorder %v570, 1
      %v638 = vsel %vm637, %v630, %v634
      %v639 = vsel %vm637, %v632, %v636
      %v640 = vsel %vm637, %v626, %v630
      %v641 = vsel %vm637, %v628, %v632
      %v642 = vsel %vm637, %v634, %v626
      %v643 = vsel %vm637, %v636, %v628
      %v644 = vpack.c.bf16 %v643, %v642
      %v645 = vpack.c.bf16 %v641, %v640
      %v646 = vpack.c.bf16 %v639, %v638
      %v647 = vpack.c.bf16 %v554, %v551
      %v648 = vpack.c.bf16 %v555, %v552
      %v649 = vpack.c.bf16 %v556, %v553
      %650 = vrot.lane.b32.xlu0 %v551, 127
      %v651 = vpop.permute.xlu0 %650
      %652 = vrot.lane.b32.xlu0 %v554, 127
      %v653 = vpop.permute.xlu0 %652
      %654 = vrot.lane.b32.xlu0 %v552, 127
      %v655 = vpop.permute.xlu0 %654
      %656 = vrot.lane.b32.xlu0 %v555, 127
      %v657 = vpop.permute.xlu0 %656
      %658 = vrot.lane.b32.xlu0 %v553, 127
      %v659 = vpop.permute.xlu0 %658
      %660 = vrot.lane.b32.xlu0 %v556, 127
      %v661 = vpop.permute.xlu0 %660
      %vm662 = vcmp.lt.s32.totalorder %v570, 127
      %v663 = vsel %vm662, %v655, %v659
      %v664 = vsel %vm662, %v657, %v661
      %v665 = vsel %vm662, %v651, %v655
      %v666 = vsel %vm662, %v653, %v657
      %v667 = vsel %vm662, %v659, %v651
      %v668 = vsel %vm662, %v661, %v653
      %v669 = vpack.c.bf16 %v666, %v665
      %v670 = vpack.c.bf16 %v664, %v663
      %v671 = vpack.c.bf16 %v668, %v667
      %672 = vrot.lane.b32.xlu0 %v551, 111
      %v673 = vpop.permute.xlu0 %672
      %674 = vrot.lane.b32.xlu0 %v554, 111
      %v675 = vpop.permute.xlu0 %674
      %676 = vrot.lane.b32.xlu0 %v552, 111
      %v677 = vpop.permute.xlu0 %676
      %678 = vrot.lane.b32.xlu0 %v555, 111
      %v679 = vpop.permute.xlu0 %678
      %680 = vrot.lane.b32.xlu0 %v553, 111
      %v681 = vpop.permute.xlu0 %680
      %682 = vrot.lane.b32.xlu0 %v556, 111
      %v683 = vpop.permute.xlu0 %682
      %vm684 = vcmp.lt.s32.totalorder %v570, 111
      %v685 = vsel %vm684, %v677, %v681
      %v686 = vsel %vm684, %v679, %v683
      %v687 = vsel %vm684, %v673, %v677
      %v688 = vsel %vm684, %v675, %v679
      %v689 = vsel %vm684, %v681, %v673
      %v690 = vsel %vm684, %v683, %v675
      %v691 = vpack.c.bf16 %v688, %v687
      %v692 = vpack.c.bf16 %v686, %v685
      %v693 = vpack.c.bf16 %v690, %v689
      %694 = vrot.lane.b32.xlu0 %v551, 110
      %v695 = vpop.permute.xlu0 %694
      %696 = vrot.lane.b32.xlu0 %v554, 110
      %v697 = vpop.permute.xlu0 %696
      %698 = vrot.lane.b32.xlu0 %v552, 110
      %v699 = vpop.permute.xlu0 %698
      %700 = vrot.lane.b32.xlu0 %v555, 110
      %v701 = vpop.permute.xlu0 %700
      %702 = vrot.lane.b32.xlu0 %v553, 110
      %v703 = vpop.permute.xlu0 %702
      %704 = vrot.lane.b32.xlu0 %v556, 110
      %v705 = vpop.permute.xlu0 %704
      %vm706 = vcmp.lt.s32.totalorder %v570, 110
      %v707 = vsel %vm706, %v699, %v703
      %v708 = vsel %vm706, %v701, %v705
      %v709 = vsel %vm706, %v695, %v699
      %v710 = vsel %vm706, %v697, %v701
      %v711 = vsel %vm706, %v703, %v695
      %v712 = vsel %vm706, %v705, %v697
      %v713 = vpack.c.bf16 %v710, %v709
      %v714 = vpack.c.bf16 %v708, %v707
      %v715 = vpack.c.bf16 %v712, %v711
      %716 = vrot.lane.b32.xlu0 %v551, 109
      %v717 = vpop.permute.xlu0 %716
      %718 = vrot.lane.b32.xlu0 %v554, 109
      %v719 = vpop.permute.xlu0 %718
      %720 = vrot.lane.b32.xlu0 %v552, 109
      %v721 = vpop.permute.xlu0 %720
      %722 = vrot.lane.b32.xlu0 %v555, 109
      %v723 = vpop.permute.xlu0 %722
      %724 = vrot.lane.b32.xlu0 %v553, 109
      %v725 = vpop.permute.xlu0 %724
      %726 = vrot.lane.b32.xlu0 %v556, 109
      %v727 = vpop.permute.xlu0 %726
      %vm728 = vcmp.lt.s32.totalorder %v570, 109
      %v729 = vsel %vm728, %v721, %v725
      %v730 = vsel %vm728, %v723, %v727
      %v731 = vsel %vm728, %v717, %v721
      %v732 = vsel %vm728, %v719, %v723
      %v733 = vsel %vm728, %v725, %v717
      %v734 = vsel %vm728, %v727, %v719
      %v735 = vpack.c.bf16 %v732, %v731
      %v736 = vpack.c.bf16 %v730, %v729
      %v737 = vpack.c.bf16 %v734, %v733
      %v738 = vld [vmem:[%s2] sm:$0xff]
      %v739 = vld [vmem:[%s2 + $0x8] sm:$0xff]
      %v740 = vld [vmem:[%s2 + $0x10] sm:$0xff]
      %v741 = vld [vmem:[%s2 + $0x18] sm:$0xff]
      %v746 = vunpack.c.l.b16 %v738
      %v747 = vunpack.c.h.b16 %v738
      %v748 = vunpack.c.l.b16 %v739
      %v749 = vunpack.c.h.b16 %v739
      %v750 = vunpack.c.l.b16 %v740
      %v751 = vunpack.c.h.b16 %v740
      %v752 = vunpack.c.l.b16 %v741
      %v753 = vunpack.c.h.b16 %v741
      %v754 = vpack.c.b16 %v748, %v746
      %v755 = vpack.c.b16 %v749, %v747
      %v756 = vpack.c.b16 %v752, %v750
      %v757 = vpack.c.b16 %v753, %v751
      %vm760 = vcmask 130048
      %v762 = vsel %vm760, %v755, 0
      %v765 = vsel %vm760, %v757, 0
      %767 = vmatprep.subr.bf16.mxu0 %v714
      %768 = vmatpush1.bf16.msra.mxu0 %v713
      %769 = vmatprep.subr.bf16.mxu0 %v692
      %770 = vmatpush1.bf16.msra.mxu0 %v691
      %771 = vmatprep.subr.bf16.mxu0 %v670
      %772 = vmatpush1.bf16.msra.mxu0 %v669
      %773 = vmatprep.subr.bf16.mxu0 %v648
      %774 = vmatpush1.bf16.msra.mxu0 %v647
      %775 = vmatprep.subr.bf16.mxu0 %v645
      %776 = vmatpush1.bf16.msra.mxu0 %v644
      %777 = vmatprep.subr.bf16.mxu0 %v623
      %778 = vmatpush1.bf16.msra.mxu0 %v622
      %779 = vmatprep.subr.bf16.mxu0 %v601
      %780 = vmatpush1.bf16.msra.mxu0 %v600
      %781 = vmatprep.subr.bf16.mxu0 %v579
      %782 = vmatpush1.bf16.msra.mxu0 %v578
      %783 = vmatprep.subr.bf16.mxu0 0
      %784 = vmatpush2.bf16.msra.mxu0 0
      %785 = vmatprep.subr.bf16.mxu0 0
      %786 = vmatpush2.bf16.msra.mxu0 0
      %787 = vmatprep.subr.bf16.mxu0 0
      %788 = vmatpush2.bf16.msra.mxu0 0
      %789 = vmatprep.subr.bf16.mxu0 0
      %790 = vmatpush2.bf16.msra.mxu0 0
      %791 = vmatprep.subr.bf16.mxu0 0
      %792 = vmatpush2.bf16.msra.mxu0 0
      %793 = vmatprep.subr.bf16.mxu0 0
      %794 = vmatpush2.bf16.msra.mxu0 0
      %795 = vmatprep.subr.bf16.mxu0 0
      %796 = vmatpush2.bf16.msra.mxu0 0
      %797 = vmatprep.subr.bf16.mxu0 %v736
      %798 = vmatpush2.bf16.msra.mxu0 %v735
      %799 = vmatprep.mubr.bf16.mxu0 %v762
      %800 = vmatmul.mubr.bf16.gmra.mxu0 %v754
      %v801 = vpop.f32.mrf.mxu0
      %v802 = vadd.f32 0.0, %v801
      %v803 = vpop.f32.mrf.mxu0
      %v804 = vadd.f32 0.0, %v803
      %v805 = vpop.f32.mrf.mxu0
      %v806 = vadd.f32 0.0, %v805
      %v807 = vpop.f32.mrf.mxu0
      %v808 = vadd.f32 0.0, %v807
      %809 = vmatprep.mubr.bf16.mxu0 %v765
      %810 = vmatmul.mubr.bf16.gmra.mxu0 %v756
      %v811 = vpop.f32.mrf.mxu0
      %v812 = vadd.f32 0.0, %v811
      %v813 = vpop.f32.mrf.mxu0
      %v814 = vadd.f32 0.0, %v813
      %v815 = vpop.f32.mrf.mxu0
      %v816 = vadd.f32 0.0, %v815
      %v817 = vpop.f32.mrf.mxu0
      %v818 = vadd.f32 0.0, %v817
      %819 = vdwg.mxu0
      %820 = vmatprep.subr.bf16.mxu0 0
      %821 = vmatpush1.bf16.msra.mxu0 %v715
      %822 = vmatprep.subr.bf16.mxu0 0
      %823 = vmatpush1.bf16.msra.mxu0 %v693
      %824 = vmatprep.subr.bf16.mxu0 0
      %825 = vmatpush1.bf16.msra.mxu0 %v671
      %826 = vmatprep.subr.bf16.mxu0 0
      %827 = vmatpush1.bf16.msra.mxu0 %v649
      %828 = vmatprep.subr.bf16.mxu0 0
      %829 = vmatpush1.bf16.msra.mxu0 %v646
      %830 = vmatprep.subr.bf16.mxu0 0
      %831 = vmatpush1.bf16.msra.mxu0 %v624
      %832 = vmatprep.subr.bf16.mxu0 0
      %833 = vmatpush1.bf16.msra.mxu0 %v602
      %834 = vmatprep.subr.bf16.mxu0 0
      %835 = vmatpush1.bf16.msra.mxu0 %v580
      %836 = vmatprep.subr.bf16.mxu0 0
      %837 = vmatpush2.bf16.msra.mxu0 0
      %838 = vmatprep.subr.bf16.mxu0 0
      %839 = vmatpush2.bf16.msra.mxu0 0
      %840 = vmatprep.subr.bf16.mxu0 0
      %841 = vmatpush2.bf16.msra.mxu0 0
      %842 = vmatprep.subr.bf16.mxu0 0
      %843 = vmatpush2.bf16.msra.mxu0 0
      %844 = vmatprep.subr.bf16.mxu0 0
      %845 = vmatpush2.bf16.msra.mxu0 0
      %846 = vmatprep.subr.bf16.mxu0 0
      %847 = vmatpush2.bf16.msra.mxu0 0
      %848 = vmatprep.subr.bf16.mxu0 0
      %849 = vmatpush2.bf16.msra.mxu0 0
      %850 = vmatprep.subr.bf16.mxu0 0
      %851 = vmatpush2.bf16.msra.mxu0 %v737
      %852 = vmatprep.mubr.bf16.mxu0 %v762
      %853 = vmatmul.mubr.bf16.gmra.mxu0 %v754
      %v854 = vpop.f32.mrf.mxu0
      %v855 = vadd.f32 0.0, %v854
      %v856 = vpop.f32.mrf.mxu0
      %v857 = vpop.f32.mrf.mxu0
      %v858 = vadd.f32 0.0, %v857
      %v859 = vpop.f32.mrf.mxu0
      %860 = vmatprep.mubr.bf16.mxu0 %v765
      %861 = vmatmul.mubr.bf16.gmra.mxu0 %v756
      %v862 = vpop.f32.mrf.mxu0
      %v863 = vadd.f32 0.0, %v862
      %v864 = vpop.f32.mrf.mxu0
      %v865 = vpop.f32.mrf.mxu0
      %v866 = vadd.f32 0.0, %v865
      %v867 = vpop.f32.mrf.mxu0
      %868 = vdwg.mxu0
      %v869 = vld [vmem:[%s3] sm:$0xff]
      %v870 = vld [vmem:[%s3 + $0x8] sm:$0xff]
      %v871 = vld [vmem:[%s3 + $0x10] sm:$0xff]
      %v872 = vld [vmem:[%s3 + $0x18] sm:$0xff]
      %v873 = vld [vmem:[%s4] sm:$0xff]
      %v874 = vld [vmem:[%s4 + $0x8] sm:$0xff]
      %v875 = vld [vmem:[%s4 + $0x10] sm:$0xff]
      %v876 = vld [vmem:[%s4 + $0x18] sm:$0xff]
      %v877 = vadd.f32 %v802, %v806
      %v878 = vadd.f32 %v877, %v812
      %v879 = vadd.f32 %v878, %v816
      %v880 = vrot.slane %v879, 4
      %v881 = vadd.f32 %v879, %v880
      %v882 = vrot.slane %v881, 2
      %v883 = vadd.f32 %v881, %v882
      %v884 = vrot.slane %v883, 1
      %v885 = vadd.f32 %v883, %v884
      %v886 = vadd.f32 %v804, %v808
      %v887 = vadd.f32 %v886, %v814
      %v888 = vadd.f32 %v887, %v818
      %v889 = vrot.slane %v888, 4
      %v890 = vadd.f32 %v888, %v889
      %v891 = vrot.slane %v890, 2
      %v892 = vadd.f32 %v890, %v891
      %v893 = vrot.slane %v892, 1
      %v894 = vadd.f32 %v892, %v893
      %v895 = vadd.f32 %v855, %v858
      %v896 = vadd.f32 %v895, %v863
      %v897 = vadd.f32 %v896, %v866
      %v898 = vrot.slane %v897, 4
      %v899 = vadd.f32 %v897, %v898
      %v900 = vrot.slane %v899, 2
      %v901 = vadd.f32 %v899, %v900
      %v902 = vrot.slane %v901, 1
      %v903 = vadd.f32 %v901, %v902
      %v904 = vmul.f32 %v885, 0.03125
      %v905 = vmul.f32 %v894, 0.03125
      %v906 = vmul.f32 %v903, 0.03125
      %v907 = vmul.f32 %v802, %v802
      %v908 = vmul.f32 %v804, %v804
      %v909 = vmul.f32 %v855, %v855
      %v910 = vmul.f32 %v806, %v806
      %v911 = vmul.f32 %v808, %v808
      %v912 = vmul.f32 %v858, %v858
      %v913 = vmul.f32 %v812, %v812
      %v914 = vmul.f32 %v814, %v814
      %v915 = vmul.f32 %v863, %v863
      %v916 = vmul.f32 %v816, %v816
      %v917 = vmul.f32 %v818, %v818
      %v918 = vmul.f32 %v866, %v866
      %v919 = vadd.f32 %v907, %v910
      %v920 = vadd.f32 %v919, %v913
      %v921 = vadd.f32 %v920, %v916
      %v922 = vrot.slane %v921, 4
      %v923 = vadd.f32 %v921, %v922
      %v924 = vrot.slane %v923, 2
      %v925 = vadd.f32 %v923, %v924
      %v926 = vrot.slane %v925, 1
      %v927 = vadd.f32 %v925, %v926
      %v928 = vadd.f32 %v908, %v911
      %v929 = vadd.f32 %v928, %v914
      %v930 = vadd.f32 %v929, %v917
      %v931 = vrot.slane %v930, 4
      %v932 = vadd.f32 %v930, %v931
      %v933 = vrot.slane %v932, 2
      %v934 = vadd.f32 %v932, %v933
      %v935 = vrot.slane %v934, 1
      %v936 = vadd.f32 %v934, %v935
      %v937 = vadd.f32 %v909, %v912
      %v938 = vadd.f32 %v937, %v915
      %v939 = vadd.f32 %v938, %v918
      %v940 = vrot.slane %v939, 4
      %v941 = vadd.f32 %v939, %v940
      %v942 = vrot.slane %v941, 2
      %v943 = vadd.f32 %v941, %v942
      %v944 = vrot.slane %v943, 1
      %v945 = vadd.f32 %v943, %v944
      %v946 = vmul.f32 %v927, 0.03125
      %v947 = vmul.f32 %v936, 0.03125
      %v948 = vmul.f32 %v945, 0.03125
      %v949 = vmul.f32 %v904, %v904
      %v950 = vmul.f32 %v905, %v905
      %v951 = vmul.f32 %v906, %v906
      %v952 = vsub.f32 %v946, %v949
      %v953 = vsub.f32 %v947, %v950
      %v954 = vsub.f32 %v948, %v951
      %v955 = vmax.f32 %v952, 0.0
      %v956 = vmax.f32 %v953, 0.0
      %v957 = vmax.f32 %v954, 0.0
      %v958 = vsub.f32 %v802, %v904
      %v959 = vsub.f32 %v804, %v905
      %v960 = vsub.f32 %v855, %v906
      %v961 = vsub.f32 %v806, %v904
      %v962 = vsub.f32 %v808, %v905
      %v963 = vsub.f32 %v858, %v906
      %v964 = vsub.f32 %v812, %v904
      %v965 = vsub.f32 %v814, %v905
      %v966 = vsub.f32 %v863, %v906
      %v967 = vsub.f32 %v816, %v904
      %v968 = vsub.f32 %v818, %v905
      %v969 = vsub.f32 %v866, %v906
      %v970 = vadd.f32 %v955, 1e-06
      %v971 = vadd.f32 %v956, 1e-06
      %v972 = vadd.f32 %v957, 1e-06
      %v973 = vrsqrt.pop %v970
      %v974 = vrsqrt.pop %v971
      %v975 = vrsqrt.pop %v972
      %v976 = vmul.f32 %v958, %v973
      %v977 = vmul.f32 %v959, %v974
      %v978 = vmul.f32 %v960, %v975
      %v979 = vmul.f32 %v961, %v973
      %v980 = vmul.f32 %v962, %v974
      %v981 = vmul.f32 %v963, %v975
      %v982 = vmul.f32 %v964, %v973
      %v983 = vmul.f32 %v965, %v974
      %v984 = vmul.f32 %v966, %v975
      %v985 = vmul.f32 %v967, %v973
      %v986 = vmul.f32 %v968, %v974
      %v987 = vmul.f32 %v969, %v975
      %989 = vset.pattern.permute.xlu0 0
      %990 = vperm.xlu0 %989, %v869
      %v991 = vpop.permute.xlu0 %990
      %994 = vset.pattern.permute.xlu0 0
      %995 = vperm.xlu0 %994, %v870
      %v996 = vpop.permute.xlu0 %995
      %999 = vset.pattern.permute.xlu0 0
      %1000 = vperm.xlu0 %999, %v871
      %v1001 = vpop.permute.xlu0 %1000
      %1004 = vset.pattern.permute.xlu0 0
      %1005 = vperm.xlu0 %1004, %v872
      %v1006 = vpop.permute.xlu0 %1005
      %v1008 = vmul.f32 %v991, %v976
      %v1009 = vmul.f32 %v991, %v977
      %v1010 = vmul.f32 %v991, %v978
      %v1011 = vmul.f32 %v996, %v979
      %v1012 = vmul.f32 %v996, %v980
      %v1013 = vmul.f32 %v996, %v981
      %v1014 = vmul.f32 %v1001, %v982
      %v1015 = vmul.f32 %v1001, %v983
      %v1016 = vmul.f32 %v1001, %v984
      %v1017 = vmul.f32 %v1006, %v985
      %v1018 = vmul.f32 %v1006, %v986
      %v1019 = vmul.f32 %v1006, %v987
      %1021 = vset.pattern.permute.xlu0 0
      %1022 = vperm.xlu0 %1021, %v873
      %v1023 = vpop.permute.xlu0 %1022
      %1026 = vset.pattern.permute.xlu0 0
      %1027 = vperm.xlu0 %1026, %v874
      %v1028 = vpop.permute.xlu0 %1027
      %1031 = vset.pattern.permute.xlu0 0
      %1032 = vperm.xlu0 %1031, %v875
      %v1033 = vpop.permute.xlu0 %1032
      %1036 = vset.pattern.permute.xlu0 0
      %1037 = vperm.xlu0 %1036, %v876
      %v1038 = vpop.permute.xlu0 %1037
      %v1040 = vadd.f32 %v1008, %v1023
      %v1041 = vadd.f32 %v1009, %v1023
      %v1042 = vadd.f32 %v1010, %v1023
      %v1043 = vadd.f32 %v1011, %v1028
      %v1044 = vadd.f32 %v1012, %v1028
      %v1045 = vadd.f32 %v1013, %v1028
      %v1046 = vadd.f32 %v1014, %v1033
      %v1047 = vadd.f32 %v1015, %v1033
      %v1048 = vadd.f32 %v1016, %v1033
      %v1049 = vadd.f32 %v1017, %v1038
      %v1050 = vadd.f32 %v1018, %v1038
      %v1051 = vadd.f32 %v1019, %v1038
      %v1052 = vmul.f32 %v1040, 0.5
      %v1053 = vmul.f32 %v1041, 0.5
      %v1054 = vmul.f32 %v1042, 0.5
      %v1055 = vmul.f32 %v1043, 0.5
      %v1056 = vmul.f32 %v1044, 0.5
      %v1057 = vmul.f32 %v1045, 0.5
      %v1058 = vmul.f32 %v1046, 0.5
      %v1059 = vmul.f32 %v1047, 0.5
      %v1060 = vmul.f32 %v1048, 0.5
      %v1061 = vmul.f32 %v1049, 0.5
      %v1062 = vmul.f32 %v1050, 0.5
      %v1063 = vmul.f32 %v1051, 0.5
      %v1064 = vmul.f32 %v1040, %v1040
      %v1065 = vmul.f32 %v1041, %v1041
      %v1066 = vmul.f32 %v1042, %v1042
      %v1067 = vmul.f32 %v1043, %v1043
      %v1068 = vmul.f32 %v1044, %v1044
      %v1069 = vmul.f32 %v1045, %v1045
      %v1070 = vmul.f32 %v1046, %v1046
      %v1071 = vmul.f32 %v1047, %v1047
      %v1072 = vmul.f32 %v1048, %v1048
      %v1073 = vmul.f32 %v1049, %v1049
      %v1074 = vmul.f32 %v1050, %v1050
      %v1075 = vmul.f32 %v1051, %v1051
      %v1076 = vmul.f32 %v1064, %v1040
      %v1077 = vmul.f32 %v1065, %v1041
      %v1078 = vmul.f32 %v1066, %v1042
      %v1079 = vmul.f32 %v1067, %v1043
      %v1080 = vmul.f32 %v1068, %v1044
      %v1081 = vmul.f32 %v1069, %v1045
      %v1082 = vmul.f32 %v1070, %v1046
      %v1083 = vmul.f32 %v1071, %v1047
      %v1084 = vmul.f32 %v1072, %v1048
      %v1085 = vmul.f32 %v1073, %v1049
      %v1086 = vmul.f32 %v1074, %v1050
      %v1087 = vmul.f32 %v1075, %v1051
      %v1088 = vmul.f32 %v1076, 0.044715
      %v1089 = vmul.f32 %v1077, 0.044715
      %v1090 = vmul.f32 %v1078, 0.044715
      %v1091 = vmul.f32 %v1079, 0.044715
      %v1092 = vmul.f32 %v1080, 0.044715
      %v1093 = vmul.f32 %v1081, 0.044715
      %v1094 = vmul.f32 %v1082, 0.044715
      %v1095 = vmul.f32 %v1083, 0.044715
      %v1096 = vmul.f32 %v1084, 0.044715
      %v1097 = vmul.f32 %v1085, 0.044715
      %v1098 = vmul.f32 %v1086, 0.044715
      %v1099 = vmul.f32 %v1087, 0.044715
      %v1100 = vadd.f32 %v1040, %v1088
      %v1101 = vadd.f32 %v1041, %v1089
      %v1102 = vadd.f32 %v1042, %v1090
      %v1103 = vadd.f32 %v1043, %v1091
      %v1104 = vadd.f32 %v1044, %v1092
      %v1105 = vadd.f32 %v1045, %v1093
      %v1106 = vadd.f32 %v1046, %v1094
      %v1107 = vadd.f32 %v1047, %v1095
      %v1108 = vadd.f32 %v1048, %v1096
      %v1109 = vadd.f32 %v1049, %v1097
      %v1110 = vadd.f32 %v1050, %v1098
      %v1111 = vadd.f32 %v1051, %v1099
      %v1112 = vmul.f32 %v1100, 0.7978846
      %v1113 = vmul.f32 %v1101, 0.7978846
      %v1114 = vmul.f32 %v1102, 0.7978846
      %v1115 = vmul.f32 %v1103, 0.7978846
      %v1116 = vmul.f32 %v1104, 0.7978846
      %v1117 = vmul.f32 %v1105, 0.7978846
      %v1118 = vmul.f32 %v1106, 0.7978846
      %v1119 = vmul.f32 %v1107, 0.7978846
      %v1120 = vmul.f32 %v1108, 0.7978846
      %v1121 = vmul.f32 %v1109, 0.7978846
      %v1122 = vmul.f32 %v1110, 0.7978846
      %v1123 = vmul.f32 %v1111, 0.7978846
      %v1124 = vtanh.pop %v1112
      %v1125 = vtanh.pop %v1113
      %v1126 = vtanh.pop %v1114
      %v1127 = vtanh.pop %v1115
      %v1128 = vtanh.pop %v1116
      %v1129 = vtanh.pop %v1117
      %v1130 = vtanh.pop %v1118
      %v1131 = vtanh.pop %v1119
      %v1132 = vtanh.pop %v1120
      %v1133 = vtanh.pop %v1121
      %v1134 = vtanh.pop %v1122
      %v1135 = vtanh.pop %v1123
      %v1136 = vadd.f32 %v1124, 1.0
      %v1137 = vadd.f32 %v1125, 1.0
      %v1138 = vadd.f32 %v1126, 1.0
      %v1139 = vadd.f32 %v1127, 1.0
      %v1140 = vadd.f32 %v1128, 1.0
      %v1141 = vadd.f32 %v1129, 1.0
      %v1142 = vadd.f32 %v1130, 1.0
      %v1143 = vadd.f32 %v1131, 1.0
      %v1144 = vadd.f32 %v1132, 1.0
      %v1145 = vadd.f32 %v1133, 1.0
      %v1146 = vadd.f32 %v1134, 1.0
      %v1147 = vadd.f32 %v1135, 1.0
      %v1148 = vmul.f32 %v1052, %v1136
      %v1149 = vmul.f32 %v1053, %v1137
      %v1150 = vmul.f32 %v1054, %v1138
      %v1151 = vmul.f32 %v1055, %v1139
      %v1152 = vmul.f32 %v1056, %v1140
      %v1153 = vmul.f32 %v1057, %v1141
      %v1154 = vmul.f32 %v1058, %v1142
      %v1155 = vmul.f32 %v1059, %v1143
      %v1156 = vmul.f32 %v1060, %v1144
      %v1157 = vmul.f32 %v1061, %v1145
      %v1158 = vmul.f32 %v1062, %v1146
      %v1159 = vmul.f32 %v1063, %v1147
      %v1161 = vlaneseq
      %v1162 = vshrl.u32 %v1161, 7
      %v1163 = vsub.s32 0, %v1162
      %v1164 = vrot.slane %v550, %v1163
      %v1165 = vlaneseq
      %v1166 = vshrl.u32 %v1165, 7
      %v1167 = vsub.s32 1, %v1166
      %v1168 = vrot.slane %v550, %v1167
      %v1169 = vlaneseq
      %v1170 = vshrl.u32 %v1169, 7
      %v1171 = vsub.s32 2, %v1170
      %v1172 = vrot.slane %v550, %v1171
      %v1176 = vmul.f32 %v1148, %v1164
      %v1177 = vmul.f32 %v1149, %v1168
      %v1178 = vmul.f32 %v1150, %v1172
      %v1179 = vmul.f32 %v1151, %v1164
      %v1180 = vmul.f32 %v1152, %v1168
      %v1181 = vmul.f32 %v1153, %v1172
      %v1182 = vmul.f32 %v1154, %v1164
      %v1183 = vmul.f32 %v1155, %v1168
      %v1184 = vmul.f32 %v1156, %v1172
      %v1185 = vmul.f32 %v1157, %v1164
      %v1186 = vmul.f32 %v1158, %v1168
      %v1187 = vmul.f32 %v1159, %v1172
      %1188 = vrot.lane.b32.xlu0 %v1176, 19
      %v1189 = vpop.permute.xlu0 %1188
      %1190 = vrot.lane.b32.xlu0 %v1179, 19
      %v1191 = vpop.permute.xlu0 %1190
      %1192 = vrot.lane.b32.xlu0 %v1182, 19
      %v1193 = vpop.permute.xlu0 %1192
      %1194 = vrot.lane.b32.xlu0 %v1185, 19
      %v1195 = vpop.permute.xlu0 %1194
      %1196 = vrot.lane.b32.xlu0 %v1177, 19
      %v1197 = vpop.permute.xlu0 %1196
      %1198 = vrot.lane.b32.xlu0 %v1180, 19
      %v1199 = vpop.permute.xlu0 %1198
      %1200 = vrot.lane.b32.xlu0 %v1183, 19
      %v1201 = vpop.permute.xlu0 %1200
      %1202 = vrot.lane.b32.xlu0 %v1186, 19
      %v1203 = vpop.permute.xlu0 %1202
      %1204 = vrot.lane.b32.xlu0 %v1178, 19
      %v1205 = vpop.permute.xlu0 %1204
      %1206 = vrot.lane.b32.xlu0 %v1181, 19
      %v1207 = vpop.permute.xlu0 %1206
      %1208 = vrot.lane.b32.xlu0 %v1184, 19
      %v1209 = vpop.permute.xlu0 %1208
      %1210 = vrot.lane.b32.xlu0 %v1187, 19
      %v1211 = vpop.permute.xlu0 %1210
      %v1212 = vsel %vm571, %v1197, %v1205
      %v1213 = vsel %vm571, %v1199, %v1207
      %v1214 = vsel %vm571, %v1201, %v1209
      %v1215 = vsel %vm571, %v1203, %v1211
      %v1216 = vsel %vm571, %v1189, %v1197
      %v1217 = vsel %vm571, %v1191, %v1199
      %v1218 = vsel %vm571, %v1193, %v1201
      %v1219 = vsel %vm571, %v1195, %v1203
      %v1220 = vsel %vm571, %v1205, %v1189
      %v1221 = vsel %vm571, %v1207, %v1191
      %v1222 = vsel %vm571, %v1209, %v1193
      %v1223 = vsel %vm571, %v1211, %v1195
      %v1224 = vpack.c.bf16 %v1221, %v1220
      %v1225 = vpack.c.bf16 %v1217, %v1216
      %v1226 = vpack.c.bf16 %v1213, %v1212
      %v1227 = vpack.c.bf16 %v1223, %v1222
      %v1228 = vpack.c.bf16 %v1219, %v1218
      %v1229 = vpack.c.bf16 %v1215, %v1214
      %1230 = vrot.lane.b32.xlu0 %v1176, 18
      %v1231 = vpop.permute.xlu0 %1230
      %1232 = vrot.lane.b32.xlu0 %v1179, 18
      %v1233 = vpop.permute.xlu0 %1232
      %1234 = vrot.lane.b32.xlu0 %v1182, 18
      %v1235 = vpop.permute.xlu0 %1234
      %1236 = vrot.lane.b32.xlu0 %v1185, 18
      %v1237 = vpop.permute.xlu0 %1236
      %1238 = vrot.lane.b32.xlu0 %v1177, 18
      %v1239 = vpop.permute.xlu0 %1238
      %1240 = vrot.lane.b32.xlu0 %v1180, 18
      %v1241 = vpop.permute.xlu0 %1240
      %1242 = vrot.lane.b32.xlu0 %v1183, 18
      %v1243 = vpop.permute.xlu0 %1242
      %1244 = vrot.lane.b32.xlu0 %v1186, 18
      %v1245 = vpop.permute.xlu0 %1244
      %1246 = vrot.lane.b32.xlu0 %v1178, 18
      %v1247 = vpop.permute.xlu0 %1246
      %1248 = vrot.lane.b32.xlu0 %v1181, 18
      %v1249 = vpop.permute.xlu0 %1248
      %1250 = vrot.lane.b32.xlu0 %v1184, 18
      %v1251 = vpop.permute.xlu0 %1250
      %1252 = vrot.lane.b32.xlu0 %v1187, 18
      %v1253 = vpop.permute.xlu0 %1252
      %v1254 = vsel %vm593, %v1239, %v1247
      %v1255 = vsel %vm593, %v1241, %v1249
      %v1256 = vsel %vm593, %v1243, %v1251
      %v1257 = vsel %vm593, %v1245, %v1253
      %v1258 = vsel %vm593, %v1231, %v1239
      %v1259 = vsel %vm593, %v1233, %v1241
      %v1260 = vsel %vm593, %v1235, %v1243
      %v1261 = vsel %vm593, %v1237, %v1245
      %v1262 = vsel %vm593, %v1247, %v1231
      %v1263 = vsel %vm593, %v1249, %v1233
      %v1264 = vsel %vm593, %v1251, %v1235
      %v1265 = vsel %vm593, %v1253, %v1237
      %v1266 = vpack.c.bf16 %v1263, %v1262
      %v1267 = vpack.c.bf16 %v1259, %v1258
      %v1268 = vpack.c.bf16 %v1255, %v1254
      %v1269 = vpack.c.bf16 %v1265, %v1264
      %v1270 = vpack.c.bf16 %v1261, %v1260
      %v1271 = vpack.c.bf16 %v1257, %v1256
      %1272 = vrot.lane.b32.xlu0 %v1176, 17
      %v1273 = vpop.permute.xlu0 %1272
      %1274 = vrot.lane.b32.xlu0 %v1179, 17
      %v1275 = vpop.permute.xlu0 %1274
      %1276 = vrot.lane.b32.xlu0 %v1182, 17
      %v1277 = vpop.permute.xlu0 %1276
      %1278 = vrot.lane.b32.xlu0 %v1185, 17
      %v1279 = vpop.permute.xlu0 %1278
      %1280 = vrot.lane.b32.xlu0 %v1177, 17
      %v1281 = vpop.permute.xlu0 %1280
      %1282 = vrot.lane.b32.xlu0 %v1180, 17
      %v1283 = vpop.permute.xlu0 %1282
      %1284 = vrot.lane.b32.xlu0 %v1183, 17
      %v1285 = vpop.permute.xlu0 %1284
      %1286 = vrot.lane.b32.xlu0 %v1186, 17
      %v1287 = vpop.permute.xlu0 %1286
      %1288 = vrot.lane.b32.xlu0 %v1178, 17
      %v1289 = vpop.permute.xlu0 %1288
      %1290 = vrot.lane.b32.xlu0 %v1181, 17
      %v1291 = vpop.permute.xlu0 %1290
      %1292 = vrot.lane.b32.xlu0 %v1184, 17
      %v1293 = vpop.permute.xlu0 %1292
      %1294 = vrot.lane.b32.xlu0 %v1187, 17
      %v1295 = vpop.permute.xlu0 %1294
      %v1296 = vsel %vm615, %v1281, %v1289
      %v1297 = vsel %vm615, %v1283, %v1291
      %v1298 = vsel %vm615, %v1285, %v1293
      %v1299 = vsel %vm615, %v1287, %v1295
      %v1300 = vsel %vm615, %v1273, %v1281
      %v1301 = vsel %vm615, %v1275, %v1283
      %v1302 = vsel %vm615, %v1277, %v1285
      %v1303 = vsel %vm615, %v1279, %v1287
      %v1304 = vsel %vm615, %v1289, %v1273
      %v1305 = vsel %vm615, %v1291, %v1275
      %v1306 = vsel %vm615, %v1293, %v1277
      %v1307 = vsel %vm615, %v1295, %v1279
      %v1308 = vpack.c.bf16 %v1305, %v1304
      %v1309 = vpack.c.bf16 %v1301, %v1300
      %v1310 = vpack.c.bf16 %v1297, %v1296
      %v1311 = vpack.c.bf16 %v1307, %v1306
      %v1312 = vpack.c.bf16 %v1303, %v1302
      %v1313 = vpack.c.bf16 %v1299, %v1298
      %1314 = vrot.lane.b32.xlu0 %v1176, 1
      %v1315 = vpop.permute.xlu0 %1314
      %1316 = vrot.lane.b32.xlu0 %v1179, 1
      %v1317 = vpop.permute.xlu0 %1316
      %1318 = vrot.lane.b32.xlu0 %v1182, 1
      %v1319 = vpop.permute.xlu0 %1318
      %1320 = vrot.lane.b32.xlu0 %v1185, 1
      %v1321 = vpop.permute.xlu0 %1320
      %1322 = vrot.lane.b32.xlu0 %v1177, 1
      %v1323 = vpop.permute.xlu0 %1322
      %1324 = vrot.lane.b32.xlu0 %v1180, 1
      %v1325 = vpop.permute.xlu0 %1324
      %1326 = vrot.lane.b32.xlu0 %v1183, 1
      %v1327 = vpop.permute.xlu0 %1326
      %1328 = vrot.lane.b32.xlu0 %v1186, 1
      %v1329 = vpop.permute.xlu0 %1328
      %1330 = vrot.lane.b32.xlu0 %v1178, 1
      %v1331 = vpop.permute.xlu0 %1330
      %1332 = vrot.lane.b32.xlu0 %v1181, 1
      %v1333 = vpop.permute.xlu0 %1332
      %1334 = vrot.lane.b32.xlu0 %v1184, 1
      %v1335 = vpop.permute.xlu0 %1334
      %1336 = vrot.lane.b32.xlu0 %v1187, 1
      %v1337 = vpop.permute.xlu0 %1336
      %v1338 = vsel %vm637, %v1323, %v1331
      %v1339 = vsel %vm637, %v1325, %v1333
      %v1340 = vsel %vm637, %v1327, %v1335
      %v1341 = vsel %vm637, %v1329, %v1337
      %v1342 = vsel %vm637, %v1315, %v1323
      %v1343 = vsel %vm637, %v1317, %v1325
      %v1344 = vsel %vm637, %v1319, %v1327
      %v1345 = vsel %vm637, %v1321, %v1329
      %v1346 = vsel %vm637, %v1331, %v1315
      %v1347 = vsel %vm637, %v1333, %v1317
      %v1348 = vsel %vm637, %v1335, %v1319
      %v1349 = vsel %vm637, %v1337, %v1321
      %v1350 = vpack.c.bf16 %v1347, %v1346
      %v1351 = vpack.c.bf16 %v1343, %v1342
      %v1352 = vpack.c.bf16 %v1339, %v1338
      %v1353 = vpack.c.bf16 %v1349, %v1348
      %v1354 = vpack.c.bf16 %v1345, %v1344
      %v1355 = vpack.c.bf16 %v1341, %v1340
      %v1356 = vpack.c.bf16 %v1179, %v1176
      %v1357 = vpack.c.bf16 %v1180, %v1177
      %v1358 = vpack.c.bf16 %v1181, %v1178
      %v1359 = vpack.c.bf16 %v1185, %v1182
      %v1360 = vpack.c.bf16 %v1186, %v1183
      %v1361 = vpack.c.bf16 %v1187, %v1184
      %1362 = vrot.lane.b32.xlu0 %v1176, 127
      %v1363 = vpop.permute.xlu0 %1362
      %1364 = vrot.lane.b32.xlu0 %v1179, 127
      %v1365 = vpop.permute.xlu0 %1364
      %1366 = vrot.lane.b32.xlu0 %v1182, 127
      %v1367 = vpop.permute.xlu0 %1366
      %1368 = vrot.lane.b32.xlu0 %v1185, 127
      %v1369 = vpop.permute.xlu0 %1368
      %1370 = vrot.lane.b32.xlu0 %v1177, 127
      %v1371 = vpop.permute.xlu0 %1370
      %1372 = vrot.lane.b32.xlu0 %v1180, 127
      %v1373 = vpop.permute.xlu0 %1372
      %1374 = vrot.lane.b32.xlu0 %v1183, 127
      %v1375 = vpop.permute.xlu0 %1374
      %1376 = vrot.lane.b32.xlu0 %v1186, 127
      %v1377 = vpop.permute.xlu0 %1376
      %1378 = vrot.lane.b32.xlu0 %v1178, 127
      %v1379 = vpop.permute.xlu0 %1378
      %1380 = vrot.lane.b32.xlu0 %v1181, 127
      %v1381 = vpop.permute.xlu0 %1380
      %1382 = vrot.lane.b32.xlu0 %v1184, 127
      %v1383 = vpop.permute.xlu0 %1382
      %1384 = vrot.lane.b32.xlu0 %v1187, 127
      %v1385 = vpop.permute.xlu0 %1384
      %v1386 = vsel %vm662, %v1371, %v1379
      %v1387 = vsel %vm662, %v1373, %v1381
      %v1388 = vsel %vm662, %v1375, %v1383
      %v1389 = vsel %vm662, %v1377, %v1385
      %v1390 = vsel %vm662, %v1363, %v1371
      %v1391 = vsel %vm662, %v1365, %v1373
      %v1392 = vsel %vm662, %v1367, %v1375
      %v1393 = vsel %vm662, %v1369, %v1377
      %v1394 = vsel %vm662, %v1379, %v1363
      %v1395 = vsel %vm662, %v1381, %v1365
      %v1396 = vsel %vm662, %v1383, %v1367
      %v1397 = vsel %vm662, %v1385, %v1369
      %v1398 = vpack.c.bf16 %v1391, %v1390
      %v1399 = vpack.c.bf16 %v1387, %v1386
      %v1400 = vpack.c.bf16 %v1395, %v1394
      %v1401 = vpack.c.bf16 %v1393, %v1392
      %v1402 = vpack.c.bf16 %v1389, %v1388
      %v1403 = vpack.c.bf16 %v1397, %v1396
      %1404 = vrot.lane.b32.xlu0 %v1176, 111
      %v1405 = vpop.permute.xlu0 %1404
      %1406 = vrot.lane.b32.xlu0 %v1179, 111
      %v1407 = vpop.permute.xlu0 %1406
      %1408 = vrot.lane.b32.xlu0 %v1182, 111
      %v1409 = vpop.permute.xlu0 %1408
      %1410 = vrot.lane.b32.xlu0 %v1185, 111
      %v1411 = vpop.permute.xlu0 %1410
      %1412 = vrot.lane.b32.xlu0 %v1177, 111
      %v1413 = vpop.permute.xlu0 %1412
      %1414 = vrot.lane.b32.xlu0 %v1180, 111
      %v1415 = vpop.permute.xlu0 %1414
      %1416 = vrot.lane.b32.xlu0 %v1183, 111
      %v1417 = vpop.permute.xlu0 %1416
      %1418 = vrot.lane.b32.xlu0 %v1186, 111
      %v1419 = vpop.permute.xlu0 %1418
      %1420 = vrot.lane.b32.xlu0 %v1178, 111
      %v1421 = vpop.permute.xlu0 %1420
      %1422 = vrot.lane.b32.xlu0 %v1181, 111
      %v1423 = vpop.permute.xlu0 %1422
      %1424 = vrot.lane.b32.xlu0 %v1184, 111
      %v1425 = vpop.permute.xlu0 %1424
      %1426 = vrot.lane.b32.xlu0 %v1187, 111
      %v1427 = vpop.permute.xlu0 %1426
      %v1428 = vsel %vm684, %v1413, %v1421
      %v1429 = vsel %vm684, %v1415, %v1423
      %v1430 = vsel %vm684, %v1417, %v1425
      %v1431 = vsel %vm684, %v1419, %v1427
      %v1432 = vsel %vm684, %v1405, %v1413
      %v1433 = vsel %vm684, %v1407, %v1415
      %v1434 = vsel %vm684, %v1409, %v1417
      %v1435 = vsel %vm684, %v1411, %v1419
      %v1436 = vsel %vm684, %v1421, %v1405
      %v1437 = vsel %vm684, %v1423, %v1407
      %v1438 = vsel %vm684, %v1425, %v1409
      %v1439 = vsel %vm684, %v1427, %v1411
      %v1440 = vpack.c.bf16 %v1433, %v1432
      %v1441 = vpack.c.bf16 %v1429, %v1428
      %v1442 = vpack.c.bf16 %v1437, %v1436
      %v1443 = vpack.c.bf16 %v1435, %v1434
      %v1444 = vpack.c.bf16 %v1431, %v1430
      %v1445 = vpack.c.bf16 %v1439, %v1438
      %1446 = vrot.lane.b32.xlu0 %v1176, 110
      %v1447 = vpop.permute.xlu0 %1446
      %1448 = vrot.lane.b32.xlu0 %v1179, 110
      %v1449 = vpop.permute.xlu0 %1448
      %1450 = vrot.lane.b32.xlu0 %v1182, 110
      %v1451 = vpop.permute.xlu0 %1450
      %1452 = vrot.lane.b32.xlu0 %v1185, 110
      %v1453 = vpop.permute.xlu0 %1452
      %1454 = vrot.lane.b32.xlu0 %v1177, 110
      %v1455 = vpop.permute.xlu0 %1454
      %1456 = vrot.lane.b32.xlu0 %v1180, 110
      %v1457 = vpop.permute.xlu0 %1456
      %1458 = vrot.lane.b32.xlu0 %v1183, 110
      %v1459 = vpop.permute.xlu0 %1458
      %1460 = vrot.lane.b32.xlu0 %v1186, 110
      %v1461 = vpop.permute.xlu0 %1460
      %1462 = vrot.lane.b32.xlu0 %v1178, 110
      %v1463 = vpop.permute.xlu0 %1462
      %1464 = vrot.lane.b32.xlu0 %v1181, 110
      %v1465 = vpop.permute.xlu0 %1464
      %1466 = vrot.lane.b32.xlu0 %v1184, 110
      %v1467 = vpop.permute.xlu0 %1466
      %1468 = vrot.lane.b32.xlu0 %v1187, 110
      %v1469 = vpop.permute.xlu0 %1468
      %v1470 = vsel %vm706, %v1455, %v1463
      %v1471 = vsel %vm706, %v1457, %v1465
      %v1472 = vsel %vm706, %v1459, %v1467
      %v1473 = vsel %vm706, %v1461, %v1469
      %v1474 = vsel %vm706, %v1447, %v1455
      %v1475 = vsel %vm706, %v1449, %v1457
      %v1476 = vsel %vm706, %v1451, %v1459
      %v1477 = vsel %vm706, %v1453, %v1461
      %v1478 = vsel %vm706, %v1463, %v1447
      %v1479 = vsel %vm706, %v1465, %v1449
      %v1480 = vsel %vm706, %v1467, %v1451
      %v1481 = vsel %vm706, %v1469, %v1453
      %v1482 = vpack.c.bf16 %v1475, %v1474
      %v1483 = vpack.c.bf16 %v1471, %v1470
      %v1484 = vpack.c.bf16 %v1479, %v1478
      %v1485 = vpack.c.bf16 %v1477, %v1476
      %v1486 = vpack.c.bf16 %v1473, %v1472
      %v1487 = vpack.c.bf16 %v1481, %v1480
      %1488 = vrot.lane.b32.xlu0 %v1176, 109
      %v1489 = vpop.permute.xlu0 %1488
      %1490 = vrot.lane.b32.xlu0 %v1179, 109
      %v1491 = vpop.permute.xlu0 %1490
      %1492 = vrot.lane.b32.xlu0 %v1182, 109
      %v1493 = vpop.permute.xlu0 %1492
      %1494 = vrot.lane.b32.xlu0 %v1185, 109
      %v1495 = vpop.permute.xlu0 %1494
      %1496 = vrot.lane.b32.xlu0 %v1177, 109
      %v1497 = vpop.permute.xlu0 %1496
      %1498 = vrot.lane.b32.xlu0 %v1180, 109
      %v1499 = vpop.permute.xlu0 %1498
      %1500 = vrot.lane.b32.xlu0 %v1183, 109
      %v1501 = vpop.permute.xlu0 %1500
      %1502 = vrot.lane.b32.xlu0 %v1186, 109
      %v1503 = vpop.permute.xlu0 %1502
      %1504 = vrot.lane.b32.xlu0 %v1178, 109
      %v1505 = vpop.permute.xlu0 %1504
      %1506 = vrot.lane.b32.xlu0 %v1181, 109
      %v1507 = vpop.permute.xlu0 %1506
      %1508 = vrot.lane.b32.xlu0 %v1184, 109
      %v1509 = vpop.permute.xlu0 %1508
      %1510 = vrot.lane.b32.xlu0 %v1187, 109
      %v1511 = vpop.permute.xlu0 %1510
      %v1512 = vsel %vm728, %v1497, %v1505
      %v1513 = vsel %vm728, %v1499, %v1507
      %v1514 = vsel %vm728, %v1501, %v1509
      %v1515 = vsel %vm728, %v1503, %v1511
      %v1516 = vsel %vm728, %v1489, %v1497
      %v1517 = vsel %vm728, %v1491, %v1499
      %v1518 = vsel %vm728, %v1493, %v1501
      %v1519 = vsel %vm728, %v1495, %v1503
      %v1520 = vsel %vm728, %v1505, %v1489
      %v1521 = vsel %vm728, %v1507, %v1491
      %v1522 = vsel %vm728, %v1509, %v1493
      %v1523 = vsel %vm728, %v1511, %v1495
      %v1524 = vpack.c.bf16 %v1517, %v1516
      %v1525 = vpack.c.bf16 %v1513, %v1512
      %v1526 = vpack.c.bf16 %v1521, %v1520
      %v1527 = vpack.c.bf16 %v1519, %v1518
      %v1528 = vpack.c.bf16 %v1515, %v1514
      %v1529 = vpack.c.bf16 %v1523, %v1522
      %v1530 = vld [vmem:[%s5] sm:$0xff]
      %v1531 = vld [vmem:[%s5 + $0x8] sm:$0xf]
      %v1532 = vld [vmem:[%s5 + $0xc] sm:$0xff]
      %v1533 = vld [vmem:[%s5 + $0x14] sm:$0xf]
      %v1534 = vld [vmem:[%s5 + $0x18] sm:$0xff]
      %v1535 = vld [vmem:[%s5 + $0x20] sm:$0xf]
      %v1536 = vld [vmem:[%s5 + $0x24] sm:$0xff]
      %v1537 = vld [vmem:[%s5 + $0x2c] sm:$0xf]
      %v1538 = vld [vmem:[%s5 + $0x30] sm:$0xff]
      %v1539 = vld [vmem:[%s5 + $0x38] sm:$0xf]
      %v1540 = vld [vmem:[%s5 + $0x3c] sm:$0xff]
      %v1541 = vld [vmem:[%s5 + $0x44] sm:$0xf]
      %v1542 = vld [vmem:[%s5 + $0x48] sm:$0xff]
      %v1543 = vld [vmem:[%s5 + $0x50] sm:$0xf]
      %v1544 = vld [vmem:[%s5 + $0x54] sm:$0xff]
      %v1545 = vld [vmem:[%s5 + $0x5c] sm:$0xf]
      %v1562 = vunpack.c.l.b16 %v1530
      %v1563 = vunpack.c.h.b16 %v1530
      %v1564 = vunpack.c.l.b16 %v1531
      %v1565 = vunpack.c.l.b16 %v1532
      %v1566 = vunpack.c.h.b16 %v1532
      %v1567 = vunpack.c.l.b16 %v1533
      %v1568 = vunpack.c.l.b16 %v1534
      %v1569 = vunpack.c.h.b16 %v1534
      %v1570 = vunpack.c.l.b16 %v1535
      %v1571 = vunpack.c.l.b16 %v1536
      %v1572 = vunpack.c.h.b16 %v1536
      %v1573 = vunpack.c.l.b16 %v1537
      %v1574 = vunpack.c.l.b16 %v1538
      %v1575 = vunpack.c.h.b16 %v1538
      %v1576 = vunpack.c.l.b16 %v1539
      %v1577 = vunpack.c.l.b16 %v1540
      %v1578 = vunpack.c.h.b16 %v1540
      %v1579 = vunpack.c.l.b16 %v1541
      %v1580 = vunpack.c.l.b16 %v1542
      %v1581 = vunpack.c.h.b16 %v1542
      %v1582 = vunpack.c.l.b16 %v1543
      %v1583 = vunpack.c.l.b16 %v1544
      %v1584 = vunpack.c.h.b16 %v1544
      %v1585 = vunpack.c.l.b16 %v1545
      %v1586 = vpack.c.b16 %v1565, %v1562
      %v1587 = vpack.c.b16 %v1566, %v1563
      %v1588 = vpack.c.b16 %v1567, %v1564
      %v1589 = vpack.c.b16 %v1571, %v1568
      %v1590 = vpack.c.b16 %v1572, %v1569
      %v1591 = vpack.c.b16 %v1573, %v1570
      %v1592 = vpack.c.b16 %v1577, %v1574
      %v1593 = vpack.c.b16 %v1578, %v1575
      %v1594 = vpack.c.b16 %v1579, %v1576
      %v1595 = vpack.c.b16 %v1583, %v1580
      %v1596 = vpack.c.b16 %v1584, %v1581
      %v1597 = vpack.c.b16 %v1585, %v1582
      %vm1606 = vcmask 261120
      %v1608 = vsel %vm1606, %v1588, 0
      %v1611 = vsel %vm1606, %v1591, 0
      %v1614 = vsel %vm1606, %v1594, 0
      %v1617 = vsel %vm1606, %v1597, 0
      %1619 = vmatprep.subr.bf16.mxu0 %v1354
      %1620 = vmatpush1.bf16.msra.mxu0 %v1353
      %1621 = vmatprep.subr.bf16.mxu0 %v1351
      %1622 = vmatpush1.bf16.msra.mxu0 %v1350
      %1623 = vmatprep.subr.bf16.mxu0 %v1312
      %1624 = vmatpush1.bf16.msra.mxu0 %v1311
      %1625 = vmatprep.subr.bf16.mxu0 %v1309
      %1626 = vmatpush1.bf16.msra.mxu0 %v1308
      %1627 = vmatprep.subr.bf16.mxu0 %v1270
      %1628 = vmatpush1.bf16.msra.mxu0 %v1269
      %1629 = vmatprep.subr.bf16.mxu0 %v1267
      %1630 = vmatpush1.bf16.msra.mxu0 %v1266
      %1631 = vmatprep.subr.bf16.mxu0 %v1228
      %1632 = vmatpush1.bf16.msra.mxu0 %v1227
      %1633 = vmatprep.subr.bf16.mxu0 %v1225
      %1634 = vmatpush1.bf16.msra.mxu0 %v1224
      %1635 = vmatprep.subr.bf16.mxu0 %v1486
      %1636 = vmatpush2.bf16.msra.mxu0 %v1485
      %1637 = vmatprep.subr.bf16.mxu0 %v1483
      %1638 = vmatpush2.bf16.msra.mxu0 %v1482
      %1639 = vmatprep.subr.bf16.mxu0 %v1444
      %1640 = vmatpush2.bf16.msra.mxu0 %v1443
      %1641 = vmatprep.subr.bf16.mxu0 %v1441
      %1642 = vmatpush2.bf16.msra.mxu0 %v1440
      %1643 = vmatprep.subr.bf16.mxu0 %v1402
      %1644 = vmatpush2.bf16.msra.mxu0 %v1401
      %1645 = vmatprep.subr.bf16.mxu0 %v1399
      %1646 = vmatpush2.bf16.msra.mxu0 %v1398
      %1647 = vmatprep.subr.bf16.mxu0 %v1360
      %1648 = vmatpush2.bf16.msra.mxu0 %v1359
      %1649 = vmatprep.subr.bf16.mxu0 %v1357
      %1650 = vmatpush2.bf16.msra.mxu0 %v1356
      %1651 = vmatprep.mubr.bf16.mxu0 %v1587
      %1652 = vmatmul.mubr.bf16.gmra.mxu0 %v1586
      %v1653 = vpop.f32.mrf.mxu0
      %v1654 = vadd.f32 0.0, %v1653
      %v1655 = vpop.f32.mrf.mxu0
      %v1656 = vadd.f32 0.0, %v1655
      %v1657 = vpop.f32.mrf.mxu0
      %v1658 = vadd.f32 0.0, %v1657
      %v1659 = vpop.f32.mrf.mxu0
      %v1660 = vadd.f32 0.0, %v1659
      %1661 = vmatprep.mubr.bf16.mxu0 %v1590
      %1662 = vmatmul.mubr.bf16.gmra.mxu0 %v1589
      %v1663 = vpop.f32.mrf.mxu0
      %v1664 = vadd.f32 0.0, %v1663
      %v1665 = vpop.f32.mrf.mxu0
      %v1666 = vadd.f32 0.0, %v1665
      %v1667 = vpop.f32.mrf.mxu0
      %v1668 = vadd.f32 0.0, %v1667
      %v1669 = vpop.f32.mrf.mxu0
      %v1670 = vadd.f32 0.0, %v1669
      %1671 = vmatprep.mubr.bf16.mxu0 %v1593
      %1672 = vmatmul.mubr.bf16.gmra.mxu0 %v1592
      %v1673 = vpop.f32.mrf.mxu0
      %v1674 = vadd.f32 0.0, %v1673
      %v1675 = vpop.f32.mrf.mxu0
      %v1676 = vadd.f32 0.0, %v1675
      %v1677 = vpop.f32.mrf.mxu0
      %v1678 = vadd.f32 0.0, %v1677
      %v1679 = vpop.f32.mrf.mxu0
      %v1680 = vadd.f32 0.0, %v1679
      %1681 = vmatprep.mubr.bf16.mxu0 %v1596
      %1682 = vmatmul.mubr.bf16.gmra.mxu0 %v1595
      %v1683 = vpop.f32.mrf.mxu0
      %v1684 = vadd.f32 0.0, %v1683
      %v1685 = vpop.f32.mrf.mxu0
      %v1686 = vadd.f32 0.0, %v1685
      %v1687 = vpop.f32.mrf.mxu0
      %v1688 = vadd.f32 0.0, %v1687
      %v1689 = vpop.f32.mrf.mxu0
      %v1690 = vadd.f32 0.0, %v1689
      %1691 = vdwg.mxu0
      %1692 = vmatprep.subr.bf16.mxu0 0
      %1693 = vmatpush1.bf16.msra.mxu0 0
      %1694 = vmatprep.subr.bf16.mxu0 0
      %1695 = vmatpush1.bf16.msra.mxu0 0
      %1696 = vmatprep.subr.bf16.mxu0 0
      %1697 = vmatpush1.bf16.msra.mxu0 0
      %1698 = vmatprep.subr.bf16.mxu0 0
      %1699 = vmatpush1.bf16.msra.mxu0 0
      %1700 = vmatprep.subr.bf16.mxu0 0
      %1701 = vmatpush1.bf16.msra.mxu0 0
      %1702 = vmatprep.subr.bf16.mxu0 0
      %1703 = vmatpush1.bf16.msra.mxu0 0
      %1704 = vmatprep.subr.bf16.mxu0 %v1528
      %1705 = vmatpush1.bf16.msra.mxu0 %v1527
      %1706 = vmatprep.subr.bf16.mxu0 %v1525
      %1707 = vmatpush1.bf16.msra.mxu0 %v1524
      %1708 = vmatprep.subr.bf16.mxu0 0
      %1709 = vmatpush2.bf16.msra.mxu0 0
      %1710 = vmatprep.subr.bf16.mxu0 0
      %1711 = vmatpush2.bf16.msra.mxu0 0
      %1712 = vmatprep.subr.bf16.mxu0 0
      %1713 = vmatpush2.bf16.msra.mxu0 0
      %1714 = vmatprep.subr.bf16.mxu0 0
      %1715 = vmatpush2.bf16.msra.mxu0 0
      %1716 = vmatprep.subr.bf16.mxu0 0
      %1717 = vmatpush2.bf16.msra.mxu0 0
      %1718 = vmatprep.subr.bf16.mxu0 0
      %1719 = vmatpush2.bf16.msra.mxu0 0
      %1720 = vmatprep.subr.bf16.mxu0 0
      %1721 = vmatpush2.bf16.msra.mxu0 0
      %1722 = vmatprep.subr.bf16.mxu0 0
      %1723 = vmatpush2.bf16.msra.mxu0 0
      %1724 = vmatprep.mubr.bf16.mxu0 0
      %1725 = vmatmul.mubr.bf16.gmra.mxu0 %v1608
      %v1726 = vpop.f32.mrf.mxu0
      %v1727 = vadd.f32 %v1654, %v1726
      %v1728 = vpop.f32.mrf.mxu0
      %v1729 = vadd.f32 %v1656, %v1728
      %v1730 = vpop.f32.mrf.mxu0
      %v1731 = vadd.f32 %v1658, %v1730
      %v1732 = vpop.f32.mrf.mxu0
      %v1733 = vadd.f32 %v1660, %v1732
      %1734 = vmatprep.mubr.bf16.mxu0 0
      %1735 = vmatmul.mubr.bf16.gmra.mxu0 %v1611
      %v1736 = vpop.f32.mrf.mxu0
      %v1737 = vadd.f32 %v1664, %v1736
      %v1738 = vpop.f32.mrf.mxu0
      %v1739 = vadd.f32 %v1666, %v1738
      %v1740 = vpop.f32.mrf.mxu0
      %v1741 = vadd.f32 %v1668, %v1740
      %v1742 = vpop.f32.mrf.mxu0
      %v1743 = vadd.f32 %v1670, %v1742
      %1744 = vmatprep.mubr.bf16.mxu0 0
      %1745 = vmatmul.mubr.bf16.gmra.mxu0 %v1614
      %v1746 = vpop.f32.mrf.mxu0
      %v1747 = vadd.f32 %v1674, %v1746
      %v1748 = vpop.f32.mrf.mxu0
      %v1749 = vadd.f32 %v1676, %v1748
      %v1750 = vpop.f32.mrf.mxu0
      %v1751 = vadd.f32 %v1678, %v1750
      %v1752 = vpop.f32.mrf.mxu0
      %v1753 = vadd.f32 %v1680, %v1752
      %1754 = vmatprep.mubr.bf16.mxu0 0
      %1755 = vmatmul.mubr.bf16.gmra.mxu0 %v1617
      %v1756 = vpop.f32.mrf.mxu0
      %v1757 = vadd.f32 %v1684, %v1756
      %v1758 = vpop.f32.mrf.mxu0
      %v1759 = vadd.f32 %v1686, %v1758
      %v1760 = vpop.f32.mrf.mxu0
      %v1761 = vadd.f32 %v1688, %v1760
      %v1762 = vpop.f32.mrf.mxu0
      %v1763 = vadd.f32 %v1690, %v1762
      %1764 = vdwg.mxu0
      %1765 = vmatprep.subr.bf16.mxu0 0
      %1766 = vmatpush1.bf16.msra.mxu0 %v1355
      %1767 = vmatprep.subr.bf16.mxu0 0
      %1768 = vmatpush1.bf16.msra.mxu0 %v1352
      %1769 = vmatprep.subr.bf16.mxu0 0
      %1770 = vmatpush1.bf16.msra.mxu0 %v1313
      %1771 = vmatprep.subr.bf16.mxu0 0
      %1772 = vmatpush1.bf16.msra.mxu0 %v1310
      %1773 = vmatprep.subr.bf16.mxu0 0
      %1774 = vmatpush1.bf16.msra.mxu0 %v1271
      %1775 = vmatprep.subr.bf16.mxu0 0
      %1776 = vmatpush1.bf16.msra.mxu0 %v1268
      %1777 = vmatprep.subr.bf16.mxu0 0
      %1778 = vmatpush1.bf16.msra.mxu0 %v1229
      %1779 = vmatprep.subr.bf16.mxu0 0
      %1780 = vmatpush1.bf16.msra.mxu0 %v1226
      %1781 = vmatprep.subr.bf16.mxu0 0
      %1782 = vmatpush2.bf16.msra.mxu0 %v1487
      %1783 = vmatprep.subr.bf16.mxu0 0
      %1784 = vmatpush2.bf16.msra.mxu0 %v1484
      %1785 = vmatprep.subr.bf16.mxu0 0
      %1786 = vmatpush2.bf16.msra.mxu0 %v1445
      %1787 = vmatprep.subr.bf16.mxu0 0
      %1788 = vmatpush2.bf16.msra.mxu0 %v1442
      %1789 = vmatprep.subr.bf16.mxu0 0
      %1790 = vmatpush2.bf16.msra.mxu0 %v1403
      %1791 = vmatprep.subr.bf16.mxu0 0
      %1792 = vmatpush2.bf16.msra.mxu0 %v1400
      %1793 = vmatprep.subr.bf16.mxu0 0
      %1794 = vmatpush2.bf16.msra.mxu0 %v1361
      %1795 = vmatprep.subr.bf16.mxu0 0
      %1796 = vmatpush2.bf16.msra.mxu0 %v1358
      %1797 = vmatprep.mubr.bf16.mxu0 %v1587
      %1798 = vmatmul.mubr.bf16.gmra.mxu0 %v1586
      %v1799 = vpop.f32.mrf.mxu0
      %v1800 = vadd.f32 0.0, %v1799
      %v1801 = vpop.f32.mrf.mxu0
      %v1802 = vpop.f32.mrf.mxu0
      %v1803 = vadd.f32 0.0, %v1802
      %v1804 = vpop.f32.mrf.mxu0
      %1805 = vmatprep.mubr.bf16.mxu0 %v1590
      %1806 = vmatmul.mubr.bf16.gmra.mxu0 %v1589
      %v1807 = vpop.f32.mrf.mxu0
      %v1808 = vadd.f32 0.0, %v1807
      %v1809 = vpop.f32.mrf.mxu0
      %v1810 = vpop.f32.mrf.mxu0
      %v1811 = vadd.f32 0.0, %v1810
      %v1812 = vpop.f32.mrf.mxu0
      %1813 = vmatprep.mubr.bf16.mxu0 %v1593
      %1814 = vmatmul.mubr.bf16.gmra.mxu0 %v1592
      %v1815 = vpop.f32.mrf.mxu0
      %v1816 = vadd.f32 0.0, %v1815
      %v1817 = vpop.f32.mrf.mxu0
      %v1818 = vpop.f32.mrf.mxu0
      %v1819 = vadd.f32 0.0, %v1818
      %v1820 = vpop.f32.mrf.mxu0
      %1821 = vmatprep.mubr.bf16.mxu0 %v1596
      %1822 = vmatmul.mubr.bf16.gmra.mxu0 %v1595
      %v1823 = vpop.f32.mrf.mxu0
      %v1824 = vadd.f32 0.0, %v1823
      %v1825 = vpop.f32.mrf.mxu0
      %v1826 = vpop.f32.mrf.mxu0
      %v1827 = vadd.f32 0.0, %v1826
      %v1828 = vpop.f32.mrf.mxu0
      %1829 = vdwg.mxu0
      %1830 = vmatprep.subr.bf16.mxu0 0
      %1831 = vmatpush1.bf16.msra.mxu0 0
      %1832 = vmatprep.subr.bf16.mxu0 0
      %1833 = vmatpush1.bf16.msra.mxu0 0
      %1834 = vmatprep.subr.bf16.mxu0 0
      %1835 = vmatpush1.bf16.msra.mxu0 0
      %1836 = vmatprep.subr.bf16.mxu0 0
      %1837 = vmatpush1.bf16.msra.mxu0 0
      %1838 = vmatprep.subr.bf16.mxu0 0
      %1839 = vmatpush1.bf16.msra.mxu0 0
      %1840 = vmatprep.subr.bf16.mxu0 0
      %1841 = vmatpush1.bf16.msra.mxu0 0
      %1842 = vmatprep.subr.bf16.mxu0 0
      %1843 = vmatpush1.bf16.msra.mxu0 %v1529
      %1844 = vmatprep.subr.bf16.mxu0 0
      %1845 = vmatpush1.bf16.msra.mxu0 %v1526
      %1846 = vmatprep.subr.bf16.mxu0 0
      %1847 = vmatpush2.bf16.msra.mxu0 0
      %1848 = vmatprep.subr.bf16.mxu0 0
      %1849 = vmatpush2.bf16.msra.mxu0 0
      %1850 = vmatprep.subr.bf16.mxu0 0
      %1851 = vmatpush2.bf16.msra.mxu0 0
      %1852 = vmatprep.subr.bf16.mxu0 0
      %1853 = vmatpush2.bf16.msra.mxu0 0
      %1854 = vmatprep.subr.bf16.mxu0 0
      %1855 = vmatpush2.bf16.msra.mxu0 0
      %1856 = vmatprep.subr.bf16.mxu0 0
      %1857 = vmatpush2.bf16.msra.mxu0 0
      %1858 = vmatprep.subr.bf16.mxu0 0
      %1859 = vmatpush2.bf16.msra.mxu0 0
      %1860 = vmatprep.subr.bf16.mxu0 0
      %1861 = vmatpush2.bf16.msra.mxu0 0
      %1862 = vmatprep.mubr.bf16.mxu0 0
      %1863 = vmatmul.mubr.bf16.gmra.mxu0 %v1608
      %v1864 = vpop.f32.mrf.mxu0
      %v1865 = vadd.f32 %v1800, %v1864
      %v1866 = vpop.f32.mrf.mxu0
      %v1867 = vpop.f32.mrf.mxu0
      %v1868 = vadd.f32 %v1803, %v1867
      %v1869 = vpop.f32.mrf.mxu0
      %1870 = vmatprep.mubr.bf16.mxu0 0
      %1871 = vmatmul.mubr.bf16.gmra.mxu0 %v1611
      %v1872 = vpop.f32.mrf.mxu0
      %v1873 = vadd.f32 %v1808, %v1872
      %v1874 = vpop.f32.mrf.mxu0
      %v1875 = vpop.f32.mrf.mxu0
      %v1876 = vadd.f32 %v1811, %v1875
      %v1877 = vpop.f32.mrf.mxu0
      %1878 = vmatprep.mubr.bf16.mxu0 0
      %1879 = vmatmul.mubr.bf16.gmra.mxu0 %v1614
      %v1880 = vpop.f32.mrf.mxu0
      %v1881 = vadd.f32 %v1816, %v1880
      %v1882 = vpop.f32.mrf.mxu0
      %v1883 = vpop.f32.mrf.mxu0
      %v1884 = vadd.f32 %v1819, %v1883
      %v1885 = vpop.f32.mrf.mxu0
      %1886 = vmatprep.mubr.bf16.mxu0 0
      %1887 = vmatmul.mubr.bf16.gmra.mxu0 %v1617
      %v1888 = vpop.f32.mrf.mxu0
      %v1889 = vadd.f32 %v1824, %v1888
      %v1890 = vpop.f32.mrf.mxu0
      %v1891 = vpop.f32.mrf.mxu0
      %v1892 = vadd.f32 %v1827, %v1891
      %v1893 = vpop.f32.mrf.mxu0
      %1894 = vdwg.mxu0
      %v1895 = vld [vmem:[%s6] sm:$0xff]
      %v1896 = vld [vmem:[%s6 + $0x8] sm:$0xff]
      %v1897 = vld [vmem:[%s6 + $0x10] sm:$0xff]
      %v1898 = vld [vmem:[%s6 + $0x18] sm:$0xff]
      %v1899 = vld [vmem:[%s6 + $0x20] sm:$0xff]
      %v1900 = vld [vmem:[%s6 + $0x28] sm:$0xff]
      %v1901 = vld [vmem:[%s6 + $0x30] sm:$0xff]
      %v1902 = vld [vmem:[%s6 + $0x38] sm:$0xff]
      %v1903 = vld [vmem:[%s7] sm:$0xff]
      %v1904 = vld [vmem:[%s7 + $0x8] sm:$0xff]
      %v1905 = vld [vmem:[%s7 + $0x10] sm:$0xff]
      %v1906 = vld [vmem:[%s7 + $0x18] sm:$0xff]
      %v1907 = vld [vmem:[%s7 + $0x20] sm:$0xff]
      %v1908 = vld [vmem:[%s7 + $0x28] sm:$0xff]
      %v1909 = vld [vmem:[%s7 + $0x30] sm:$0xff]
      %v1910 = vld [vmem:[%s7 + $0x38] sm:$0xff]
      %v1911 = vadd.f32 %v1727, %v1731
      %v1912 = vadd.f32 %v1911, %v1737
      %v1913 = vadd.f32 %v1912, %v1741
      %v1914 = vadd.f32 %v1913, %v1747
      %v1915 = vadd.f32 %v1914, %v1751
      %v1916 = vadd.f32 %v1915, %v1757
      %v1917 = vadd.f32 %v1916, %v1761
      %v1918 = vrot.slane %v1917, 4
      %v1919 = vadd.f32 %v1917, %v1918
      %v1920 = vrot.slane %v1919, 2
      %v1921 = vadd.f32 %v1919, %v1920
      %v1922 = vrot.slane %v1921, 1
      %v1923 = vadd.f32 %v1921, %v1922
      %v1924 = vadd.f32 %v1729, %v1733
      %v1925 = vadd.f32 %v1924, %v1739
      %v1926 = vadd.f32 %v1925, %v1743
      %v1927 = vadd.f32 %v1926, %v1749
      %v1928 = vadd.f32 %v1927, %v1753
      %v1929 = vadd.f32 %v1928, %v1759
      %v1930 = vadd.f32 %v1929, %v1763
      %v1931 = vrot.slane %v1930, 4
      %v1932 = vadd.f32 %v1930, %v1931
      %v1933 = vrot.slane %v1932, 2
      %v1934 = vadd.f32 %v1932, %v1933
      %v1935 = vrot.slane %v1934, 1
      %v1936 = vadd.f32 %v1934, %v1935
      %v1937 = vadd.f32 %v1865, %v1868
      %v1938 = vadd.f32 %v1937, %v1873
      %v1939 = vadd.f32 %v1938, %v1876
      %v1940 = vadd.f32 %v1939, %v1881
      %v1941 = vadd.f32 %v1940, %v1884
      %v1942 = vadd.f32 %v1941, %v1889
      %v1943 = vadd.f32 %v1942, %v1892
      %v1944 = vrot.slane %v1943, 4
      %v1945 = vadd.f32 %v1943, %v1944
      %v1946 = vrot.slane %v1945, 2
      %v1947 = vadd.f32 %v1945, %v1946
      %v1948 = vrot.slane %v1947, 1
      %v1949 = vadd.f32 %v1947, %v1948
      %v1950 = vmul.f32 %v1923, 0.015625
      %v1951 = vmul.f32 %v1936, 0.015625
      %v1952 = vmul.f32 %v1949, 0.015625
      %v1953 = vmul.f32 %v1727, %v1727
      %v1954 = vmul.f32 %v1729, %v1729
      %v1955 = vmul.f32 %v1865, %v1865
      %v1956 = vmul.f32 %v1731, %v1731
      %v1957 = vmul.f32 %v1733, %v1733
      %v1958 = vmul.f32 %v1868, %v1868
      %v1959 = vmul.f32 %v1737, %v1737
      %v1960 = vmul.f32 %v1739, %v1739
      %v1961 = vmul.f32 %v1873, %v1873
      %v1962 = vmul.f32 %v1741, %v1741
      %v1963 = vmul.f32 %v1743, %v1743
      %v1964 = vmul.f32 %v1876, %v1876
      %v1965 = vmul.f32 %v1747, %v1747
      %v1966 = vmul.f32 %v1749, %v1749
      %v1967 = vmul.f32 %v1881, %v1881
      %v1968 = vmul.f32 %v1751, %v1751
      %v1969 = vmul.f32 %v1753, %v1753
      %v1970 = vmul.f32 %v1884, %v1884
      %v1971 = vmul.f32 %v1757, %v1757
      %v1972 = vmul.f32 %v1759, %v1759
      %v1973 = vmul.f32 %v1889, %v1889
      %v1974 = vmul.f32 %v1761, %v1761
      %v1975 = vmul.f32 %v1763, %v1763
      %v1976 = vmul.f32 %v1892, %v1892
      %v1977 = vadd.f32 %v1953, %v1956
      %v1978 = vadd.f32 %v1977, %v1959
      %v1979 = vadd.f32 %v1978, %v1962
      %v1980 = vadd.f32 %v1979, %v1965
      %v1981 = vadd.f32 %v1980, %v1968
      %v1982 = vadd.f32 %v1981, %v1971
      %v1983 = vadd.f32 %v1982, %v1974
      %v1984 = vrot.slane %v1983, 4
      %v1985 = vadd.f32 %v1983, %v1984
      %v1986 = vrot.slane %v1985, 2
      %v1987 = vadd.f32 %v1985, %v1986
      %v1988 = vrot.slane %v1987, 1
      %v1989 = vadd.f32 %v1987, %v1988
      %v1990 = vadd.f32 %v1954, %v1957
      %v1991 = vadd.f32 %v1990, %v1960
      %v1992 = vadd.f32 %v1991, %v1963
      %v1993 = vadd.f32 %v1992, %v1966
      %v1994 = vadd.f32 %v1993, %v1969
      %v1995 = vadd.f32 %v1994, %v1972
      %v1996 = vadd.f32 %v1995, %v1975
      %v1997 = vrot.slane %v1996, 4
      %v1998 = vadd.f32 %v1996, %v1997
      %v1999 = vrot.slane %v1998, 2
      %v2000 = vadd.f32 %v1998, %v1999
      %v2001 = vrot.slane %v2000, 1
      %v2002 = vadd.f32 %v2000, %v2001
      %v2003 = vadd.f32 %v1955, %v1958
      %v2004 = vadd.f32 %v2003, %v1961
      %v2005 = vadd.f32 %v2004, %v1964
      %v2006 = vadd.f32 %v2005, %v1967
      %v2007 = vadd.f32 %v2006, %v1970
      %v2008 = vadd.f32 %v2007, %v1973
      %v2009 = vadd.f32 %v2008, %v1976
      %v2010 = vrot.slane %v2009, 4
      %v2011 = vadd.f32 %v2009, %v2010
      %v2012 = vrot.slane %v2011, 2
      %v2013 = vadd.f32 %v2011, %v2012
      %v2014 = vrot.slane %v2013, 1
      %v2015 = vadd.f32 %v2013, %v2014
      %v2016 = vmul.f32 %v1989, 0.015625
      %v2017 = vmul.f32 %v2002, 0.015625
      %v2018 = vmul.f32 %v2015, 0.015625
      %v2019 = vmul.f32 %v1950, %v1950
      %v2020 = vmul.f32 %v1951, %v1951
      %v2021 = vmul.f32 %v1952, %v1952
      %v2022 = vsub.f32 %v2016, %v2019
      %v2023 = vsub.f32 %v2017, %v2020
      %v2024 = vsub.f32 %v2018, %v2021
      %v2025 = vmax.f32 %v2022, 0.0
      %v2026 = vmax.f32 %v2023, 0.0
      %v2027 = vmax.f32 %v2024, 0.0
      %v2028 = vsub.f32 %v1727, %v1950
      %v2029 = vsub.f32 %v1729, %v1951
      %v2030 = vsub.f32 %v1865, %v1952
      %v2031 = vsub.f32 %v1731, %v1950
      %v2032 = vsub.f32 %v1733, %v1951
      %v2033 = vsub.f32 %v1868, %v1952
      %v2034 = vsub.f32 %v1737, %v1950
      %v2035 = vsub.f32 %v1739, %v1951
      %v2036 = vsub.f32 %v1873, %v1952
      %v2037 = vsub.f32 %v1741, %v1950
      %v2038 = vsub.f32 %v1743, %v1951
      %v2039 = vsub.f32 %v1876, %v1952
      %v2040 = vsub.f32 %v1747, %v1950
      %v2041 = vsub.f32 %v1749, %v1951
      %v2042 = vsub.f32 %v1881, %v1952
      %v2043 = vsub.f32 %v1751, %v1950
      %v2044 = vsub.f32 %v1753, %v1951
      %v2045 = vsub.f32 %v1884, %v1952
      %v2046 = vsub.f32 %v1757, %v1950
      %v2047 = vsub.f32 %v1759, %v1951
      %v2048 = vsub.f32 %v1889, %v1952
      %v2049 = vsub.f32 %v1761, %v1950
      %v2050 = vsub.f32 %v1763, %v1951
      %v2051 = vsub.f32 %v1892, %v1952
      %v2052 = vadd.f32 %v2025, 1e-06
      %v2053 = vadd.f32 %v2026, 1e-06
      %v2054 = vadd.f32 %v2027, 1e-06
      %v2055 = vrsqrt.pop %v2052
      %v2056 = vrsqrt.pop %v2053
      %v2057 = vrsqrt.pop %v2054
      %v2058 = vmul.f32 %v2028, %v2055
      %v2059 = vmul.f32 %v2029, %v2056
      %v2060 = vmul.f32 %v2030, %v2057
      %v2061 = vmul.f32 %v2031, %v2055
      %v2062 = vmul.f32 %v2032, %v2056
      %v2063 = vmul.f32 %v2033, %v2057
      %v2064 = vmul.f32 %v2034, %v2055
      %v2065 = vmul.f32 %v2035, %v2056
      %v2066 = vmul.f32 %v2036, %v2057
      %v2067 = vmul.f32 %v2037, %v2055
      %v2068 = vmul.f32 %v2038, %v2056
      %v2069 = vmul.f32 %v2039, %v2057
      %v2070 = vmul.f32 %v2040, %v2055
      %v2071 = vmul.f32 %v2041, %v2056
      %v2072 = vmul.f32 %v2042, %v2057
      %v2073 = vmul.f32 %v2043, %v2055
      %v2074 = vmul.f32 %v2044, %v2056
      %v2075 = vmul.f32 %v2045, %v2057
      %v2076 = vmul.f32 %v2046, %v2055
      %v2077 = vmul.f32 %v2047, %v2056
      %v2078 = vmul.f32 %v2048, %v2057
      %v2079 = vmul.f32 %v2049, %v2055
      %v2080 = vmul.f32 %v2050, %v2056
      %v2081 = vmul.f32 %v2051, %v2057
      %2083 = vset.pattern.permute.xlu0 0
      %2084 = vperm.xlu0 %2083, %v1895
      %v2085 = vpop.permute.xlu0 %2084
      %2088 = vset.pattern.permute.xlu0 0
      %2089 = vperm.xlu0 %2088, %v1896
      %v2090 = vpop.permute.xlu0 %2089
      %2093 = vset.pattern.permute.xlu0 0
      %2094 = vperm.xlu0 %2093, %v1897
      %v2095 = vpop.permute.xlu0 %2094
      %2098 = vset.pattern.permute.xlu0 0
      %2099 = vperm.xlu0 %2098, %v1898
      %v2100 = vpop.permute.xlu0 %2099
      %2103 = vset.pattern.permute.xlu0 0
      %2104 = vperm.xlu0 %2103, %v1899
      %v2105 = vpop.permute.xlu0 %2104
      %2108 = vset.pattern.permute.xlu0 0
      %2109 = vperm.xlu0 %2108, %v1900
      %v2110 = vpop.permute.xlu0 %2109
      %2113 = vset.pattern.permute.xlu0 0
      %2114 = vperm.xlu0 %2113, %v1901
      %v2115 = vpop.permute.xlu0 %2114
      %2118 = vset.pattern.permute.xlu0 0
      %2119 = vperm.xlu0 %2118, %v1902
      %v2120 = vpop.permute.xlu0 %2119
      %v2122 = vmul.f32 %v2085, %v2058
      %v2123 = vmul.f32 %v2085, %v2059
      %v2124 = vmul.f32 %v2085, %v2060
      %v2125 = vmul.f32 %v2090, %v2061
      %v2126 = vmul.f32 %v2090, %v2062
      %v2127 = vmul.f32 %v2090, %v2063
      %v2128 = vmul.f32 %v2095, %v2064
      %v2129 = vmul.f32 %v2095, %v2065
      %v2130 = vmul.f32 %v2095, %v2066
      %v2131 = vmul.f32 %v2100, %v2067
      %v2132 = vmul.f32 %v2100, %v2068
      %v2133 = vmul.f32 %v2100, %v2069
      %v2134 = vmul.f32 %v2105, %v2070
      %v2135 = vmul.f32 %v2105, %v2071
      %v2136 = vmul.f32 %v2105, %v2072
      %v2137 = vmul.f32 %v2110, %v2073
      %v2138 = vmul.f32 %v2110, %v2074
      %v2139 = vmul.f32 %v2110, %v2075
      %v2140 = vmul.f32 %v2115, %v2076
      %v2141 = vmul.f32 %v2115, %v2077
      %v2142 = vmul.f32 %v2115, %v2078
      %v2143 = vmul.f32 %v2120, %v2079
      %v2144 = vmul.f32 %v2120, %v2080
      %v2145 = vmul.f32 %v2120, %v2081
      %2147 = vset.pattern.permute.xlu0 0
      %2148 = vperm.xlu0 %2147, %v1903
      %v2149 = vpop.permute.xlu0 %2148
      %2152 = vset.pattern.permute.xlu0 0
      %2153 = vperm.xlu0 %2152, %v1904
      %v2154 = vpop.permute.xlu0 %2153
      %2157 = vset.pattern.permute.xlu0 0
      %2158 = vperm.xlu0 %2157, %v1905
      %v2159 = vpop.permute.xlu0 %2158
      %2162 = vset.pattern.permute.xlu0 0
      %2163 = vperm.xlu0 %2162, %v1906
      %v2164 = vpop.permute.xlu0 %2163
      %2167 = vset.pattern.permute.xlu0 0
      %2168 = vperm.xlu0 %2167, %v1907
      %v2169 = vpop.permute.xlu0 %2168
      %2172 = vset.pattern.permute.xlu0 0
      %2173 = vperm.xlu0 %2172, %v1908
      %v2174 = vpop.permute.xlu0 %2173
      %2177 = vset.pattern.permute.xlu0 0
      %2178 = vperm.xlu0 %2177, %v1909
      %v2179 = vpop.permute.xlu0 %2178
      %2182 = vset.pattern.permute.xlu0 0
      %2183 = vperm.xlu0 %2182, %v1910
      %v2184 = vpop.permute.xlu0 %2183
      %v2186 = vadd.f32 %v2122, %v2149
      %v2187 = vadd.f32 %v2123, %v2149
      %v2188 = vadd.f32 %v2124, %v2149
      %v2189 = vadd.f32 %v2125, %v2154
      %v2190 = vadd.f32 %v2126, %v2154
      %v2191 = vadd.f32 %v2127, %v2154
      %v2192 = vadd.f32 %v2128, %v2159
      %v2193 = vadd.f32 %v2129, %v2159
      %v2194 = vadd.f32 %v2130, %v2159
      %v2195 = vadd.f32 %v2131, %v2164
      %v2196 = vadd.f32 %v2132, %v2164
      %v2197 = vadd.f32 %v2133, %v2164
      %v2198 = vadd.f32 %v2134, %v2169
      %v2199 = vadd.f32 %v2135, %v2169
      %v2200 = vadd.f32 %v2136, %v2169
      %v2201 = vadd.f32 %v2137, %v2174
      %v2202 = vadd.f32 %v2138, %v2174
      %v2203 = vadd.f32 %v2139, %v2174
      %v2204 = vadd.f32 %v2140, %v2179
      %v2205 = vadd.f32 %v2141, %v2179
      %v2206 = vadd.f32 %v2142, %v2179
      %v2207 = vadd.f32 %v2143, %v2184
      %v2208 = vadd.f32 %v2144, %v2184
      %v2209 = vadd.f32 %v2145, %v2184
      %v2210 = vmul.f32 %v2186, 0.5
      %v2211 = vmul.f32 %v2187, 0.5
      %v2212 = vmul.f32 %v2188, 0.5
      %v2213 = vmul.f32 %v2189, 0.5
      %v2214 = vmul.f32 %v2190, 0.5
      %v2215 = vmul.f32 %v2191, 0.5
      %v2216 = vmul.f32 %v2192, 0.5
      %v2217 = vmul.f32 %v2193, 0.5
      %v2218 = vmul.f32 %v2194, 0.5
      %v2219 = vmul.f32 %v2195, 0.5
      %v2220 = vmul.f32 %v2196, 0.5
      %v2221 = vmul.f32 %v2197, 0.5
      %v2222 = vmul.f32 %v2198, 0.5
      %v2223 = vmul.f32 %v2199, 0.5
      %v2224 = vmul.f32 %v2200, 0.5
      %v2225 = vmul.f32 %v2201, 0.5
      %v2226 = vmul.f32 %v2202, 0.5
      %v2227 = vmul.f32 %v2203, 0.5
      %v2228 = vmul.f32 %v2204, 0.5
      %v2229 = vmul.f32 %v2205, 0.5
      %v2230 = vmul.f32 %v2206, 0.5
      %v2231 = vmul.f32 %v2207, 0.5
      %v2232 = vmul.f32 %v2208, 0.5
      %v2233 = vmul.f32 %v2209, 0.5
      %v2234 = vmul.f32 %v2186, %v2186
      %v2235 = vmul.f32 %v2187, %v2187
      %v2236 = vmul.f32 %v2188, %v2188
      %v2237 = vmul.f32 %v2189, %v2189
      %v2238 = vmul.f32 %v2190, %v2190
      %v2239 = vmul.f32 %v2191, %v2191
      %v2240 = vmul.f32 %v2192, %v2192
      %v2241 = vmul.f32 %v2193, %v2193
      %v2242 = vmul.f32 %v2194, %v2194
      %v2243 = vmul.f32 %v2195, %v2195
      %v2244 = vmul.f32 %v2196, %v2196
      %v2245 = vmul.f32 %v2197, %v2197
      %v2246 = vmul.f32 %v2198, %v2198
      %v2247 = vmul.f32 %v2199, %v2199
      %v2248 = vmul.f32 %v2200, %v2200
      %v2249 = vmul.f32 %v2201, %v2201
      %v2250 = vmul.f32 %v2202, %v2202
      %v2251 = vmul.f32 %v2203, %v2203
      %v2252 = vmul.f32 %v2204, %v2204
      %v2253 = vmul.f32 %v2205, %v2205
      %v2254 = vmul.f32 %v2206, %v2206
      %v2255 = vmul.f32 %v2207, %v2207
      %v2256 = vmul.f32 %v2208, %v2208
      %v2257 = vmul.f32 %v2209, %v2209
      %v2258 = vmul.f32 %v2234, %v2186
      %v2259 = vmul.f32 %v2235, %v2187
      %v2260 = vmul.f32 %v2236, %v2188
      %v2261 = vmul.f32 %v2237, %v2189
      %v2262 = vmul.f32 %v2238, %v2190
      %v2263 = vmul.f32 %v2239, %v2191
      %v2264 = vmul.f32 %v2240, %v2192
      %v2265 = vmul.f32 %v2241, %v2193
      %v2266 = vmul.f32 %v2242, %v2194
      %v2267 = vmul.f32 %v2243, %v2195
      %v2268 = vmul.f32 %v2244, %v2196
      %v2269 = vmul.f32 %v2245, %v2197
      %v2270 = vmul.f32 %v2246, %v2198
      %v2271 = vmul.f32 %v2247, %v2199
      %v2272 = vmul.f32 %v2248, %v2200
      %v2273 = vmul.f32 %v2249, %v2201
      %v2274 = vmul.f32 %v2250, %v2202
      %v2275 = vmul.f32 %v2251, %v2203
      %v2276 = vmul.f32 %v2252, %v2204
      %v2277 = vmul.f32 %v2253, %v2205
      %v2278 = vmul.f32 %v2254, %v2206
      %v2279 = vmul.f32 %v2255, %v2207
      %v2280 = vmul.f32 %v2256, %v2208
      %v2281 = vmul.f32 %v2257, %v2209
      %v2282 = vmul.f32 %v2258, 0.044715
      %v2283 = vmul.f32 %v2259, 0.044715
      %v2284 = vmul.f32 %v2260, 0.044715
      %v2285 = vmul.f32 %v2261, 0.044715
      %v2286 = vmul.f32 %v2262, 0.044715
      %v2287 = vmul.f32 %v2263, 0.044715
      %v2288 = vmul.f32 %v2264, 0.044715
      %v2289 = vmul.f32 %v2265, 0.044715
      %v2290 = vmul.f32 %v2266, 0.044715
      %v2291 = vmul.f32 %v2267, 0.044715
      %v2292 = vmul.f32 %v2268, 0.044715
      %v2293 = vmul.f32 %v2269, 0.044715
      %v2294 = vmul.f32 %v2270, 0.044715
      %v2295 = vmul.f32 %v2271, 0.044715
      %v2296 = vmul.f32 %v2272, 0.044715
      %v2297 = vmul.f32 %v2273, 0.044715
      %v2298 = vmul.f32 %v2274, 0.044715
      %v2299 = vmul.f32 %v2275, 0.044715
      %v2300 = vmul.f32 %v2276, 0.044715
      %v2301 = vmul.f32 %v2277, 0.044715
      %v2302 = vmul.f32 %v2278, 0.044715
      %v2303 = vmul.f32 %v2279, 0.044715
      %v2304 = vmul.f32 %v2280, 0.044715
      %v2305 = vmul.f32 %v2281, 0.044715
      %v2306 = vadd.f32 %v2186, %v2282
      %v2307 = vadd.f32 %v2187, %v2283
      %v2308 = vadd.f32 %v2188, %v2284
      %v2309 = vadd.f32 %v2189, %v2285
      %v2310 = vadd.f32 %v2190, %v2286
      %v2311 = vadd.f32 %v2191, %v2287
      %v2312 = vadd.f32 %v2192, %v2288
      %v2313 = vadd.f32 %v2193, %v2289
      %v2314 = vadd.f32 %v2194, %v2290
      %v2315 = vadd.f32 %v2195, %v2291
      %v2316 = vadd.f32 %v2196, %v2292
      %v2317 = vadd.f32 %v2197, %v2293
      %v2318 = vadd.f32 %v2198, %v2294
      %v2319 = vadd.f32 %v2199, %v2295
      %v2320 = vadd.f32 %v2200, %v2296
      %v2321 = vadd.f32 %v2201, %v2297
      %v2322 = vadd.f32 %v2202, %v2298
      %v2323 = vadd.f32 %v2203, %v2299
      %v2324 = vadd.f32 %v2204, %v2300
      %v2325 = vadd.f32 %v2205, %v2301
      %v2326 = vadd.f32 %v2206, %v2302
      %v2327 = vadd.f32 %v2207, %v2303
      %v2328 = vadd.f32 %v2208, %v2304
      %v2329 = vadd.f32 %v2209, %v2305
      %v2330 = vmul.f32 %v2306, 0.7978846
      %v2331 = vmul.f32 %v2307, 0.7978846
      %v2332 = vmul.f32 %v2308, 0.7978846
      %v2333 = vmul.f32 %v2309, 0.7978846
      %v2334 = vmul.f32 %v2310, 0.7978846
      %v2335 = vmul.f32 %v2311, 0.7978846
      %v2336 = vmul.f32 %v2312, 0.7978846
      %v2337 = vmul.f32 %v2313, 0.7978846
      %v2338 = vmul.f32 %v2314, 0.7978846
      %v2339 = vmul.f32 %v2315, 0.7978846
      %v2340 = vmul.f32 %v2316, 0.7978846
      %v2341 = vmul.f32 %v2317, 0.7978846
      %v2342 = vmul.f32 %v2318, 0.7978846
      %v2343 = vmul.f32 %v2319, 0.7978846
      %v2344 = vmul.f32 %v2320, 0.7978846
      %v2345 = vmul.f32 %v2321, 0.7978846
      %v2346 = vmul.f32 %v2322, 0.7978846
      %v2347 = vmul.f32 %v2323, 0.7978846
      %v2348 = vmul.f32 %v2324, 0.7978846
      %v2349 = vmul.f32 %v2325, 0.7978846
      %v2350 = vmul.f32 %v2326, 0.7978846
      %v2351 = vmul.f32 %v2327, 0.7978846
      %v2352 = vmul.f32 %v2328, 0.7978846
      %v2353 = vmul.f32 %v2329, 0.7978846
      %v2354 = vtanh.pop %v2330
      %v2355 = vtanh.pop %v2331
      %v2356 = vtanh.pop %v2332
      %v2357 = vtanh.pop %v2333
      %v2358 = vtanh.pop %v2334
      %v2359 = vtanh.pop %v2335
      %v2360 = vtanh.pop %v2336
      %v2361 = vtanh.pop %v2337
      %v2362 = vtanh.pop %v2338
      %v2363 = vtanh.pop %v2339
      %v2364 = vtanh.pop %v2340
      %v2365 = vtanh.pop %v2341
      %v2366 = vtanh.pop %v2342
      %v2367 = vtanh.pop %v2343
      %v2368 = vtanh.pop %v2344
      %v2369 = vtanh.pop %v2345
      %v2370 = vtanh.pop %v2346
      %v2371 = vtanh.pop %v2347
      %v2372 = vtanh.pop %v2348
      %v2373 = vtanh.pop %v2349
      %v2374 = vtanh.pop %v2350
      %v2375 = vtanh.pop %v2351
      %v2376 = vtanh.pop %v2352
      %v2377 = vtanh.pop %v2353
      %v2378 = vadd.f32 %v2354, 1.0
      %v2379 = vadd.f32 %v2355, 1.0
      %v2380 = vadd.f32 %v2356, 1.0
      %v2381 = vadd.f32 %v2357, 1.0
      %v2382 = vadd.f32 %v2358, 1.0
      %v2383 = vadd.f32 %v2359, 1.0
      %v2384 = vadd.f32 %v2360, 1.0
      %v2385 = vadd.f32 %v2361, 1.0
      %v2386 = vadd.f32 %v2362, 1.0
      %v2387 = vadd.f32 %v2363, 1.0
      %v2388 = vadd.f32 %v2364, 1.0
      %v2389 = vadd.f32 %v2365, 1.0
      %v2390 = vadd.f32 %v2366, 1.0
      %v2391 = vadd.f32 %v2367, 1.0
      %v2392 = vadd.f32 %v2368, 1.0
      %v2393 = vadd.f32 %v2369, 1.0
      %v2394 = vadd.f32 %v2370, 1.0
      %v2395 = vadd.f32 %v2371, 1.0
      %v2396 = vadd.f32 %v2372, 1.0
      %v2397 = vadd.f32 %v2373, 1.0
      %v2398 = vadd.f32 %v2374, 1.0
      %v2399 = vadd.f32 %v2375, 1.0
      %v2400 = vadd.f32 %v2376, 1.0
      %v2401 = vadd.f32 %v2377, 1.0
      %v2402 = vmul.f32 %v2210, %v2378
      %v2403 = vmul.f32 %v2211, %v2379
      %v2404 = vmul.f32 %v2212, %v2380
      %v2405 = vmul.f32 %v2213, %v2381
      %v2406 = vmul.f32 %v2214, %v2382
      %v2407 = vmul.f32 %v2215, %v2383
      %v2408 = vmul.f32 %v2216, %v2384
      %v2409 = vmul.f32 %v2217, %v2385
      %v2410 = vmul.f32 %v2218, %v2386
      %v2411 = vmul.f32 %v2219, %v2387
      %v2412 = vmul.f32 %v2220, %v2388
      %v2413 = vmul.f32 %v2221, %v2389
      %v2414 = vmul.f32 %v2222, %v2390
      %v2415 = vmul.f32 %v2223, %v2391
      %v2416 = vmul.f32 %v2224, %v2392
      %v2417 = vmul.f32 %v2225, %v2393
      %v2418 = vmul.f32 %v2226, %v2394
      %v2419 = vmul.f32 %v2227, %v2395
      %v2420 = vmul.f32 %v2228, %v2396
      %v2421 = vmul.f32 %v2229, %v2397
      %v2422 = vmul.f32 %v2230, %v2398
      %v2423 = vmul.f32 %v2231, %v2399
      %v2424 = vmul.f32 %v2232, %v2400
      %v2425 = vmul.f32 %v2233, %v2401
      %v2426 = vmul.f32 %v2402, %v1164
      %v2427 = vmul.f32 %v2403, %v1168
      %v2428 = vmul.f32 %v2404, %v1172
      %v2429 = vmul.f32 %v2405, %v1164
      %v2430 = vmul.f32 %v2406, %v1168
      %v2431 = vmul.f32 %v2407, %v1172
      %v2432 = vmul.f32 %v2408, %v1164
      %v2433 = vmul.f32 %v2409, %v1168
      %v2434 = vmul.f32 %v2410, %v1172
      %v2435 = vmul.f32 %v2411, %v1164
      %v2436 = vmul.f32 %v2412, %v1168
      %v2437 = vmul.f32 %v2413, %v1172
      %v2438 = vmul.f32 %v2414, %v1164
      %v2439 = vmul.f32 %v2415, %v1168
      %v2440 = vmul.f32 %v2416, %v1172
      %v2441 = vmul.f32 %v2417, %v1164
      %v2442 = vmul.f32 %v2418, %v1168
      %v2443 = vmul.f32 %v2419, %v1172
      %v2444 = vmul.f32 %v2420, %v1164
      %v2445 = vmul.f32 %v2421, %v1168
      %v2446 = vmul.f32 %v2422, %v1172
      %v2447 = vmul.f32 %v2423, %v1164
      %v2448 = vmul.f32 %v2424, %v1168
      %v2449 = vmul.f32 %v2425, %v1172
      %2450 = vrot.lane.b32.xlu0 %v2426, 19
      %v2451 = vpop.permute.xlu0 %2450
      %2452 = vrot.lane.b32.xlu0 %v2429, 19
      %v2453 = vpop.permute.xlu0 %2452
      %2454 = vrot.lane.b32.xlu0 %v2432, 19
      %v2455 = vpop.permute.xlu0 %2454
      %2456 = vrot.lane.b32.xlu0 %v2435, 19
      %v2457 = vpop.permute.xlu0 %2456
      %2458 = vrot.lane.b32.xlu0 %v2438, 19
      %v2459 = vpop.permute.xlu0 %2458
      %2460 = vrot.lane.b32.xlu0 %v2441, 19
      %v2461 = vpop.permute.xlu0 %2460
      %2462 = vrot.lane.b32.xlu0 %v2444, 19
      %v2463 = vpop.permute.xlu0 %2462
      %2464 = vrot.lane.b32.xlu0 %v2447, 19
      %v2465 = vpop.permute.xlu0 %2464
      %2466 = vrot.lane.b32.xlu0 %v2427, 19
      %v2467 = vpop.permute.xlu0 %2466
      %2468 = vrot.lane.b32.xlu0 %v2430, 19
      %v2469 = vpop.permute.xlu0 %2468
      %2470 = vrot.lane.b32.xlu0 %v2433, 19
      %v2471 = vpop.permute.xlu0 %2470
      %2472 = vrot.lane.b32.xlu0 %v2436, 19
      %v2473 = vpop.permute.xlu0 %2472
      %2474 = vrot.lane.b32.xlu0 %v2439, 19
      %v2475 = vpop.permute.xlu0 %2474
      %2476 = vrot.lane.b32.xlu0 %v2442, 19
      %v2477 = vpop.permute.xlu0 %2476
      %2478 = vrot.lane.b32.xlu0 %v2445, 19
      %v2479 = vpop.permute.xlu0 %2478
      %2480 = vrot.lane.b32.xlu0 %v2448, 19
      %v2481 = vpop.permute.xlu0 %2480
      %2482 = vrot.lane.b32.xlu0 %v2428, 19
      %v2483 = vpop.permute.xlu0 %2482
      %2484 = vrot.lane.b32.xlu0 %v2431, 19
      %v2485 = vpop.permute.xlu0 %2484
      %2486 = vrot.lane.b32.xlu0 %v2434, 19
      %v2487 = vpop.permute.xlu0 %2486
      %2488 = vrot.lane.b32.xlu0 %v2437, 19
      %v2489 = vpop.permute.xlu0 %2488
      %2490 = vrot.lane.b32.xlu0 %v2440, 19
      %v2491 = vpop.permute.xlu0 %2490
      %2492 = vrot.lane.b32.xlu0 %v2443, 19
      %v2493 = vpop.permute.xlu0 %2492
      %2494 = vrot.lane.b32.xlu0 %v2446, 19
      %v2495 = vpop.permute.xlu0 %2494
      %2496 = vrot.lane.b32.xlu0 %v2449, 19
      %v2497 = vpop.permute.xlu0 %2496
      %v2498 = vsel %vm571, %v2467, %v2483
      %v2499 = vsel %vm571, %v2469, %v2485
      %v2500 = vsel %vm571, %v2471, %v2487
      %v2501 = vsel %vm571, %v2473, %v2489
      %v2502 = vsel %vm571, %v2475, %v2491
      %v2503 = vsel %vm571, %v2477, %v2493
      %v2504 = vsel %vm571, %v2479, %v2495
      %v2505 = vsel %vm571, %v2481, %v2497
      %v2506 = vsel %vm571, %v2451, %v2467
      %v2507 = vsel %vm571, %v2453, %v2469
      %v2508 = vsel %vm571, %v2455, %v2471
      %v2509 = vsel %vm571, %v2457, %v2473
      %v2510 = vsel %vm571, %v2459, %v2475
      %v2511 = vsel %vm571, %v2461, %v2477
      %v2512 = vsel %vm571, %v2463, %v2479
      %v2513 = vsel %vm571, %v2465, %v2481
      %v2514 = vsel %vm571, %v2483, %v2451
      %v2515 = vsel %vm571, %v2485, %v2453
      %v2516 = vsel %vm571, %v2487, %v2455
      %v2517 = vsel %vm571, %v2489, %v2457
      %v2518 = vsel %vm571, %v2491, %v2459
      %v2519 = vsel %vm571, %v2493, %v2461
      %v2520 = vsel %vm571, %v2495, %v2463
      %v2521 = vsel %vm571, %v2497, %v2465
      %v2522 = vpack.c.bf16 %v2515, %v2514
      %v2523 = vpack.c.bf16 %v2507, %v2506
      %v2524 = vpack.c.bf16 %v2499, %v2498
      %v2525 = vpack.c.bf16 %v2517, %v2516
      %v2526 = vpack.c.bf16 %v2509, %v2508
      %v2527 = vpack.c.bf16 %v2501, %v2500
      %v2528 = vpack.c.bf16 %v2519, %v2518
      %v2529 = vpack.c.bf16 %v2511, %v2510
      %v2530 = vpack.c.bf16 %v2503, %v2502
      %v2531 = vpack.c.bf16 %v2521, %v2520
      %v2532 = vpack.c.bf16 %v2513, %v2512
      %v2533 = vpack.c.bf16 %v2505, %v2504
      %2534 = vrot.lane.b32.xlu0 %v2426, 18
      %v2535 = vpop.permute.xlu0 %2534
      %2536 = vrot.lane.b32.xlu0 %v2429, 18
      %v2537 = vpop.permute.xlu0 %2536
      %2538 = vrot.lane.b32.xlu0 %v2432, 18
      %v2539 = vpop.permute.xlu0 %2538
      %2540 = vrot.lane.b32.xlu0 %v2435, 18
      %v2541 = vpop.permute.xlu0 %2540
      %2542 = vrot.lane.b32.xlu0 %v2438, 18
      %v2543 = vpop.permute.xlu0 %2542
      %2544 = vrot.lane.b32.xlu0 %v2441, 18
      %v2545 = vpop.permute.xlu0 %2544
      %2546 = vrot.lane.b32.xlu0 %v2444, 18
      %v2547 = vpop.permute.xlu0 %2546
      %2548 = vrot.lane.b32.xlu0 %v2447, 18
      %v2549 = vpop.permute.xlu0 %2548
      %2550 = vrot.lane.b32.xlu0 %v2427, 18
      %v2551 = vpop.permute.xlu0 %2550
      %2552 = vrot.lane.b32.xlu0 %v2430, 18
      %v2553 = vpop.permute.xlu0 %2552
      %2554 = vrot.lane.b32.xlu0 %v2433, 18
      %v2555 = vpop.permute.xlu0 %2554
      %2556 = vrot.lane.b32.xlu0 %v2436, 18
      %v2557 = vpop.permute.xlu0 %2556
      %2558 = vrot.lane.b32.xlu0 %v2439, 18
      %v2559 = vpop.permute.xlu0 %2558
      %2560 = vrot.lane.b32.xlu0 %v2442, 18
      %v2561 = vpop.permute.xlu0 %2560
      %2562 = vrot.lane.b32.xlu0 %v2445, 18
      %v2563 = vpop.permute.xlu0 %2562
      %2564 = vrot.lane.b32.xlu0 %v2448, 18
      %v2565 = vpop.permute.xlu0 %2564
      %2566 = vrot.lane.b32.xlu0 %v2428, 18
      %v2567 = vpop.permute.xlu0 %2566
      %2568 = vrot.lane.b32.xlu0 %v2431, 18
      %v2569 = vpop.permute.xlu0 %2568
      %2570 = vrot.lane.b32.xlu0 %v2434, 18
      %v2571 = vpop.permute.xlu0 %2570
      %2572 = vrot.lane.b32.xlu0 %v2437, 18
      %v2573 = vpop.permute.xlu0 %2572
      %2574 = vrot.lane.b32.xlu0 %v2440, 18
      %v2575 = vpop.permute.xlu0 %2574
      %2576 = vrot.lane.b32.xlu0 %v2443, 18
      %v2577 = vpop.permute.xlu0 %2576
      %2578 = vrot.lane.b32.xlu0 %v2446, 18
      %v2579 = vpop.permute.xlu0 %2578
      %2580 = vrot.lane.b32.xlu0 %v2449, 18
      %v2581 = vpop.permute.xlu0 %2580
      %v2582 = vsel %vm593, %v2551, %v2567
      %v2583 = vsel %vm593, %v2553, %v2569
      %v2584 = vsel %vm593, %v2555, %v2571
      %v2585 = vsel %vm593, %v2557, %v2573
      %v2586 = vsel %vm593, %v2559, %v2575
      %v2587 = vsel %vm593, %v2561, %v2577
      %v2588 = vsel %vm593, %v2563, %v2579
      %v2589 = vsel %vm593, %v2565, %v2581
      %v2590 = vsel %vm593, %v2535, %v2551
      %v2591 = vsel %vm593, %v2537, %v2553
      %v2592 = vsel %vm593, %v2539, %v2555
      %v2593 = vsel %vm593, %v2541, %v2557
      %v2594 = vsel %vm593, %v2543, %v2559
      %v2595 = vsel %vm593, %v2545, %v2561
      %v2596 = vsel %vm593, %v2547, %v2563
      %v2597 = vsel %vm593, %v2549, %v2565
      %v2598 = vsel %vm593, %v2567, %v2535
      %v2599 = vsel %vm593, %v2569, %v2537
      %v2600 = vsel %vm593, %v2571, %v2539
      %v2601 = vsel %vm593, %v2573, %v2541
      %v2602 = vsel %vm593, %v2575, %v2543
      %v2603 = vsel %vm593, %v2577, %v2545
      %v2604 = vsel %vm593, %v2579, %v2547
      %v2605 = vsel %vm593, %v2581, %v2549
      %v2606 = vpack.c.bf16 %v2599, %v2598
      %v2607 = vpack.c.bf16 %v2591, %v2590
      %v2608 = vpack.c.bf16 %v2583, %v2582
      %v2609 = vpack.c.bf16 %v2601, %v2600
      %v2610 = vpack.c.bf16 %v2593, %v2592
      %v2611 = vpack.c.bf16 %v2585, %v2584
      %v2612 = vpack.c.bf16 %v2603, %v2602
      %v2613 = vpack.c.bf16 %v2595, %v2594
      %v2614 = vpack.c.bf16 %v2587, %v2586
      %v2615 = vpack.c.bf16 %v2605, %v2604
      %v2616 = vpack.c.bf16 %v2597, %v2596
      %v2617 = vpack.c.bf16 %v2589, %v2588
      %2618 = vrot.lane.b32.xlu0 %v2426, 17
      %v2619 = vpop.permute.xlu0 %2618
      %2620 = vrot.lane.b32.xlu0 %v2429, 17
      %v2621 = vpop.permute.xlu0 %2620
      %2622 = vrot.lane.b32.xlu0 %v2432, 17
      %v2623 = vpop.permute.xlu0 %2622
      %2624 = vrot.lane.b32.xlu0 %v2435, 17
      %v2625 = vpop.permute.xlu0 %2624
      %2626 = vrot.lane.b32.xlu0 %v2438, 17
      %v2627 = vpop.permute.xlu0 %2626
      %2628 = vrot.lane.b32.xlu0 %v2441, 17
      %v2629 = vpop.permute.xlu0 %2628
      %2630 = vrot.lane.b32.xlu0 %v2444, 17
      %v2631 = vpop.permute.xlu0 %2630
      %2632 = vrot.lane.b32.xlu0 %v2447, 17
      %v2633 = vpop.permute.xlu0 %2632
      %2634 = vrot.lane.b32.xlu0 %v2427, 17
      %v2635 = vpop.permute.xlu0 %2634
      %2636 = vrot.lane.b32.xlu0 %v2430, 17
      %v2637 = vpop.permute.xlu0 %2636
      %2638 = vrot.lane.b32.xlu0 %v2433, 17
      %v2639 = vpop.permute.xlu0 %2638
      %2640 = vrot.lane.b32.xlu0 %v2436, 17
      %v2641 = vpop.permute.xlu0 %2640
      %2642 = vrot.lane.b32.xlu0 %v2439, 17
      %v2643 = vpop.permute.xlu0 %2642
      %2644 = vrot.lane.b32.xlu0 %v2442, 17
      %v2645 = vpop.permute.xlu0 %2644
      %2646 = vrot.lane.b32.xlu0 %v2445, 17
      %v2647 = vpop.permute.xlu0 %2646
      %2648 = vrot.lane.b32.xlu0 %v2448, 17
      %v2649 = vpop.permute.xlu0 %2648
      %2650 = vrot.lane.b32.xlu0 %v2428, 17
      %v2651 = vpop.permute.xlu0 %2650
      %2652 = vrot.lane.b32.xlu0 %v2431, 17
      %v2653 = vpop.permute.xlu0 %2652
      %2654 = vrot.lane.b32.xlu0 %v2434, 17
      %v2655 = vpop.permute.xlu0 %2654
      %2656 = vrot.lane.b32.xlu0 %v2437, 17
      %v2657 = vpop.permute.xlu0 %2656
      %2658 = vrot.lane.b32.xlu0 %v2440, 17
      %v2659 = vpop.permute.xlu0 %2658
      %2660 = vrot.lane.b32.xlu0 %v2443, 17
      %v2661 = vpop.permute.xlu0 %2660
      %2662 = vrot.lane.b32.xlu0 %v2446, 17
      %v2663 = vpop.permute.xlu0 %2662
      %2664 = vrot.lane.b32.xlu0 %v2449, 17
      %v2665 = vpop.permute.xlu0 %2664
      %v2666 = vsel %vm615, %v2635, %v2651
      %v2667 = vsel %vm615, %v2637, %v2653
      %v2668 = vsel %vm615, %v2639, %v2655
      %v2669 = vsel %vm615, %v2641, %v2657
      %v2670 = vsel %vm615, %v2643, %v2659
      %v2671 = vsel %vm615, %v2645, %v2661
      %v2672 = vsel %vm615, %v2647, %v2663
      %v2673 = vsel %vm615, %v2649, %v2665
      %v2674 = vsel %vm615, %v2619, %v2635
      %v2675 = vsel %vm615, %v2621, %v2637
      %v2676 = vsel %vm615, %v2623, %v2639
      %v2677 = vsel %vm615, %v2625, %v2641
      %v2678 = vsel %vm615, %v2627, %v2643
      %v2679 = vsel %vm615, %v2629, %v2645
      %v2680 = vsel %vm615, %v2631, %v2647
      %v2681 = vsel %vm615, %v2633, %v2649
      %v2682 = vsel %vm615, %v2651, %v2619
      %v2683 = vsel %vm615, %v2653, %v2621
      %v2684 = vsel %vm615, %v2655, %v2623
      %v2685 = vsel %vm615, %v2657, %v2625
      %v2686 = vsel %vm615, %v2659, %v2627
      %v2687 = vsel %vm615, %v2661, %v2629
      %v2688 = vsel %vm615, %v2663, %v2631
      %v2689 = vsel %vm615, %v2665, %v2633
      %v2690 = vpack.c.bf16 %v2683, %v2682
      %v2691 = vpack.c.bf16 %v2675, %v2674
      %v2692 = vpack.c.bf16 %v2667, %v2666
      %v2693 = vpack.c.bf16 %v2685, %v2684
      %v2694 = vpack.c.bf16 %v2677, %v2676
      %v2695 = vpack.c.bf16 %v2669, %v2668
      %v2696 = vpack.c.bf16 %v2687, %v2686
      %v2697 = vpack.c.bf16 %v2679, %v2678
      %v2698 = vpack.c.bf16 %v2671, %v2670
      %v2699 = vpack.c.bf16 %v2689, %v2688
      %v2700 = vpack.c.bf16 %v2681, %v2680
      %v2701 = vpack.c.bf16 %v2673, %v2672
      %2702 = vrot.lane.b32.xlu0 %v2426, 1
      %v2703 = vpop.permute.xlu0 %2702
      %2704 = vrot.lane.b32.xlu0 %v2429, 1
      %v2705 = vpop.permute.xlu0 %2704
      %2706 = vrot.lane.b32.xlu0 %v2432, 1
      %v2707 = vpop.permute.xlu0 %2706
      %2708 = vrot.lane.b32.xlu0 %v2435, 1
      %v2709 = vpop.permute.xlu0 %2708
      %2710 = vrot.lane.b32.xlu0 %v2438, 1
      %v2711 = vpop.permute.xlu0 %2710
      %2712 = vrot.lane.b32.xlu0 %v2441, 1
      %v2713 = vpop.permute.xlu0 %2712
      %2714 = vrot.lane.b32.xlu0 %v2444, 1
      %v2715 = vpop.permute.xlu0 %2714
      %2716 = vrot.lane.b32.xlu0 %v2447, 1
      %v2717 = vpop.permute.xlu0 %2716
      %2718 = vrot.lane.b32.xlu0 %v2427, 1
      %v2719 = vpop.permute.xlu0 %2718
      %2720 = vrot.lane.b32.xlu0 %v2430, 1
      %v2721 = vpop.permute.xlu0 %2720
      %2722 = vrot.lane.b32.xlu0 %v2433, 1
      %v2723 = vpop.permute.xlu0 %2722
      %2724 = vrot.lane.b32.xlu0 %v2436, 1
      %v2725 = vpop.permute.xlu0 %2724
      %2726 = vrot.lane.b32.xlu0 %v2439, 1
      %v2727 = vpop.permute.xlu0 %2726
      %2728 = vrot.lane.b32.xlu0 %v2442, 1
      %v2729 = vpop.permute.xlu0 %2728
      %2730 = vrot.lane.b32.xlu0 %v2445, 1
      %v2731 = vpop.permute.xlu0 %2730
      %2732 = vrot.lane.b32.xlu0 %v2448, 1
      %v2733 = vpop.permute.xlu0 %2732
      %2734 = vrot.lane.b32.xlu0 %v2428, 1
      %v2735 = vpop.permute.xlu0 %2734
      %2736 = vrot.lane.b32.xlu0 %v2431, 1
      %v2737 = vpop.permute.xlu0 %2736
      %2738 = vrot.lane.b32.xlu0 %v2434, 1
      %v2739 = vpop.permute.xlu0 %2738
      %2740 = vrot.lane.b32.xlu0 %v2437, 1
      %v2741 = vpop.permute.xlu0 %2740
      %2742 = vrot.lane.b32.xlu0 %v2440, 1
      %v2743 = vpop.permute.xlu0 %2742
      %2744 = vrot.lane.b32.xlu0 %v2443, 1
      %v2745 = vpop.permute.xlu0 %2744
      %2746 = vrot.lane.b32.xlu0 %v2446, 1
      %v2747 = vpop.permute.xlu0 %2746
      %2748 = vrot.lane.b32.xlu0 %v2449, 1
      %v2749 = vpop.permute.xlu0 %2748
      %v2750 = vsel %vm637, %v2719, %v2735
      %v2751 = vsel %vm637, %v2721, %v2737
      %v2752 = vsel %vm637, %v2723, %v2739
      %v2753 = vsel %vm637, %v2725, %v2741
      %v2754 = vsel %vm637, %v2727, %v2743
      %v2755 = vsel %vm637, %v2729, %v2745
      %v2756 = vsel %vm637, %v2731, %v2747
      %v2757 = vsel %vm637, %v2733, %v2749
      %v2758 = vsel %vm637, %v2703, %v2719
      %v2759 = vsel %vm637, %v2705, %v2721
      %v2760 = vsel %vm637, %v2707, %v2723
      %v2761 = vsel %vm637, %v2709, %v2725
      %v2762 = vsel %vm637, %v2711, %v2727
      %v2763 = vsel %vm637, %v2713, %v2729
      %v2764 = vsel %vm637, %v2715, %v2731
      %v2765 = vsel %vm637, %v2717, %v2733
      %v2766 = vsel %vm637, %v2735, %v2703
      %v2767 = vsel %vm637, %v2737, %v2705
      %v2768 = vsel %vm637, %v2739, %v2707
      %v2769 = vsel %vm637, %v2741, %v2709
      %v2770 = vsel %vm637, %v2743, %v2711
      %v2771 = vsel %vm637, %v2745, %v2713
      %v2772 = vsel %vm637, %v2747, %v2715
      %v2773 = vsel %vm637, %v2749, %v2717
      %v2774 = vpack.c.bf16 %v2767, %v2766
      %v2775 = vpack.c.bf16 %v2759, %v2758
      %v2776 = vpack.c.bf16 %v2751, %v2750
      %v2777 = vpack.c.bf16 %v2769, %v2768
      %v2778 = vpack.c.bf16 %v2761, %v2760
      %v2779 = vpack.c.bf16 %v2753, %v2752
      %v2780 = vpack.c.bf16 %v2771, %v2770
      %v2781 = vpack.c.bf16 %v2763, %v2762
      %v2782 = vpack.c.bf16 %v2755, %v2754
      %v2783 = vpack.c.bf16 %v2773, %v2772
      %v2784 = vpack.c.bf16 %v2765, %v2764
      %v2785 = vpack.c.bf16 %v2757, %v2756
      %v2786 = vpack.c.bf16 %v2429, %v2426
      %v2787 = vpack.c.bf16 %v2430, %v2427
      %v2788 = vpack.c.bf16 %v2431, %v2428
      %v2789 = vpack.c.bf16 %v2435, %v2432
      %v2790 = vpack.c.bf16 %v2436, %v2433
      %v2791 = vpack.c.bf16 %v2437, %v2434
      %v2792 = vpack.c.bf16 %v2441, %v2438
      %v2793 = vpack.c.bf16 %v2442, %v2439
      %v2794 = vpack.c.bf16 %v2443, %v2440
      %v2795 = vpack.c.bf16 %v2447, %v2444
      %v2796 = vpack.c.bf16 %v2448, %v2445
      %v2797 = vpack.c.bf16 %v2449, %v2446
      %2798 = vrot.lane.b32.xlu0 %v2426, 127
      %v2799 = vpop.permute.xlu0 %2798
      %2800 = vrot.lane.b32.xlu0 %v2429, 127
      %v2801 = vpop.permute.xlu0 %2800
      %2802 = vrot.lane.b32.xlu0 %v2432, 127
      %v2803 = vpop.permute.xlu0 %2802
      %2804 = vrot.lane.b32.xlu0 %v2435, 127
      %v2805 = vpop.permute.xlu0 %2804
      %2806 = vrot.lane.b32.xlu0 %v2438, 127
      %v2807 = vpop.permute.xlu0 %2806
      %2808 = vrot.lane.b32.xlu0 %v2441, 127
      %v2809 = vpop.permute.xlu0 %2808
      %2810 = vrot.lane.b32.xlu0 %v2444, 127
      %v2811 = vpop.permute.xlu0 %2810
      %2812 = vrot.lane.b32.xlu0 %v2447, 127
      %v2813 = vpop.permute.xlu0 %2812
      %2814 = vrot.lane.b32.xlu0 %v2427, 127
      %v2815 = vpop.permute.xlu0 %2814
      %2816 = vrot.lane.b32.xlu0 %v2430, 127
      %v2817 = vpop.permute.xlu0 %2816
      %2818 = vrot.lane.b32.xlu0 %v2433, 127
      %v2819 = vpop.permute.xlu0 %2818
      %2820 = vrot.lane.b32.xlu0 %v2436, 127
      %v2821 = vpop.permute.xlu0 %2820
      %2822 = vrot.lane.b32.xlu0 %v2439, 127
      %v2823 = vpop.permute.xlu0 %2822
      %2824 = vrot.lane.b32.xlu0 %v2442, 127
      %v2825 = vpop.permute.xlu0 %2824
      %2826 = vrot.lane.b32.xlu0 %v2445, 127
      %v2827 = vpop.permute.xlu0 %2826
      %2828 = vrot.lane.b32.xlu0 %v2448, 127
      %v2829 = vpop.permute.xlu0 %2828
      %2830 = vrot.lane.b32.xlu0 %v2428, 127
      %v2831 = vpop.permute.xlu0 %2830
      %2832 = vrot.lane.b32.xlu0 %v2431, 127
      %v2833 = vpop.permute.xlu0 %2832
      %2834 = vrot.lane.b32.xlu0 %v2434, 127
      %v2835 = vpop.permute.xlu0 %2834
      %2836 = vrot.lane.b32.xlu0 %v2437, 127
      %v2837 = vpop.permute.xlu0 %2836
      %2838 = vrot.lane.b32.xlu0 %v2440, 127
      %v2839 = vpop.permute.xlu0 %2838
      %2840 = vrot.lane.b32.xlu0 %v2443, 127
      %v2841 = vpop.permute.xlu0 %2840
      %2842 = vrot.lane.b32.xlu0 %v2446, 127
      %v2843 = vpop.permute.xlu0 %2842
      %2844 = vrot.lane.b32.xlu0 %v2449, 127
      %v2845 = vpop.permute.xlu0 %2844
      %v2846 = vsel %vm662, %v2815, %v2831
      %v2847 = vsel %vm662, %v2817, %v2833
      %v2848 = vsel %vm662, %v2819, %v2835
      %v2849 = vsel %vm662, %v2821, %v2837
      %v2850 = vsel %vm662, %v2823, %v2839
      %v2851 = vsel %vm662, %v2825, %v2841
      %v2852 = vsel %vm662, %v2827, %v2843
      %v2853 = vsel %vm662, %v2829, %v2845
      %v2854 = vsel %vm662, %v2799, %v2815
      %v2855 = vsel %vm662, %v2801, %v2817
      %v2856 = vsel %vm662, %v2803, %v2819
      %v2857 = vsel %vm662, %v2805, %v2821
      %v2858 = vsel %vm662, %v2807, %v2823
      %v2859 = vsel %vm662, %v2809, %v2825
      %v2860 = vsel %vm662, %v2811, %v2827
      %v2861 = vsel %vm662, %v2813, %v2829
      %v2862 = vsel %vm662, %v2831, %v2799
      %v2863 = vsel %vm662, %v2833, %v2801
      %v2864 = vsel %vm662, %v2835, %v2803
      %v2865 = vsel %vm662, %v2837, %v2805
      %v2866 = vsel %vm662, %v2839, %v2807
      %v2867 = vsel %vm662, %v2841, %v2809
      %v2868 = vsel %vm662, %v2843, %v2811
      %v2869 = vsel %vm662, %v2845, %v2813
      %v2870 = vpack.c.bf16 %v2855, %v2854
      %v2871 = vpack.c.bf16 %v2847, %v2846
      %v2872 = vpack.c.bf16 %v2863, %v2862
      %v2873 = vpack.c.bf16 %v2857, %v2856
      %v2874 = vpack.c.bf16 %v2849, %v2848
      %v2875 = vpack.c.bf16 %v2865, %v2864
      %v2876 = vpack.c.bf16 %v2859, %v2858
      %v2877 = vpack.c.bf16 %v2851, %v2850
      %v2878 = vpack.c.bf16 %v2867, %v2866
      %v2879 = vpack.c.bf16 %v2861, %v2860
      %v2880 = vpack.c.bf16 %v2853, %v2852
      %v2881 = vpack.c.bf16 %v2869, %v2868
      %2882 = vrot.lane.b32.xlu0 %v2426, 111
      %v2883 = vpop.permute.xlu0 %2882
      %2884 = vrot.lane.b32.xlu0 %v2429, 111
      %v2885 = vpop.permute.xlu0 %2884
      %2886 = vrot.lane.b32.xlu0 %v2432, 111
      %v2887 = vpop.permute.xlu0 %2886
      %2888 = vrot.lane.b32.xlu0 %v2435, 111
      %v2889 = vpop.permute.xlu0 %2888
      %2890 = vrot.lane.b32.xlu0 %v2438, 111
      %v2891 = vpop.permute.xlu0 %2890
      %2892 = vrot.lane.b32.xlu0 %v2441, 111
      %v2893 = vpop.permute.xlu0 %2892
      %2894 = vrot.lane.b32.xlu0 %v2444, 111
      %v2895 = vpop.permute.xlu0 %2894
      %2896 = vrot.lane.b32.xlu0 %v2447, 111
      %v2897 = vpop.permute.xlu0 %2896
      %2898 = vrot.lane.b32.xlu0 %v2427, 111
      %v2899 = vpop.permute.xlu0 %2898
      %2900 = vrot.lane.b32.xlu0 %v2430, 111
      %v2901 = vpop.permute.xlu0 %2900
      %2902 = vrot.lane.b32.xlu0 %v2433, 111
      %v2903 = vpop.permute.xlu0 %2902
      %2904 = vrot.lane.b32.xlu0 %v2436, 111
      %v2905 = vpop.permute.xlu0 %2904
      %2906 = vrot.lane.b32.xlu0 %v2439, 111
      %v2907 = vpop.permute.xlu0 %2906
      %2908 = vrot.lane.b32.xlu0 %v2442, 111
      %v2909 = vpop.permute.xlu0 %2908
      %2910 = vrot.lane.b32.xlu0 %v2445, 111
      %v2911 = vpop.permute.xlu0 %2910
      %2912 = vrot.lane.b32.xlu0 %v2448, 111
      %v2913 = vpop.permute.xlu0 %2912
      %2914 = vrot.lane.b32.xlu0 %v2428, 111
      %v2915 = vpop.permute.xlu0 %2914
      %2916 = vrot.lane.b32.xlu0 %v2431, 111
      %v2917 = vpop.permute.xlu0 %2916
      %2918 = vrot.lane.b32.xlu0 %v2434, 111
      %v2919 = vpop.permute.xlu0 %2918
      %2920 = vrot.lane.b32.xlu0 %v2437, 111
      %v2921 = vpop.permute.xlu0 %2920
      %2922 = vrot.lane.b32.xlu0 %v2440, 111
      %v2923 = vpop.permute.xlu0 %2922
      %2924 = vrot.lane.b32.xlu0 %v2443, 111
      %v2925 = vpop.permute.xlu0 %2924
      %2926 = vrot.lane.b32.xlu0 %v2446, 111
      %v2927 = vpop.permute.xlu0 %2926
      %2928 = vrot.lane.b32.xlu0 %v2449, 111
      %v2929 = vpop.permute.xlu0 %2928
      %v2930 = vsel %vm684, %v2899, %v2915
      %v2931 = vsel %vm684, %v2901, %v2917
      %v2932 = vsel %vm684, %v2903, %v2919
      %v2933 = vsel %vm684, %v2905, %v2921
      %v2934 = vsel %vm684, %v2907, %v2923
      %v2935 = vsel %vm684, %v2909, %v2925
      %v2936 = vsel %vm684, %v2911, %v2927
      %v2937 = vsel %vm684, %v2913, %v2929
      %v2938 = vsel %vm684, %v2883, %v2899
      %v2939 = vsel %vm684, %v2885, %v2901
      %v2940 = vsel %vm684, %v2887, %v2903
      %v2941 = vsel %vm684, %v2889, %v2905
      %v2942 = vsel %vm684, %v2891, %v2907
      %v2943 = vsel %vm684, %v2893, %v2909
      %v2944 = vsel %vm684, %v2895, %v2911
      %v2945 = vsel %vm684, %v2897, %v2913
      %v2946 = vsel %vm684, %v2915, %v2883
      %v2947 = vsel %vm684, %v2917, %v2885
      %v2948 = vsel %vm684, %v2919, %v2887
      %v2949 = vsel %vm684, %v2921, %v2889
      %v2950 = vsel %vm684, %v2923, %v2891
      %v2951 = vsel %vm684, %v2925, %v2893
      %v2952 = vsel %vm684, %v2927, %v2895
      %v2953 = vsel %vm684, %v2929, %v2897
      %v2954 = vpack.c.bf16 %v2939, %v2938
      %v2955 = vpack.c.bf16 %v2931, %v2930
      %v2956 = vpack.c.bf16 %v2947, %v2946
      %v2957 = vpack.c.bf16 %v2941, %v2940
      %v2958 = vpack.c.bf16 %v2933, %v2932
      %v2959 = vpack.c.bf16 %v2949, %v2948
      %v2960 = vpack.c.bf16 %v2943, %v2942
      %v2961 = vpack.c.bf16 %v2935, %v2934
      %v2962 = vpack.c.bf16 %v2951, %v2950
      %v2963 = vpack.c.bf16 %v2945, %v2944
      %v2964 = vpack.c.bf16 %v2937, %v2936
      %v2965 = vpack.c.bf16 %v2953, %v2952
      %2966 = vrot.lane.b32.xlu0 %v2426, 110
      %v2967 = vpop.permute.xlu0 %2966
      %2968 = vrot.lane.b32.xlu0 %v2429, 110
      %v2969 = vpop.permute.xlu0 %2968
      %2970 = vrot.lane.b32.xlu0 %v2432, 110
      %v2971 = vpop.permute.xlu0 %2970
      %2972 = vrot.lane.b32.xlu0 %v2435, 110
      %v2973 = vpop.permute.xlu0 %2972
      %2974 = vrot.lane.b32.xlu0 %v2438, 110
      %v2975 = vpop.permute.xlu0 %2974
      %2976 = vrot.lane.b32.xlu0 %v2441, 110
      %v2977 = vpop.permute.xlu0 %2976
      %2978 = vrot.lane.b32.xlu0 %v2444, 110
      %v2979 = vpop.permute.xlu0 %2978
      %2980 = vrot.lane.b32.xlu0 %v2447, 110
      %v2981 = vpop.permute.xlu0 %2980
      %2982 = vrot.lane.b32.xlu0 %v2427, 110
      %v2983 = vpop.permute.xlu0 %2982
      %2984 = vrot.lane.b32.xlu0 %v2430, 110
      %v2985 = vpop.permute.xlu0 %2984
      %2986 = vrot.lane.b32.xlu0 %v2433, 110
      %v2987 = vpop.permute.xlu0 %2986
      %2988 = vrot.lane.b32.xlu0 %v2436, 110
      %v2989 = vpop.permute.xlu0 %2988
      %2990 = vrot.lane.b32.xlu0 %v2439, 110
      %v2991 = vpop.permute.xlu0 %2990
      %2992 = vrot.lane.b32.xlu0 %v2442, 110
      %v2993 = vpop.permute.xlu0 %2992
      %2994 = vrot.lane.b32.xlu0 %v2445, 110
      %v2995 = vpop.permute.xlu0 %2994
      %2996 = vrot.lane.b32.xlu0 %v2448, 110
      %v2997 = vpop.permute.xlu0 %2996
      %2998 = vrot.lane.b32.xlu0 %v2428, 110
      %v2999 = vpop.permute.xlu0 %2998
      %3000 = vrot.lane.b32.xlu0 %v2431, 110
      %v3001 = vpop.permute.xlu0 %3000
      %3002 = vrot.lane.b32.xlu0 %v2434, 110
      %v3003 = vpop.permute.xlu0 %3002
      %3004 = vrot.lane.b32.xlu0 %v2437, 110
      %v3005 = vpop.permute.xlu0 %3004
      %3006 = vrot.lane.b32.xlu0 %v2440, 110
      %v3007 = vpop.permute.xlu0 %3006
      %3008 = vrot.lane.b32.xlu0 %v2443, 110
      %v3009 = vpop.permute.xlu0 %3008
      %3010 = vrot.lane.b32.xlu0 %v2446, 110
      %v3011 = vpop.permute.xlu0 %3010
      %3012 = vrot.lane.b32.xlu0 %v2449, 110
      %v3013 = vpop.permute.xlu0 %3012
      %v3014 = vsel %vm706, %v2983, %v2999
      %v3015 = vsel %vm706, %v2985, %v3001
      %v3016 = vsel %vm706, %v2987, %v3003
      %v3017 = vsel %vm706, %v2989, %v3005
      %v3018 = vsel %vm706, %v2991, %v3007
      %v3019 = vsel %vm706, %v2993, %v3009
      %v3020 = vsel %vm706, %v2995, %v3011
      %v3021 = vsel %vm706, %v2997, %v3013
      %v3022 = vsel %vm706, %v2967, %v2983
      %v3023 = vsel %vm706, %v2969, %v2985
      %v3024 = vsel %vm706, %v2971, %v2987
      %v3025 = vsel %vm706, %v2973, %v2989
      %v3026 = vsel %vm706, %v2975, %v2991
      %v3027 = vsel %vm706, %v2977, %v2993
      %v3028 = vsel %vm706, %v2979, %v2995
      %v3029 = vsel %vm706, %v2981, %v2997
      %v3030 = vsel %vm706, %v2999, %v2967
      %v3031 = vsel %vm706, %v3001, %v2969
      %v3032 = vsel %vm706, %v3003, %v2971
      %v3033 = vsel %vm706, %v3005, %v2973
      %v3034 = vsel %vm706, %v3007, %v2975
      %v3035 = vsel %vm706, %v3009, %v2977
      %v3036 = vsel %vm706, %v3011, %v2979
      %v3037 = vsel %vm706, %v3013, %v2981
      %v3038 = vpack.c.bf16 %v3023, %v3022
      %v3039 = vpack.c.bf16 %v3015, %v3014
      %v3040 = vpack.c.bf16 %v3031, %v3030
      %v3041 = vpack.c.bf16 %v3025, %v3024
      %v3042 = vpack.c.bf16 %v3017, %v3016
      %v3043 = vpack.c.bf16 %v3033, %v3032
      %v3044 = vpack.c.bf16 %v3027, %v3026
      %v3045 = vpack.c.bf16 %v3019, %v3018
      %v3046 = vpack.c.bf16 %v3035, %v3034
      %v3047 = vpack.c.bf16 %v3029, %v3028
      %v3048 = vpack.c.bf16 %v3021, %v3020
      %v3049 = vpack.c.bf16 %v3037, %v3036
      %3050 = vrot.lane.b32.xlu0 %v2426, 109
      %v3051 = vpop.permute.xlu0 %3050
      %3052 = vrot.lane.b32.xlu0 %v2429, 109
      %v3053 = vpop.permute.xlu0 %3052
      %3054 = vrot.lane.b32.xlu0 %v2432, 109
      %v3055 = vpop.permute.xlu0 %3054
      %3056 = vrot.lane.b32.xlu0 %v2435, 109
      %v3057 = vpop.permute.xlu0 %3056
      %3058 = vrot.lane.b32.xlu0 %v2438, 109
      %v3059 = vpop.permute.xlu0 %3058
      %3060 = vrot.lane.b32.xlu0 %v2441, 109
      %v3061 = vpop.permute.xlu0 %3060
      %3062 = vrot.lane.b32.xlu0 %v2444, 109
      %v3063 = vpop.permute.xlu0 %3062
      %3064 = vrot.lane.b32.xlu0 %v2447, 109
      %v3065 = vpop.permute.xlu0 %3064
      %3066 = vrot.lane.b32.xlu0 %v2427, 109
      %v3067 = vpop.permute.xlu0 %3066
      %3068 = vrot.lane.b32.xlu0 %v2430, 109
      %v3069 = vpop.permute.xlu0 %3068
      %3070 = vrot.lane.b32.xlu0 %v2433, 109
      %v3071 = vpop.permute.xlu0 %3070
      %3072 = vrot.lane.b32.xlu0 %v2436, 109
      %v3073 = vpop.permute.xlu0 %3072
      %3074 = vrot.lane.b32.xlu0 %v2439, 109
      %v3075 = vpop.permute.xlu0 %3074
      %3076 = vrot.lane.b32.xlu0 %v2442, 109
      %v3077 = vpop.permute.xlu0 %3076
      %3078 = vrot.lane.b32.xlu0 %v2445, 109
      %v3079 = vpop.permute.xlu0 %3078
      %3080 = vrot.lane.b32.xlu0 %v2448, 109
      %v3081 = vpop.permute.xlu0 %3080
      %3082 = vrot.lane.b32.xlu0 %v2428, 109
      %v3083 = vpop.permute.xlu0 %3082
      %3084 = vrot.lane.b32.xlu0 %v2431, 109
      %v3085 = vpop.permute.xlu0 %3084
      %3086 = vrot.lane.b32.xlu0 %v2434, 109
      %v3087 = vpop.permute.xlu0 %3086
      %3088 = vrot.lane.b32.xlu0 %v2437, 109
      %v3089 = vpop.permute.xlu0 %3088
      %3090 = vrot.lane.b32.xlu0 %v2440, 109
      %v3091 = vpop.permute.xlu0 %3090
      %3092 = vrot.lane.b32.xlu0 %v2443, 109
      %v3093 = vpop.permute.xlu0 %3092
      %3094 = vrot.lane.b32.xlu0 %v2446, 109
      %v3095 = vpop.permute.xlu0 %3094
      %3096 = vrot.lane.b32.xlu0 %v2449, 109
      %v3097 = vpop.permute.xlu0 %3096
      %v3098 = vsel %vm728, %v3067, %v3083
      %v3099 = vsel %vm728, %v3069, %v3085
      %v3100 = vsel %vm728, %v3071, %v3087
      %v3101 = vsel %vm728, %v3073, %v3089
      %v3102 = vsel %vm728, %v3075, %v3091
      %v3103 = vsel %vm728, %v3077, %v3093
      %v3104 = vsel %vm728, %v3079, %v3095
      %v3105 = vsel %vm728, %v3081, %v3097
      %v3106 = vsel %vm728, %v3051, %v3067
      %v3107 = vsel %vm728, %v3053, %v3069
      %v3108 = vsel %vm728, %v3055, %v3071
      %v3109 = vsel %vm728, %v3057, %v3073
      %v3110 = vsel %vm728, %v3059, %v3075
      %v3111 = vsel %vm728, %v3061, %v3077
      %v3112 = vsel %vm728, %v3063, %v3079
      %v3113 = vsel %vm728, %v3065, %v3081
      %v3114 = vsel %vm728, %v3083, %v3051
      %v3115 = vsel %vm728, %v3085, %v3053
      %v3116 = vsel %vm728, %v3087, %v3055
      %v3117 = vsel %vm728, %v3089, %v3057
      %v3118 = vsel %vm728, %v3091, %v3059
      %v3119 = vsel %vm728, %v3093, %v3061
      %v3120 = vsel %vm728, %v3095, %v3063
      %v3121 = vsel %vm728, %v3097, %v3065
      %v3122 = vpack.c.bf16 %v3107, %v3106
      %v3123 = vpack.c.bf16 %v3099, %v3098
      %v3124 = vpack.c.bf16 %v3115, %v3114
      %v3125 = vpack.c.bf16 %v3109, %v3108
      %v3126 = vpack.c.bf16 %v3101, %v3100
      %v3127 = vpack.c.bf16 %v3117, %v3116
      %v3128 = vpack.c.bf16 %v3111, %v3110
      %v3129 = vpack.c.bf16 %v3103, %v3102
      %v3130 = vpack.c.bf16 %v3119, %v3118
      %v3131 = vpack.c.bf16 %v3113, %v3112
      %v3132 = vpack.c.bf16 %v3105, %v3104
      %v3133 = vpack.c.bf16 %v3121, %v3120
      %v3134 = vld [vmem:[%s8] sm:$0xff]
      %v3135 = vld [vmem:[%s8 + $0x8] sm:$0xff]
      %v3136 = vld [vmem:[%s8 + $0x10] sm:$0xf]
      %v3137 = vld [vmem:[%s8 + $0x14] sm:$0xff]
      %v3138 = vld [vmem:[%s8 + $0x1c] sm:$0xff]
      %v3139 = vld [vmem:[%s8 + $0x24] sm:$0xf]
      %v3140 = vld [vmem:[%s8 + $0x28] sm:$0xff]
      %v3141 = vld [vmem:[%s8 + $0x30] sm:$0xff]
      %v3142 = vld [vmem:[%s8 + $0x38] sm:$0xf]
      %v3143 = vld [vmem:[%s8 + $0x3c] sm:$0xff]
      %v3144 = vld [vmem:[%s8 + $0x44] sm:$0xff]
      %v3145 = vld [vmem:[%s8 + $0x4c] sm:$0xf]
      %v3158 = vunpack.c.l.b16 %v3134
      %v3159 = vunpack.c.h.b16 %v3134
      %v3160 = vunpack.c.l.b16 %v3135
      %v3161 = vunpack.c.h.b16 %v3135
      %v3162 = vunpack.c.l.b16 %v3136
      %v3163 = vunpack.c.l.b16 %v3137
      %v3164 = vunpack.c.h.b16 %v3137
      %v3165 = vunpack.c.l.b16 %v3138
      %v3166 = vunpack.c.h.b16 %v3138
      %v3167 = vunpack.c.l.b16 %v3139
      %v3168 = vunpack.c.l.b16 %v3140
      %v3169 = vunpack.c.h.b16 %v3140
      %v3170 = vunpack.c.l.b16 %v3141
      %v3171 = vunpack.c.h.b16 %v3141
      %v3172 = vunpack.c.l.b16 %v3142
      %v3173 = vunpack.c.l.b16 %v3143
      %v3174 = vunpack.c.h.b16 %v3143
      %v3175 = vunpack.c.l.b16 %v3144
      %v3176 = vunpack.c.h.b16 %v3144
      %v3177 = vunpack.c.l.b16 %v3145
      %v3178 = vpack.c.b16 %v3163, %v3158
      %v3179 = vpack.c.b16 %v3164, %v3159
      %v3180 = vpack.c.b16 %v3165, %v3160
      %v3181 = vpack.c.b16 %v3166, %v3161
      %v3182 = vpack.c.b16 %v3167, %v3162
      %v3183 = vpack.c.b16 %v3173, %v3168
      %v3184 = vpack.c.b16 %v3174, %v3169
      %v3185 = vpack.c.b16 %v3175, %v3170
      %v3186 = vpack.c.b16 %v3176, %v3171
      %v3187 = vpack.c.b16 %v3177, %v3172
      %vm3196 = vcmask 523264
      %v3198 = vsel %vm3196, %v3182, 0
      %v3201 = vsel %vm3196, %v3187, 0
      %3203 = vmatprep.subr.bf16.mxu0 %v2616
      %3204 = vmatpush1.bf16.msra.mxu0 %v2615
      %3205 = vmatprep.subr.bf16.mxu0 %v2613
      %3206 = vmatpush1.bf16.msra.mxu0 %v2612
      %3207 = vmatprep.subr.bf16.mxu0 %v2610
      %3208 = vmatpush1.bf16.msra.mxu0 %v2609
      %3209 = vmatprep.subr.bf16.mxu0 %v2607
      %3210 = vmatpush1.bf16.msra.mxu0 %v2606
      %3211 = vmatprep.subr.bf16.mxu0 %v2532
      %3212 = vmatpush1.bf16.msra.mxu0 %v2531
      %3213 = vmatprep.subr.bf16.mxu0 %v2529
      %3214 = vmatpush1.bf16.msra.mxu0 %v2528
      %3215 = vmatprep.subr.bf16.mxu0 %v2526
      %3216 = vmatpush1.bf16.msra.mxu0 %v2525
      %3217 = vmatprep.subr.bf16.mxu0 %v2523
      %3218 = vmatpush1.bf16.msra.mxu0 %v2522
      %3219 = vmatprep.subr.bf16.mxu0 %v2784
      %3220 = vmatpush2.bf16.msra.mxu0 %v2783
      %3221 = vmatprep.subr.bf16.mxu0 %v2781
      %3222 = vmatpush2.bf16.msra.mxu0 %v2780
      %3223 = vmatprep.subr.bf16.mxu0 %v2778
      %3224 = vmatpush2.bf16.msra.mxu0 %v2777
      %3225 = vmatprep.subr.bf16.mxu0 %v2775
      %3226 = vmatpush2.bf16.msra.mxu0 %v2774
      %3227 = vmatprep.subr.bf16.mxu0 %v2700
      %3228 = vmatpush2.bf16.msra.mxu0 %v2699
      %3229 = vmatprep.subr.bf16.mxu0 %v2697
      %3230 = vmatpush2.bf16.msra.mxu0 %v2696
      %3231 = vmatprep.subr.bf16.mxu0 %v2694
      %3232 = vmatpush2.bf16.msra.mxu0 %v2693
      %3233 = vmatprep.subr.bf16.mxu0 %v2691
      %3234 = vmatpush2.bf16.msra.mxu0 %v2690
      %3235 = vmatprep.mubr.bf16.mxu0 %v3179
      %3236 = vmatmul.mubr.bf16.gmra.mxu0 %v3178
      %v3237 = vpop.f32.mrf.mxu0
      %v3238 = vadd.f32 0.0, %v3237
      %v3239 = vpop.f32.mrf.mxu0
      %v3240 = vadd.f32 0.0, %v3239
      %v3241 = vpop.f32.mrf.mxu0
      %v3242 = vadd.f32 0.0, %v3241
      %v3243 = vpop.f32.mrf.mxu0
      %v3244 = vadd.f32 0.0, %v3243
      %3245 = vmatprep.mubr.bf16.mxu0 %v3184
      %3246 = vmatmul.mubr.bf16.gmra.mxu0 %v3183
      %v3247 = vpop.f32.mrf.mxu0
      %v3248 = vadd.f32 0.0, %v3247
      %v3249 = vpop.f32.mrf.mxu0
      %v3250 = vadd.f32 0.0, %v3249
      %v3251 = vpop.f32.mrf.mxu0
      %v3252 = vadd.f32 0.0, %v3251
      %v3253 = vpop.f32.mrf.mxu0
      %v3254 = vadd.f32 0.0, %v3253
      %3255 = vdwg.mxu0
      %3256 = vmatprep.subr.bf16.mxu0 %v2880
      %3257 = vmatpush1.bf16.msra.mxu0 %v2879
      %3258 = vmatprep.subr.bf16.mxu0 %v2877
      %3259 = vmatpush1.bf16.msra.mxu0 %v2876
      %3260 = vmatprep.subr.bf16.mxu0 %v2874
      %3261 = vmatpush1.bf16.msra.mxu0 %v2873
      %3262 = vmatprep.subr.bf16.mxu0 %v2871
      %3263 = vmatpush1.bf16.msra.mxu0 %v2870
      %3264 = vmatprep.subr.bf16.mxu0 %v2796
      %3265 = vmatpush1.bf16.msra.mxu0 %v2795
      %3266 = vmatprep.subr.bf16.mxu0 %v2793
      %3267 = vmatpush1.bf16.msra.mxu0 %v2792
      %3268 = vmatprep.subr.bf16.mxu0 %v2790
      %3269 = vmatpush1.bf16.msra.mxu0 %v2789
      %3270 = vmatprep.subr.bf16.mxu0 %v2787
      %3271 = vmatpush1.bf16.msra.mxu0 %v2786
      %3272 = vmatprep.subr.bf16.mxu0 %v3048
      %3273 = vmatpush2.bf16.msra.mxu0 %v3047
      %3274 = vmatprep.subr.bf16.mxu0 %v3045
      %3275 = vmatpush2.bf16.msra.mxu0 %v3044
      %3276 = vmatprep.subr.bf16.mxu0 %v3042
      %3277 = vmatpush2.bf16.msra.mxu0 %v3041
      %3278 = vmatprep.subr.bf16.mxu0 %v3039
      %3279 = vmatpush2.bf16.msra.mxu0 %v3038
      %3280 = vmatprep.subr.bf16.mxu0 %v2964
      %3281 = vmatpush2.bf16.msra.mxu0 %v2963
      %3282 = vmatprep.subr.bf16.mxu0 %v2961
      %3283 = vmatpush2.bf16.msra.mxu0 %v2960
      %3284 = vmatprep.subr.bf16.mxu0 %v2958
      %3285 = vmatpush2.bf16.msra.mxu0 %v2957
      %3286 = vmatprep.subr.bf16.mxu0 %v2955
      %3287 = vmatpush2.bf16.msra.mxu0 %v2954
      %3288 = vmatprep.mubr.bf16.mxu0 %v3181
      %3289 = vmatmul.mubr.bf16.gmra.mxu0 %v3180
      %v3290 = vpop.f32.mrf.mxu0
      %v3291 = vadd.f32 %v3238, %v3290
      %v3292 = vpop.f32.mrf.mxu0
      %v3293 = vadd.f32 %v3240, %v3292
      %v3294 = vpop.f32.mrf.mxu0
      %v3295 = vadd.f32 %v3242, %v3294
      %v3296 = vpop.f32.mrf.mxu0
      %v3297 = vadd.f32 %v3244, %v3296
      %3298 = vmatprep.mubr.bf16.mxu0 %v3186
      %3299 = vmatmul.mubr.bf16.gmra.mxu0 %v3185
      %v3300 = vpop.f32.mrf.mxu0
      %v3301 = vadd.f32 %v3248, %v3300
      %v3302 = vpop.f32.mrf.mxu0
      %v3303 = vadd.f32 %v3250, %v3302
      %v3304 = vpop.f32.mrf.mxu0
      %v3305 = vadd.f32 %v3252, %v3304
      %v3306 = vpop.f32.mrf.mxu0
      %v3307 = vadd.f32 %v3254, %v3306
      %3308 = vdwg.mxu0
      %3309 = vmatprep.subr.bf16.mxu0 0
      %3310 = vmatpush1.bf16.msra.mxu0 0
      %3311 = vmatprep.subr.bf16.mxu0 0
      %3312 = vmatpush1.bf16.msra.mxu0 0
      %3313 = vmatprep.subr.bf16.mxu0 0
      %3314 = vmatpush1.bf16.msra.mxu0 0
      %3315 = vmatprep.subr.bf16.mxu0 0
      %3316 = vmatpush1.bf16.msra.mxu0 0
      %3317 = vmatprep.subr.bf16.mxu0 %v3132
      %3318 = vmatpush1.bf16.msra.mxu0 %v3131
      %3319 = vmatprep.subr.bf16.mxu0 %v3129
      %3320 = vmatpush1.bf16.msra.mxu0 %v3128
      %3321 = vmatprep.subr.bf16.mxu0 %v3126
      %3322 = vmatpush1.bf16.msra.mxu0 %v3125
      %3323 = vmatprep.subr.bf16.mxu0 %v3123
      %3324 = vmatpush1.bf16.msra.mxu0 %v3122
      %3325 = vmatprep.subr.bf16.mxu0 0
      %3326 = vmatpush2.bf16.msra.mxu0 0
      %3327 = vmatprep.subr.bf16.mxu0 0
      %3328 = vmatpush2.bf16.msra.mxu0 0
      %3329 = vmatprep.subr.bf16.mxu0 0
      %3330 = vmatpush2.bf16.msra.mxu0 0
      %3331 = vmatprep.subr.bf16.mxu0 0
      %3332 = vmatpush2.bf16.msra.mxu0 0
      %3333 = vmatprep.subr.bf16.mxu0 0
      %3334 = vmatpush2.bf16.msra.mxu0 0
      %3335 = vmatprep.subr.bf16.mxu0 0
      %3336 = vmatpush2.bf16.msra.mxu0 0
      %3337 = vmatprep.subr.bf16.mxu0 0
      %3338 = vmatpush2.bf16.msra.mxu0 0
      %3339 = vmatprep.subr.bf16.mxu0 0
      %3340 = vmatpush2.bf16.msra.mxu0 0
      %3341 = vmatprep.mubr.bf16.mxu0 0
      %3342 = vmatmul.mubr.bf16.gmra.mxu0 %v3198
      %v3343 = vpop.f32.mrf.mxu0
      %v3344 = vadd.f32 %v3291, %v3343
      %v3345 = vpop.f32.mrf.mxu0
      %v3346 = vadd.f32 %v3293, %v3345
      %v3347 = vpop.f32.mrf.mxu0
      %v3348 = vadd.f32 %v3295, %v3347
      %v3349 = vpop.f32.mrf.mxu0
      %v3350 = vadd.f32 %v3297, %v3349
      %3351 = vmatprep.mubr.bf16.mxu0 0
      %3352 = vmatmul.mubr.bf16.gmra.mxu0 %v3201
      %v3353 = vpop.f32.mrf.mxu0
      %v3354 = vadd.f32 %v3301, %v3353
      %v3355 = vpop.f32.mrf.mxu0
      %v3356 = vadd.f32 %v3303, %v3355
      %v3357 = vpop.f32.mrf.mxu0
      %v3358 = vadd.f32 %v3305, %v3357
      %v3359 = vpop.f32.mrf.mxu0
      %v3360 = vadd.f32 %v3307, %v3359
      %3361 = vdwg.mxu0
      %3362 = vmatprep.subr.bf16.mxu0 0
      %3363 = vmatpush1.bf16.msra.mxu0 %v2617
      %3364 = vmatprep.subr.bf16.mxu0 0
      %3365 = vmatpush1.bf16.msra.mxu0 %v2614
      %3366 = vmatprep.subr.bf16.mxu0 0
      %3367 = vmatpush1.bf16.msra.mxu0 %v2611
      %3368 = vmatprep.subr.bf16.mxu0 0
      %3369 = vmatpush1.bf16.msra.mxu0 %v2608
      %3370 = vmatprep.subr.bf16.mxu0 0
      %3371 = vmatpush1.bf16.msra.mxu0 %v2533
      %3372 = vmatprep.subr.bf16.mxu0 0
      %3373 = vmatpush1.bf16.msra.mxu0 %v2530
      %3374 = vmatprep.subr.bf16.mxu0 0
      %3375 = vmatpush1.bf16.msra.mxu0 %v2527
      %3376 = vmatprep.subr.bf16.mxu0 0
      %3377 = vmatpush1.bf16.msra.mxu0 %v2524
      %3378 = vmatprep.subr.bf16.mxu0 0
      %3379 = vmatpush2.bf16.msra.mxu0 %v2785
      %3380 = vmatprep.subr.bf16.mxu0 0
      %3381 = vmatpush2.bf16.msra.mxu0 %v2782
      %3382 = vmatprep.subr.bf16.mxu0 0
      %3383 = vmatpush2.bf16.msra.mxu0 %v2779
      %3384 = vmatprep.subr.bf16.mxu0 0
      %3385 = vmatpush2.bf16.msra.mxu0 %v2776
      %3386 = vmatprep.subr.bf16.mxu0 0
      %3387 = vmatpush2.bf16.msra.mxu0 %v2701
      %3388 = vmatprep.subr.bf16.mxu0 0
      %3389 = vmatpush2.bf16.msra.mxu0 %v2698
      %3390 = vmatprep.subr.bf16.mxu0 0
      %3391 = vmatpush2.bf16.msra.mxu0 %v2695
      %3392 = vmatprep.subr.bf16.mxu0 0
      %3393 = vmatpush2.bf16.msra.mxu0 %v2692
      %3394 = vmatprep.mubr.bf16.mxu0 %v3179
      %3395 = vmatmul.mubr.bf16.gmra.mxu0 %v3178
      %v3396 = vpop.f32.mrf.mxu0
      %v3397 = vadd.f32 0.0, %v3396
      %v3398 = vpop.f32.mrf.mxu0
      %v3399 = vpop.f32.mrf.mxu0
      %v3400 = vadd.f32 0.0, %v3399
      %v3401 = vpop.f32.mrf.mxu0
      %3402 = vmatprep.mubr.bf16.mxu0 %v3184
      %3403 = vmatmul.mubr.bf16.gmra.mxu0 %v3183
      %v3404 = vpop.f32.mrf.mxu0
      %v3405 = vadd.f32 0.0, %v3404
      %v3406 = vpop.f32.mrf.mxu0
      %v3407 = vpop.f32.mrf.mxu0
      %v3408 = vadd.f32 0.0, %v3407
      %v3409 = vpop.f32.mrf.mxu0
      %3410 = vdwg.mxu0
      %3411 = vmatprep.subr.bf16.mxu0 0
      %3412 = vmatpush1.bf16.msra.mxu0 %v2881
      %3413 = vmatprep.subr.bf16.mxu0 0
      %3414 = vmatpush1.bf16.msra.mxu0 %v2878
      %3415 = vmatprep.subr.bf16.mxu0 0
      %3416 = vmatpush1.bf16.msra.mxu0 %v2875
      %3417 = vmatprep.subr.bf16.mxu0 0
      %3418 = vmatpush1.bf16.msra.mxu0 %v2872
      %3419 = vmatprep.subr.bf16.mxu0 0
      %3420 = vmatpush1.bf16.msra.mxu0 %v2797
      %3421 = vmatprep.subr.bf16.mxu0 0
      %3422 = vmatpush1.bf16.msra.mxu0 %v2794
      %3423 = vmatprep.subr.bf16.mxu0 0
      %3424 = vmatpush1.bf16.msra.mxu0 %v2791
      %3425 = vmatprep.subr.bf16.mxu0 0
      %3426 = vmatpush1.bf16.msra.mxu0 %v2788
      %3427 = vmatprep.subr.bf16.mxu0 0
      %3428 = vmatpush2.bf16.msra.mxu0 %v3049
      %3429 = vmatprep.subr.bf16.mxu0 0
      %3430 = vmatpush2.bf16.msra.mxu0 %v3046
      %3431 = vmatprep.subr.bf16.mxu0 0
      %3432 = vmatpush2.bf16.msra.mxu0 %v3043
      %3433 = vmatprep.subr.bf16.mxu0 0
      %3434 = vmatpush2.bf16.msra.mxu0 %v3040
      %3435 = vmatprep.subr.bf16.mxu0 0
      %3436 = vmatpush2.bf16.msra.mxu0 %v2965
      %3437 = vmatprep.subr.bf16.mxu0 0
      %3438 = vmatpush2.bf16.msra.mxu0 %v2962
      %3439 = vmatprep.subr.bf16.mxu0 0
      %3440 = vmatpush2.bf16.msra.mxu0 %v2959
      %3441 = vmatprep.subr.bf16.mxu0 0
      %3442 = vmatpush2.bf16.msra.mxu0 %v2956
      %3443 = vmatprep.mubr.bf16.mxu0 %v3181
      %3444 = vmatmul.mubr.bf16.gmra.mxu0 %v3180
      %v3445 = vpop.f32.mrf.mxu0
      %v3446 = vadd.f32 %v3397, %v3445
      %v3447 = vpop.f32.mrf.mxu0
      %v3448 = vpop.f32.mrf.mxu0
      %v3449 = vadd.f32 %v3400, %v3448
      %v3450 = vpop.f32.mrf.mxu0
      %3451 = vmatprep.mubr.bf16.mxu0 %v3186
      %3452 = vmatmul.mubr.bf16.gmra.mxu0 %v3185
      %v3453 = vpop.f32.mrf.mxu0
      %v3454 = vadd.f32 %v3405, %v3453
      %v3455 = vpop.f32.mrf.mxu0
      %v3456 = vpop.f32.mrf.mxu0
      %v3457 = vadd.f32 %v3408, %v3456
      %v3458 = vpop.f32.mrf.mxu0
      %3459 = vdwg.mxu0
      %3460 = vmatprep.subr.bf16.mxu0 0
      %3461 = vmatpush1.bf16.msra.mxu0 0
      %3462 = vmatprep.subr.bf16.mxu0 0
      %3463 = vmatpush1.bf16.msra.mxu0 0
      %3464 = vmatprep.subr.bf16.mxu0 0
      %3465 = vmatpush1.bf16.msra.mxu0 0
      %3466 = vmatprep.subr.bf16.mxu0 0
      %3467 = vmatpush1.bf16.msra.mxu0 0
      %3468 = vmatprep.subr.bf16.mxu0 0
      %3469 = vmatpush1.bf16.msra.mxu0 %v3133
      %3470 = vmatprep.subr.bf16.mxu0 0
      %3471 = vmatpush1.bf16.msra.mxu0 %v3130
      %3472 = vmatprep.subr.bf16.mxu0 0
      %3473 = vmatpush1.bf16.msra.mxu0 %v3127
      %3474 = vmatprep.subr.bf16.mxu0 0
      %3475 = vmatpush1.bf16.msra.mxu0 %v3124
      %3476 = vmatprep.subr.bf16.mxu0 0
      %3477 = vmatpush2.bf16.msra.mxu0 0
      %3478 = vmatprep.subr.bf16.mxu0 0
      %3479 = vmatpush2.bf16.msra.mxu0 0
      %3480 = vmatprep.subr.bf16.mxu0 0
      %3481 = vmatpush2.bf16.msra.mxu0 0
      %3482 = vmatprep.subr.bf16.mxu0 0
      %3483 = vmatpush2.bf16.msra.mxu0 0
      %3484 = vmatprep.subr.bf16.mxu0 0
      %3485 = vmatpush2.bf16.msra.mxu0 0
      %3486 = vmatprep.subr.bf16.mxu0 0
      %3487 = vmatpush2.bf16.msra.mxu0 0
      %3488 = vmatprep.subr.bf16.mxu0 0
      %3489 = vmatpush2.bf16.msra.mxu0 0
      %3490 = vmatprep.subr.bf16.mxu0 0
      %3491 = vmatpush2.bf16.msra.mxu0 0
      %3492 = vmatprep.mubr.bf16.mxu0 0
      %3493 = vmatmul.mubr.bf16.gmra.mxu0 %v3198
      %v3494 = vpop.f32.mrf.mxu0
      %v3495 = vadd.f32 %v3446, %v3494
      %v3496 = vpop.f32.mrf.mxu0
      %v3497 = vpop.f32.mrf.mxu0
      %v3498 = vadd.f32 %v3449, %v3497
      %v3499 = vpop.f32.mrf.mxu0
      %3500 = vmatprep.mubr.bf16.mxu0 0
      %3501 = vmatmul.mubr.bf16.gmra.mxu0 %v3201
      %v3502 = vpop.f32.mrf.mxu0
      %v3503 = vadd.f32 %v3454, %v3502
      %v3504 = vpop.f32.mrf.mxu0
      %v3505 = vpop.f32.mrf.mxu0
      %v3506 = vadd.f32 %v3457, %v3505
      %v3507 = vpop.f32.mrf.mxu0
      %3508 = vdwg.mxu0
      %v3509 = vld [vmem:[%s9] sm:$0xff]
      %v3510 = vld [vmem:[%s9 + $0x8] sm:$0xff]
      %v3511 = vld [vmem:[%s9 + $0x10] sm:$0xff]
      %v3512 = vld [vmem:[%s9 + $0x18] sm:$0xff]
      %v3513 = vld [vmem:[%s10] sm:$0xff]
      %v3514 = vld [vmem:[%s10 + $0x8] sm:$0xff]
      %v3515 = vld [vmem:[%s10 + $0x10] sm:$0xff]
      %v3516 = vld [vmem:[%s10 + $0x18] sm:$0xff]
      %v3517 = vadd.f32 %v3344, %v3348
      %v3518 = vadd.f32 %v3517, %v3354
      %v3519 = vadd.f32 %v3518, %v3358
      %v3520 = vrot.slane %v3519, 4
      %v3521 = vadd.f32 %v3519, %v3520
      %v3522 = vrot.slane %v3521, 2
      %v3523 = vadd.f32 %v3521, %v3522
      %v3524 = vrot.slane %v3523, 1
      %v3525 = vadd.f32 %v3523, %v3524
      %v3526 = vadd.f32 %v3346, %v3350
      %v3527 = vadd.f32 %v3526, %v3356
      %v3528 = vadd.f32 %v3527, %v3360
      %v3529 = vrot.slane %v3528, 4
      %v3530 = vadd.f32 %v3528, %v3529
      %v3531 = vrot.slane %v3530, 2
      %v3532 = vadd.f32 %v3530, %v3531
      %v3533 = vrot.slane %v3532, 1
      %v3534 = vadd.f32 %v3532, %v3533
      %v3535 = vadd.f32 %v3495, %v3498
      %v3536 = vadd.f32 %v3535, %v3503
      %v3537 = vadd.f32 %v3536, %v3506
      %v3538 = vrot.slane %v3537, 4
      %v3539 = vadd.f32 %v3537, %v3538
      %v3540 = vrot.slane %v3539, 2
      %v3541 = vadd.f32 %v3539, %v3540
      %v3542 = vrot.slane %v3541, 1
      %v3543 = vadd.f32 %v3541, %v3542
      %v3544 = vmul.f32 %v3525, 0.03125
      %v3545 = vmul.f32 %v3534, 0.03125
      %v3546 = vmul.f32 %v3543, 0.03125
      %v3547 = vmul.f32 %v3344, %v3344
      %v3548 = vmul.f32 %v3346, %v3346
      %v3549 = vmul.f32 %v3495, %v3495
      %v3550 = vmul.f32 %v3348, %v3348
      %v3551 = vmul.f32 %v3350, %v3350
      %v3552 = vmul.f32 %v3498, %v3498
      %v3553 = vmul.f32 %v3354, %v3354
      %v3554 = vmul.f32 %v3356, %v3356
      %v3555 = vmul.f32 %v3503, %v3503
      %v3556 = vmul.f32 %v3358, %v3358
      %v3557 = vmul.f32 %v3360, %v3360
      %v3558 = vmul.f32 %v3506, %v3506
      %v3559 = vadd.f32 %v3547, %v3550
      %v3560 = vadd.f32 %v3559, %v3553
      %v3561 = vadd.f32 %v3560, %v3556
      %v3562 = vrot.slane %v3561, 4
      %v3563 = vadd.f32 %v3561, %v3562
      %v3564 = vrot.slane %v3563, 2
      %v3565 = vadd.f32 %v3563, %v3564
      %v3566 = vrot.slane %v3565, 1
      %v3567 = vadd.f32 %v3565, %v3566
      %v3568 = vadd.f32 %v3548, %v3551
      %v3569 = vadd.f32 %v3568, %v3554
      %v3570 = vadd.f32 %v3569, %v3557
      %v3571 = vrot.slane %v3570, 4
      %v3572 = vadd.f32 %v3570, %v3571
      %v3573 = vrot.slane %v3572, 2
      %v3574 = vadd.f32 %v3572, %v3573
      %v3575 = vrot.slane %v3574, 1
      %v3576 = vadd.f32 %v3574, %v3575
      %v3577 = vadd.f32 %v3549, %v3552
      %v3578 = vadd.f32 %v3577, %v3555
      %v3579 = vadd.f32 %v3578, %v3558
      %v3580 = vrot.slane %v3579, 4
      %v3581 = vadd.f32 %v3579, %v3580
      %v3582 = vrot.slane %v3581, 2
      %v3583 = vadd.f32 %v3581, %v3582
      %v3584 = vrot.slane %v3583, 1
      %v3585 = vadd.f32 %v3583, %v3584
      %v3586 = vmul.f32 %v3567, 0.03125
      %v3587 = vmul.f32 %v3576, 0.03125
      %v3588 = vmul.f32 %v3585, 0.03125
      %v3589 = vmul.f32 %v3544, %v3544
      %v3590 = vmul.f32 %v3545, %v3545
      %v3591 = vmul.f32 %v3546, %v3546
      %v3592 = vsub.f32 %v3586, %v3589
      %v3593 = vsub.f32 %v3587, %v3590
      %v3594 = vsub.f32 %v3588, %v3591
      %v3595 = vmax.f32 %v3592, 0.0
      %v3596 = vmax.f32 %v3593, 0.0
      %v3597 = vmax.f32 %v3594, 0.0
      %v3598 = vsub.f32 %v3344, %v3544
      %v3599 = vsub.f32 %v3346, %v3545
      %v3600 = vsub.f32 %v3495, %v3546
      %v3601 = vsub.f32 %v3348, %v3544
      %v3602 = vsub.f32 %v3350, %v3545
      %v3603 = vsub.f32 %v3498, %v3546
      %v3604 = vsub.f32 %v3354, %v3544
      %v3605 = vsub.f32 %v3356, %v3545
      %v3606 = vsub.f32 %v3503, %v3546
      %v3607 = vsub.f32 %v3358, %v3544
      %v3608 = vsub.f32 %v3360, %v3545
      %v3609 = vsub.f32 %v3506, %v3546
      %v3610 = vadd.f32 %v3595, 1e-06
      %v3611 = vadd.f32 %v3596, 1e-06
      %v3612 = vadd.f32 %v3597, 1e-06
      %v3613 = vrsqrt.pop %v3610
      %v3614 = vrsqrt.pop %v3611
      %v3615 = vrsqrt.pop %v3612
      %v3616 = vmul.f32 %v3598, %v3613
      %v3617 = vmul.f32 %v3599, %v3614
      %v3618 = vmul.f32 %v3600, %v3615
      %v3619 = vmul.f32 %v3601, %v3613
      %v3620 = vmul.f32 %v3602, %v3614
      %v3621 = vmul.f32 %v3603, %v3615
      %v3622 = vmul.f32 %v3604, %v3613
      %v3623 = vmul.f32 %v3605, %v3614
      %v3624 = vmul.f32 %v3606, %v3615
      %v3625 = vmul.f32 %v3607, %v3613
      %v3626 = vmul.f32 %v3608, %v3614
      %v3627 = vmul.f32 %v3609, %v3615
      %3629 = vset.pattern.permute.xlu0 0
      %3630 = vperm.xlu0 %3629, %v3509
      %v3631 = vpop.permute.xlu0 %3630
      %3634 = vset.pattern.permute.xlu0 0
      %3635 = vperm.xlu0 %3634, %v3510
      %v3636 = vpop.permute.xlu0 %3635
      %3639 = vset.pattern.permute.xlu0 0
      %3640 = vperm.xlu0 %3639, %v3511
      %v3641 = vpop.permute.xlu0 %3640
      %3644 = vset.pattern.permute.xlu0 0
      %3645 = vperm.xlu0 %3644, %v3512
      %v3646 = vpop.permute.xlu0 %3645
      %v3648 = vmul.f32 %v3631, %v3616
      %v3649 = vmul.f32 %v3631, %v3617
      %v3650 = vmul.f32 %v3631, %v3618
      %v3651 = vmul.f32 %v3636, %v3619
      %v3652 = vmul.f32 %v3636, %v3620
      %v3653 = vmul.f32 %v3636, %v3621
      %v3654 = vmul.f32 %v3641, %v3622
      %v3655 = vmul.f32 %v3641, %v3623
      %v3656 = vmul.f32 %v3641, %v3624
      %v3657 = vmul.f32 %v3646, %v3625
      %v3658 = vmul.f32 %v3646, %v3626
      %v3659 = vmul.f32 %v3646, %v3627
      %3661 = vset.pattern.permute.xlu0 0
      %3662 = vperm.xlu0 %3661, %v3513
      %v3663 = vpop.permute.xlu0 %3662
      %3666 = vset.pattern.permute.xlu0 0
      %3667 = vperm.xlu0 %3666, %v3514
      %v3668 = vpop.permute.xlu0 %3667
      %3671 = vset.pattern.permute.xlu0 0
      %3672 = vperm.xlu0 %3671, %v3515
      %v3673 = vpop.permute.xlu0 %3672
      %3676 = vset.pattern.permute.xlu0 0
      %3677 = vperm.xlu0 %3676, %v3516
      %v3678 = vpop.permute.xlu0 %3677
      %v3680 = vadd.f32 %v3648, %v3663
      %v3681 = vadd.f32 %v3649, %v3663
      %v3682 = vadd.f32 %v3650, %v3663
      %v3683 = vadd.f32 %v3651, %v3668
      %v3684 = vadd.f32 %v3652, %v3668
      %v3685 = vadd.f32 %v3653, %v3668
      %v3686 = vadd.f32 %v3654, %v3673
      %v3687 = vadd.f32 %v3655, %v3673
      %v3688 = vadd.f32 %v3656, %v3673
      %v3689 = vadd.f32 %v3657, %v3678
      %v3690 = vadd.f32 %v3658, %v3678
      %v3691 = vadd.f32 %v3659, %v3678
      %v3692 = vmul.f32 %v3680, 0.5
      %v3693 = vmul.f32 %v3681, 0.5
      %v3694 = vmul.f32 %v3682, 0.5
      %v3695 = vmul.f32 %v3683, 0.5
      %v3696 = vmul.f32 %v3684, 0.5
      %v3697 = vmul.f32 %v3685, 0.5
      %v3698 = vmul.f32 %v3686, 0.5
      %v3699 = vmul.f32 %v3687, 0.5
      %v3700 = vmul.f32 %v3688, 0.5
      %v3701 = vmul.f32 %v3689, 0.5
      %v3702 = vmul.f32 %v3690, 0.5
      %v3703 = vmul.f32 %v3691, 0.5
      %v3704 = vmul.f32 %v3680, %v3680
      %v3705 = vmul.f32 %v3681, %v3681
      %v3706 = vmul.f32 %v3682, %v3682
      %v3707 = vmul.f32 %v3683, %v3683
      %v3708 = vmul.f32 %v3684, %v3684
      %v3709 = vmul.f32 %v3685, %v3685
      %v3710 = vmul.f32 %v3686, %v3686
      %v3711 = vmul.f32 %v3687, %v3687
      %v3712 = vmul.f32 %v3688, %v3688
      %v3713 = vmul.f32 %v3689, %v3689
      %v3714 = vmul.f32 %v3690, %v3690
      %v3715 = vmul.f32 %v3691, %v3691
      %v3716 = vmul.f32 %v3704, %v3680
      %v3717 = vmul.f32 %v3705, %v3681
      %v3718 = vmul.f32 %v3706, %v3682
      %v3719 = vmul.f32 %v3707, %v3683
      %v3720 = vmul.f32 %v3708, %v3684
      %v3721 = vmul.f32 %v3709, %v3685
      %v3722 = vmul.f32 %v3710, %v3686
      %v3723 = vmul.f32 %v3711, %v3687
      %v3724 = vmul.f32 %v3712, %v3688
      %v3725 = vmul.f32 %v3713, %v3689
      %v3726 = vmul.f32 %v3714, %v3690
      %v3727 = vmul.f32 %v3715, %v3691
      %v3728 = vmul.f32 %v3716, 0.044715
      %v3729 = vmul.f32 %v3717, 0.044715
      %v3730 = vmul.f32 %v3718, 0.044715
      %v3731 = vmul.f32 %v3719, 0.044715
      %v3732 = vmul.f32 %v3720, 0.044715
      %v3733 = vmul.f32 %v3721, 0.044715
      %v3734 = vmul.f32 %v3722, 0.044715
      %v3735 = vmul.f32 %v3723, 0.044715
      %v3736 = vmul.f32 %v3724, 0.044715
      %v3737 = vmul.f32 %v3725, 0.044715
      %v3738 = vmul.f32 %v3726, 0.044715
      %v3739 = vmul.f32 %v3727, 0.044715
      %v3740 = vadd.f32 %v3680, %v3728
      %v3741 = vadd.f32 %v3681, %v3729
      %v3742 = vadd.f32 %v3682, %v3730
      %v3743 = vadd.f32 %v3683, %v3731
      %v3744 = vadd.f32 %v3684, %v3732
      %v3745 = vadd.f32 %v3685, %v3733
      %v3746 = vadd.f32 %v3686, %v3734
      %v3747 = vadd.f32 %v3687, %v3735
      %v3748 = vadd.f32 %v3688, %v3736
      %v3749 = vadd.f32 %v3689, %v3737
      %v3750 = vadd.f32 %v3690, %v3738
      %v3751 = vadd.f32 %v3691, %v3739
      %v3752 = vmul.f32 %v3740, 0.7978846
      %v3753 = vmul.f32 %v3741, 0.7978846
      %v3754 = vmul.f32 %v3742, 0.7978846
      %v3755 = vmul.f32 %v3743, 0.7978846
      %v3756 = vmul.f32 %v3744, 0.7978846
      %v3757 = vmul.f32 %v3745, 0.7978846
      %v3758 = vmul.f32 %v3746, 0.7978846
      %v3759 = vmul.f32 %v3747, 0.7978846
      %v3760 = vmul.f32 %v3748, 0.7978846
      %v3761 = vmul.f32 %v3749, 0.7978846
      %v3762 = vmul.f32 %v3750, 0.7978846
      %v3763 = vmul.f32 %v3751, 0.7978846
      %v3764 = vtanh.pop %v3752
      %v3765 = vtanh.pop %v3753
      %v3766 = vtanh.pop %v3754
      %v3767 = vtanh.pop %v3755
      %v3768 = vtanh.pop %v3756
      %v3769 = vtanh.pop %v3757
      %v3770 = vtanh.pop %v3758
      %v3771 = vtanh.pop %v3759
      %v3772 = vtanh.pop %v3760
      %v3773 = vtanh.pop %v3761
      %v3774 = vtanh.pop %v3762
      %v3775 = vtanh.pop %v3763
      %v3776 = vadd.f32 %v3764, 1.0
      %v3777 = vadd.f32 %v3765, 1.0
      %v3778 = vadd.f32 %v3766, 1.0
      %v3779 = vadd.f32 %v3767, 1.0
      %v3780 = vadd.f32 %v3768, 1.0
      %v3781 = vadd.f32 %v3769, 1.0
      %v3782 = vadd.f32 %v3770, 1.0
      %v3783 = vadd.f32 %v3771, 1.0
      %v3784 = vadd.f32 %v3772, 1.0
      %v3785 = vadd.f32 %v3773, 1.0
      %v3786 = vadd.f32 %v3774, 1.0
      %v3787 = vadd.f32 %v3775, 1.0
      %v3788 = vmul.f32 %v3692, %v3776
      %v3789 = vmul.f32 %v3693, %v3777
      %v3790 = vmul.f32 %v3694, %v3778
      %v3791 = vmul.f32 %v3695, %v3779
      %v3792 = vmul.f32 %v3696, %v3780
      %v3793 = vmul.f32 %v3697, %v3781
      %v3794 = vmul.f32 %v3698, %v3782
      %v3795 = vmul.f32 %v3699, %v3783
      %v3796 = vmul.f32 %v3700, %v3784
      %v3797 = vmul.f32 %v3701, %v3785
      %v3798 = vmul.f32 %v3702, %v3786
      %v3799 = vmul.f32 %v3703, %v3787
      %v3800 = vmul.f32 %v3788, %v1164
      %v3801 = vmul.f32 %v3789, %v1168
      %v3802 = vmul.f32 %v3790, %v1172
      %v3803 = vmul.f32 %v3791, %v1164
      %v3804 = vmul.f32 %v3792, %v1168
      %v3805 = vmul.f32 %v3793, %v1172
      %v3806 = vmul.f32 %v3794, %v1164
      %v3807 = vmul.f32 %v3795, %v1168
      %v3808 = vmul.f32 %v3796, %v1172
      %v3809 = vmul.f32 %v3797, %v1164
      %v3810 = vmul.f32 %v3798, %v1168
      %v3811 = vmul.f32 %v3799, %v1172
      %3812 = vrot.lane.b32.xlu0 %v3800, 19
      %v3813 = vpop.permute.xlu0 %3812
      %3814 = vrot.lane.b32.xlu0 %v3803, 19
      %v3815 = vpop.permute.xlu0 %3814
      %3816 = vrot.lane.b32.xlu0 %v3806, 19
      %v3817 = vpop.permute.xlu0 %3816
      %3818 = vrot.lane.b32.xlu0 %v3809, 19
      %v3819 = vpop.permute.xlu0 %3818
      %3820 = vrot.lane.b32.xlu0 %v3801, 19
      %v3821 = vpop.permute.xlu0 %3820
      %3822 = vrot.lane.b32.xlu0 %v3804, 19
      %v3823 = vpop.permute.xlu0 %3822
      %3824 = vrot.lane.b32.xlu0 %v3807, 19
      %v3825 = vpop.permute.xlu0 %3824
      %3826 = vrot.lane.b32.xlu0 %v3810, 19
      %v3827 = vpop.permute.xlu0 %3826
      %3828 = vrot.lane.b32.xlu0 %v3802, 19
      %v3829 = vpop.permute.xlu0 %3828
      %3830 = vrot.lane.b32.xlu0 %v3805, 19
      %v3831 = vpop.permute.xlu0 %3830
      %3832 = vrot.lane.b32.xlu0 %v3808, 19
      %v3833 = vpop.permute.xlu0 %3832
      %3834 = vrot.lane.b32.xlu0 %v3811, 19
      %v3835 = vpop.permute.xlu0 %3834
      %v3836 = vsel %vm571, %v3821, %v3829
      %v3837 = vsel %vm571, %v3823, %v3831
      %v3838 = vsel %vm571, %v3825, %v3833
      %v3839 = vsel %vm571, %v3827, %v3835
      %v3840 = vsel %vm571, %v3813, %v3821
      %v3841 = vsel %vm571, %v3815, %v3823
      %v3842 = vsel %vm571, %v3817, %v3825
      %v3843 = vsel %vm571, %v3819, %v3827
      %v3844 = vsel %vm571, %v3829, %v3813
      %v3845 = vsel %vm571, %v3831, %v3815
      %v3846 = vsel %vm571, %v3833, %v3817
      %v3847 = vsel %vm571, %v3835, %v3819
      %v3848 = vpack.c.bf16 %v3845, %v3844
      %v3849 = vpack.c.bf16 %v3841, %v3840
      %v3850 = vpack.c.bf16 %v3837, %v3836
      %v3851 = vpack.c.bf16 %v3847, %v3846
      %v3852 = vpack.c.bf16 %v3843, %v3842
      %v3853 = vpack.c.bf16 %v3839, %v3838
      %3854 = vrot.lane.b32.xlu0 %v3800, 18
      %v3855 = vpop.permute.xlu0 %3854
      %3856 = vrot.lane.b32.xlu0 %v3803, 18
      %v3857 = vpop.permute.xlu0 %3856
      %3858 = vrot.lane.b32.xlu0 %v3806, 18
      %v3859 = vpop.permute.xlu0 %3858
      %3860 = vrot.lane.b32.xlu0 %v3809, 18
      %v3861 = vpop.permute.xlu0 %3860
      %3862 = vrot.lane.b32.xlu0 %v3801, 18
      %v3863 = vpop.permute.xlu0 %3862
      %3864 = vrot.lane.b32.xlu0 %v3804, 18
      %v3865 = vpop.permute.xlu0 %3864
      %3866 = vrot.lane.b32.xlu0 %v3807, 18
      %v3867 = vpop.permute.xlu0 %3866
      %3868 = vrot.lane.b32.xlu0 %v3810, 18
      %v3869 = vpop.permute.xlu0 %3868
      %3870 = vrot.lane.b32.xlu0 %v3802, 18
      %v3871 = vpop.permute.xlu0 %3870
      %3872 = vrot.lane.b32.xlu0 %v3805, 18
      %v3873 = vpop.permute.xlu0 %3872
      %3874 = vrot.lane.b32.xlu0 %v3808, 18
      %v3875 = vpop.permute.xlu0 %3874
      %3876 = vrot.lane.b32.xlu0 %v3811, 18
      %v3877 = vpop.permute.xlu0 %3876
      %v3878 = vsel %vm593, %v3863, %v3871
      %v3879 = vsel %vm593, %v3865, %v3873
      %v3880 = vsel %vm593, %v3867, %v3875
      %v3881 = vsel %vm593, %v3869, %v3877
      %v3882 = vsel %vm593, %v3855, %v3863
      %v3883 = vsel %vm593, %v3857, %v3865
      %v3884 = vsel %vm593, %v3859, %v3867
      %v3885 = vsel %vm593, %v3861, %v3869
      %v3886 = vsel %vm593, %v3871, %v3855
      %v3887 = vsel %vm593, %v3873, %v3857
      %v3888 = vsel %vm593, %v3875, %v3859
      %v3889 = vsel %vm593, %v3877, %v3861
      %v3890 = vpack.c.bf16 %v3887, %v3886
      %v3891 = vpack.c.bf16 %v3883, %v3882
      %v3892 = vpack.c.bf16 %v3879, %v3878
      %v3893 = vpack.c.bf16 %v3889, %v3888
      %v3894 = vpack.c.bf16 %v3885, %v3884
      %v3895 = vpack.c.bf16 %v3881, %v3880
      %3896 = vrot.lane.b32.xlu0 %v3800, 17
      %v3897 = vpop.permute.xlu0 %3896
      %3898 = vrot.lane.b32.xlu0 %v3803, 17
      %v3899 = vpop.permute.xlu0 %3898
      %3900 = vrot.lane.b32.xlu0 %v3806, 17
      %v3901 = vpop.permute.xlu0 %3900
      %3902 = vrot.lane.b32.xlu0 %v3809, 17
      %v3903 = vpop.permute.xlu0 %3902
      %3904 = vrot.lane.b32.xlu0 %v3801, 17
      %v3905 = vpop.permute.xlu0 %3904
      %3906 = vrot.lane.b32.xlu0 %v3804, 17
      %v3907 = vpop.permute.xlu0 %3906
      %3908 = vrot.lane.b32.xlu0 %v3807, 17
      %v3909 = vpop.permute.xlu0 %3908
      %3910 = vrot.lane.b32.xlu0 %v3810, 17
      %v3911 = vpop.permute.xlu0 %3910
      %3912 = vrot.lane.b32.xlu0 %v3802, 17
      %v3913 = vpop.permute.xlu0 %3912
      %3914 = vrot.lane.b32.xlu0 %v3805, 17
      %v3915 = vpop.permute.xlu0 %3914
      %3916 = vrot.lane.b32.xlu0 %v3808, 17
      %v3917 = vpop.permute.xlu0 %3916
      %3918 = vrot.lane.b32.xlu0 %v3811, 17
      %v3919 = vpop.permute.xlu0 %3918
      %v3920 = vsel %vm615, %v3905, %v3913
      %v3921 = vsel %vm615, %v3907, %v3915
      %v3922 = vsel %vm615, %v3909, %v3917
      %v3923 = vsel %vm615, %v3911, %v3919
      %v3924 = vsel %vm615, %v3897, %v3905
      %v3925 = vsel %vm615, %v3899, %v3907
      %v3926 = vsel %vm615, %v3901, %v3909
      %v3927 = vsel %vm615, %v3903, %v3911
      %v3928 = vsel %vm615, %v3913, %v3897
      %v3929 = vsel %vm615, %v3915, %v3899
      %v3930 = vsel %vm615, %v3917, %v3901
      %v3931 = vsel %vm615, %v3919, %v3903
      %v3932 = vpack.c.bf16 %v3929, %v3928
      %v3933 = vpack.c.bf16 %v3925, %v3924
      %v3934 = vpack.c.bf16 %v3921, %v3920
      %v3935 = vpack.c.bf16 %v3931, %v3930
      %v3936 = vpack.c.bf16 %v3927, %v3926
      %v3937 = vpack.c.bf16 %v3923, %v3922
      %3938 = vrot.lane.b32.xlu0 %v3800, 1
      %v3939 = vpop.permute.xlu0 %3938
      %3940 = vrot.lane.b32.xlu0 %v3803, 1
      %v3941 = vpop.permute.xlu0 %3940
      %3942 = vrot.lane.b32.xlu0 %v3806, 1
      %v3943 = vpop.permute.xlu0 %3942
      %3944 = vrot.lane.b32.xlu0 %v3809, 1
      %v3945 = vpop.permute.xlu0 %3944
      %3946 = vrot.lane.b32.xlu0 %v3801, 1
      %v3947 = vpop.permute.xlu0 %3946
      %3948 = vrot.lane.b32.xlu0 %v3804, 1
      %v3949 = vpop.permute.xlu0 %3948
      %3950 = vrot.lane.b32.xlu0 %v3807, 1
      %v3951 = vpop.permute.xlu0 %3950
      %3952 = vrot.lane.b32.xlu0 %v3810, 1
      %v3953 = vpop.permute.xlu0 %3952
      %3954 = vrot.lane.b32.xlu0 %v3802, 1
      %v3955 = vpop.permute.xlu0 %3954
      %3956 = vrot.lane.b32.xlu0 %v3805, 1
      %v3957 = vpop.permute.xlu0 %3956
      %3958 = vrot.lane.b32.xlu0 %v3808, 1
      %v3959 = vpop.permute.xlu0 %3958
      %3960 = vrot.lane.b32.xlu0 %v3811, 1
      %v3961 = vpop.permute.xlu0 %3960
      %v3962 = vsel %vm637, %v3947, %v3955
      %v3963 = vsel %vm637, %v3949, %v3957
      %v3964 = vsel %vm637, %v3951, %v3959
      %v3965 = vsel %vm637, %v3953, %v3961
      %v3966 = vsel %vm637, %v3939, %v3947
      %v3967 = vsel %vm637, %v3941, %v3949
      %v3968 = vsel %vm637, %v3943, %v3951
      %v3969 = vsel %vm637, %v3945, %v3953
      %v3970 = vsel %vm637, %v3955, %v3939
      %v3971 = vsel %vm637, %v3957, %v3941
      %v3972 = vsel %vm637, %v3959, %v3943
      %v3973 = vsel %vm637, %v3961, %v3945
      %v3974 = vpack.c.bf16 %v3971, %v3970
      %v3975 = vpack.c.bf16 %v3967, %v3966
      %v3976 = vpack.c.bf16 %v3963, %v3962
      %v3977 = vpack.c.bf16 %v3973, %v3972
      %v3978 = vpack.c.bf16 %v3969, %v3968
      %v3979 = vpack.c.bf16 %v3965, %v3964
      %v3980 = vpack.c.bf16 %v3803, %v3800
      %v3981 = vpack.c.bf16 %v3804, %v3801
      %v3982 = vpack.c.bf16 %v3805, %v3802
      %v3983 = vpack.c.bf16 %v3809, %v3806
      %v3984 = vpack.c.bf16 %v3810, %v3807
      %v3985 = vpack.c.bf16 %v3811, %v3808
      %3986 = vrot.lane.b32.xlu0 %v3800, 127
      %v3987 = vpop.permute.xlu0 %3986
      %3988 = vrot.lane.b32.xlu0 %v3803, 127
      %v3989 = vpop.permute.xlu0 %3988
      %3990 = vrot.lane.b32.xlu0 %v3806, 127
      %v3991 = vpop.permute.xlu0 %3990
      %3992 = vrot.lane.b32.xlu0 %v3809, 127
      %v3993 = vpop.permute.xlu0 %3992
      %3994 = vrot.lane.b32.xlu0 %v3801, 127
      %v3995 = vpop.permute.xlu0 %3994
      %3996 = vrot.lane.b32.xlu0 %v3804, 127
      %v3997 = vpop.permute.xlu0 %3996
      %3998 = vrot.lane.b32.xlu0 %v3807, 127
      %v3999 = vpop.permute.xlu0 %3998
      %4000 = vrot.lane.b32.xlu0 %v3810, 127
      %v4001 = vpop.permute.xlu0 %4000
      %4002 = vrot.lane.b32.xlu0 %v3802, 127
      %v4003 = vpop.permute.xlu0 %4002
      %4004 = vrot.lane.b32.xlu0 %v3805, 127
      %v4005 = vpop.permute.xlu0 %4004
      %4006 = vrot.lane.b32.xlu0 %v3808, 127
      %v4007 = vpop.permute.xlu0 %4006
      %4008 = vrot.lane.b32.xlu0 %v3811, 127
      %v4009 = vpop.permute.xlu0 %4008
      %v4010 = vsel %vm662, %v3995, %v4003
      %v4011 = vsel %vm662, %v3997, %v4005
      %v4012 = vsel %vm662, %v3999, %v4007
      %v4013 = vsel %vm662, %v4001, %v4009
      %v4014 = vsel %vm662, %v3987, %v3995
      %v4015 = vsel %vm662, %v3989, %v3997
      %v4016 = vsel %vm662, %v3991, %v3999
      %v4017 = vsel %vm662, %v3993, %v4001
      %v4018 = vsel %vm662, %v4003, %v3987
      %v4019 = vsel %vm662, %v4005, %v3989
      %v4020 = vsel %vm662, %v4007, %v3991
      %v4021 = vsel %vm662, %v4009, %v3993
      %v4022 = vpack.c.bf16 %v4015, %v4014
      %v4023 = vpack.c.bf16 %v4011, %v4010
      %v4024 = vpack.c.bf16 %v4019, %v4018
      %v4025 = vpack.c.bf16 %v4017, %v4016
      %v4026 = vpack.c.bf16 %v4013, %v4012
      %v4027 = vpack.c.bf16 %v4021, %v4020
      %4028 = vrot.lane.b32.xlu0 %v3800, 111
      %v4029 = vpop.permute.xlu0 %4028
      %4030 = vrot.lane.b32.xlu0 %v3803, 111
      %v4031 = vpop.permute.xlu0 %4030
      %4032 = vrot.lane.b32.xlu0 %v3806, 111
      %v4033 = vpop.permute.xlu0 %4032
      %4034 = vrot.lane.b32.xlu0 %v3809, 111
      %v4035 = vpop.permute.xlu0 %4034
      %4036 = vrot.lane.b32.xlu0 %v3801, 111
      %v4037 = vpop.permute.xlu0 %4036
      %4038 = vrot.lane.b32.xlu0 %v3804, 111
      %v4039 = vpop.permute.xlu0 %4038
      %4040 = vrot.lane.b32.xlu0 %v3807, 111
      %v4041 = vpop.permute.xlu0 %4040
      %4042 = vrot.lane.b32.xlu0 %v3810, 111
      %v4043 = vpop.permute.xlu0 %4042
      %4044 = vrot.lane.b32.xlu0 %v3802, 111
      %v4045 = vpop.permute.xlu0 %4044
      %4046 = vrot.lane.b32.xlu0 %v3805, 111
      %v4047 = vpop.permute.xlu0 %4046
      %4048 = vrot.lane.b32.xlu0 %v3808, 111
      %v4049 = vpop.permute.xlu0 %4048
      %4050 = vrot.lane.b32.xlu0 %v3811, 111
      %v4051 = vpop.permute.xlu0 %4050
      %v4052 = vsel %vm684, %v4037, %v4045
      %v4053 = vsel %vm684, %v4039, %v4047
      %v4054 = vsel %vm684, %v4041, %v4049
      %v4055 = vsel %vm684, %v4043, %v4051
      %v4056 = vsel %vm684, %v4029, %v4037
      %v4057 = vsel %vm684, %v4031, %v4039
      %v4058 = vsel %vm684, %v4033, %v4041
      %v4059 = vsel %vm684, %v4035, %v4043
      %v4060 = vsel %vm684, %v4045, %v4029
      %v4061 = vsel %vm684, %v4047, %v4031
      %v4062 = vsel %vm684, %v4049, %v4033
      %v4063 = vsel %vm684, %v4051, %v4035
      %v4064 = vpack.c.bf16 %v4057, %v4056
      %v4065 = vpack.c.bf16 %v4053, %v4052
      %v4066 = vpack.c.bf16 %v4061, %v4060
      %v4067 = vpack.c.bf16 %v4059, %v4058
      %v4068 = vpack.c.bf16 %v4055, %v4054
      %v4069 = vpack.c.bf16 %v4063, %v4062
      %4070 = vrot.lane.b32.xlu0 %v3800, 110
      %v4071 = vpop.permute.xlu0 %4070
      %4072 = vrot.lane.b32.xlu0 %v3803, 110
      %v4073 = vpop.permute.xlu0 %4072
      %4074 = vrot.lane.b32.xlu0 %v3806, 110
      %v4075 = vpop.permute.xlu0 %4074
      %4076 = vrot.lane.b32.xlu0 %v3809, 110
      %v4077 = vpop.permute.xlu0 %4076
      %4078 = vrot.lane.b32.xlu0 %v3801, 110
      %v4079 = vpop.permute.xlu0 %4078
      %4080 = vrot.lane.b32.xlu0 %v3804, 110
      %v4081 = vpop.permute.xlu0 %4080
      %4082 = vrot.lane.b32.xlu0 %v3807, 110
      %v4083 = vpop.permute.xlu0 %4082
      %4084 = vrot.lane.b32.xlu0 %v3810, 110
      %v4085 = vpop.permute.xlu0 %4084
      %4086 = vrot.lane.b32.xlu0 %v3802, 110
      %v4087 = vpop.permute.xlu0 %4086
      %4088 = vrot.lane.b32.xlu0 %v3805, 110
      %v4089 = vpop.permute.xlu0 %4088
      %4090 = vrot.lane.b32.xlu0 %v3808, 110
      %v4091 = vpop.permute.xlu0 %4090
      %4092 = vrot.lane.b32.xlu0 %v3811, 110
      %v4093 = vpop.permute.xlu0 %4092
      %v4094 = vsel %vm706, %v4079, %v4087
      %v4095 = vsel %vm706, %v4081, %v4089
      %v4096 = vsel %vm706, %v4083, %v4091
      %v4097 = vsel %vm706, %v4085, %v4093
      %v4098 = vsel %vm706, %v4071, %v4079
      %v4099 = vsel %vm706, %v4073, %v4081
      %v4100 = vsel %vm706, %v4075, %v4083
      %v4101 = vsel %vm706, %v4077, %v4085
      %v4102 = vsel %vm706, %v4087, %v4071
      %v4103 = vsel %vm706, %v4089, %v4073
      %v4104 = vsel %vm706, %v4091, %v4075
      %v4105 = vsel %vm706, %v4093, %v4077
      %v4106 = vpack.c.bf16 %v4099, %v4098
      %v4107 = vpack.c.bf16 %v4095, %v4094
      %v4108 = vpack.c.bf16 %v4103, %v4102
      %v4109 = vpack.c.bf16 %v4101, %v4100
      %v4110 = vpack.c.bf16 %v4097, %v4096
      %v4111 = vpack.c.bf16 %v4105, %v4104
      %4112 = vrot.lane.b32.xlu0 %v3800, 109
      %v4113 = vpop.permute.xlu0 %4112
      %4114 = vrot.lane.b32.xlu0 %v3803, 109
      %v4115 = vpop.permute.xlu0 %4114
      %4116 = vrot.lane.b32.xlu0 %v3806, 109
      %v4117 = vpop.permute.xlu0 %4116
      %4118 = vrot.lane.b32.xlu0 %v3809, 109
      %v4119 = vpop.permute.xlu0 %4118
      %4120 = vrot.lane.b32.xlu0 %v3801, 109
      %v4121 = vpop.permute.xlu0 %4120
      %4122 = vrot.lane.b32.xlu0 %v3804, 109
      %v4123 = vpop.permute.xlu0 %4122
      %4124 = vrot.lane.b32.xlu0 %v3807, 109
      %v4125 = vpop.permute.xlu0 %4124
      %4126 = vrot.lane.b32.xlu0 %v3810, 109
      %v4127 = vpop.permute.xlu0 %4126
      %4128 = vrot.lane.b32.xlu0 %v3802, 109
      %v4129 = vpop.permute.xlu0 %4128
      %4130 = vrot.lane.b32.xlu0 %v3805, 109
      %v4131 = vpop.permute.xlu0 %4130
      %4132 = vrot.lane.b32.xlu0 %v3808, 109
      %v4133 = vpop.permute.xlu0 %4132
      %4134 = vrot.lane.b32.xlu0 %v3811, 109
      %v4135 = vpop.permute.xlu0 %4134
      %v4136 = vsel %vm728, %v4121, %v4129
      %v4137 = vsel %vm728, %v4123, %v4131
      %v4138 = vsel %vm728, %v4125, %v4133
      %v4139 = vsel %vm728, %v4127, %v4135
      %v4140 = vsel %vm728, %v4113, %v4121
      %v4141 = vsel %vm728, %v4115, %v4123
      %v4142 = vsel %vm728, %v4117, %v4125
      %v4143 = vsel %vm728, %v4119, %v4127
      %v4144 = vsel %vm728, %v4129, %v4113
      %v4145 = vsel %vm728, %v4131, %v4115
      %v4146 = vsel %vm728, %v4133, %v4117
      %v4147 = vsel %vm728, %v4135, %v4119
      %v4148 = vpack.c.bf16 %v4141, %v4140
      %v4149 = vpack.c.bf16 %v4137, %v4136
      %v4150 = vpack.c.bf16 %v4145, %v4144
      %v4151 = vpack.c.bf16 %v4143, %v4142
      %v4152 = vpack.c.bf16 %v4139, %v4138
      %v4153 = vpack.c.bf16 %v4147, %v4146
      %v4154 = vld [vmem:[%s11] sm:$0xff]
      %v4155 = vld [vmem:[%s11 + $0x8] sm:$0xff]
      %v4156 = vld [vmem:[%s11 + $0x10] sm:$0xf]
      %v4157 = vld [vmem:[%s11 + $0x14] sm:$0xff]
      %v4158 = vld [vmem:[%s11 + $0x1c] sm:$0xff]
      %v4159 = vld [vmem:[%s11 + $0x24] sm:$0xf]
      %v4160 = vld [vmem:[%s11 + $0x28] sm:$0xff]
      %v4161 = vld [vmem:[%s11 + $0x30] sm:$0xff]
      %v4162 = vld [vmem:[%s11 + $0x38] sm:$0xf]
      %v4163 = vld [vmem:[%s11 + $0x3c] sm:$0xff]
      %v4164 = vld [vmem:[%s11 + $0x44] sm:$0xff]
      %v4165 = vld [vmem:[%s11 + $0x4c] sm:$0xf]
      %v4178 = vunpack.c.l.b16 %v4154
      %v4179 = vunpack.c.h.b16 %v4154
      %v4180 = vunpack.c.l.b16 %v4155
      %v4181 = vunpack.c.h.b16 %v4155
      %v4182 = vunpack.c.l.b16 %v4156
      %v4183 = vunpack.c.l.b16 %v4157
      %v4184 = vunpack.c.h.b16 %v4157
      %v4185 = vunpack.c.l.b16 %v4158
      %v4186 = vunpack.c.h.b16 %v4158
      %v4187 = vunpack.c.l.b16 %v4159
      %v4188 = vunpack.c.l.b16 %v4160
      %v4189 = vunpack.c.h.b16 %v4160
      %v4190 = vunpack.c.l.b16 %v4161
      %v4191 = vunpack.c.h.b16 %v4161
      %v4192 = vunpack.c.l.b16 %v4162
      %v4193 = vunpack.c.l.b16 %v4163
      %v4194 = vunpack.c.h.b16 %v4163
      %v4195 = vunpack.c.l.b16 %v4164
      %v4196 = vunpack.c.h.b16 %v4164
      %v4197 = vunpack.c.l.b16 %v4165
      %v4198 = vpack.c.b16 %v4183, %v4178
      %v4199 = vpack.c.b16 %v4184, %v4179
      %v4200 = vpack.c.b16 %v4185, %v4180
      %v4201 = vpack.c.b16 %v4186, %v4181
      %v4202 = vpack.c.b16 %v4187, %v4182
      %v4203 = vpack.c.b16 %v4193, %v4188
      %v4204 = vpack.c.b16 %v4194, %v4189
      %v4205 = vpack.c.b16 %v4195, %v4190
      %v4206 = vpack.c.b16 %v4196, %v4191
      %v4207 = vpack.c.b16 %v4197, %v4192
      %v4217 = vsel %vm3196, %v4202, 0
      %v4220 = vsel %vm3196, %v4207, 0
      %4222 = vmatprep.subr.bf16.mxu0 %v1270
      %4223 = vmatpush1.bf16.msra.mxu0 %v1269
      %4224 = vmatprep.subr.bf16.mxu0 %v1267
      %4225 = vmatpush1.bf16.msra.mxu0 %v1266
      %4226 = vmatprep.subr.bf16.mxu0 %v3894
      %4227 = vmatpush1.bf16.msra.mxu0 %v3893
      %4228 = vmatprep.subr.bf16.mxu0 %v3891
      %4229 = vmatpush1.bf16.msra.mxu0 %v3890
      %4230 = vmatprep.subr.bf16.mxu0 %v1228
      %4231 = vmatpush1.bf16.msra.mxu0 %v1227
      %4232 = vmatprep.subr.bf16.mxu0 %v1225
      %4233 = vmatpush1.bf16.msra.mxu0 %v1224
      %4234 = vmatprep.subr.bf16.mxu0 %v3852
      %4235 = vmatpush1.bf16.msra.mxu0 %v3851
      %4236 = vmatprep.subr.bf16.mxu0 %v3849
      %4237 = vmatpush1.bf16.msra.mxu0 %v3848
      %4238 = vmatprep.subr.bf16.mxu0 %v1354
      %4239 = vmatpush2.bf16.msra.mxu0 %v1353
      %4240 = vmatprep.subr.bf16.mxu0 %v1351
      %4241 = vmatpush2.bf16.msra.mxu0 %v1350
      %4242 = vmatprep.subr.bf16.mxu0 %v3978
      %4243 = vmatpush2.bf16.msra.mxu0 %v3977
      %4244 = vmatprep.subr.bf16.mxu0 %v3975
      %4245 = vmatpush2.bf16.msra.mxu0 %v3974
      %4246 = vmatprep.subr.bf16.mxu0 %v1312
      %4247 = vmatpush2.bf16.msra.mxu0 %v1311
      %4248 = vmatprep.subr.bf16.mxu0 %v1309
      %4249 = vmatpush2.bf16.msra.mxu0 %v1308
      %4250 = vmatprep.subr.bf16.mxu0 %v3936
      %4251 = vmatpush2.bf16.msra.mxu0 %v3935
      %4252 = vmatprep.subr.bf16.mxu0 %v3933
      %4253 = vmatpush2.bf16.msra.mxu0 %v3932
      %4254 = vmatprep.mubr.bf16.mxu0 %v4199
      %4255 = vmatmul.mubr.bf16.gmra.mxu0 %v4198
      %v4256 = vpop.f32.mrf.mxu0
      %v4257 = vadd.f32 0.0, %v4256
      %v4258 = vpop.f32.mrf.mxu0
      %v4259 = vadd.f32 0.0, %v4258
      %v4260 = vpop.f32.mrf.mxu0
      %v4261 = vadd.f32 0.0, %v4260
      %v4262 = vpop.f32.mrf.mxu0
      %v4263 = vadd.f32 0.0, %v4262
      %4264 = vmatprep.mubr.bf16.mxu0 %v4204
      %4265 = vmatmul.mubr.bf16.gmra.mxu0 %v4203
      %v4266 = vpop.f32.mrf.mxu0
      %v4267 = vadd.f32 0.0, %v4266
      %v4268 = vpop.f32.mrf.mxu0
      %v4269 = vadd.f32 0.0, %v4268
      %v4270 = vpop.f32.mrf.mxu0
      %v4271 = vadd.f32 0.0, %v4270
      %v4272 = vpop.f32.mrf.mxu0
      %v4273 = vadd.f32 0.0, %v4272
      %4274 = vdwg.mxu0
      %4275 = vmatprep.subr.bf16.mxu0 %v1402
      %4276 = vmatpush1.bf16.msra.mxu0 %v1401
      %4277 = vmatprep.subr.bf16.mxu0 %v1399
      %4278 = vmatpush1.bf16.msra.mxu0 %v1398
      %4279 = vmatprep.subr.bf16.mxu0 %v4026
      %4280 = vmatpush1.bf16.msra.mxu0 %v4025
      %4281 = vmatprep.subr.bf16.mxu0 %v4023
      %4282 = vmatpush1.bf16.msra.mxu0 %v4022
      %4283 = vmatprep.subr.bf16.mxu0 %v1360
      %4284 = vmatpush1.bf16.msra.mxu0 %v1359
      %4285 = vmatprep.subr.bf16.mxu0 %v1357
      %4286 = vmatpush1.bf16.msra.mxu0 %v1356
      %4287 = vmatprep.subr.bf16.mxu0 %v3984
      %4288 = vmatpush1.bf16.msra.mxu0 %v3983
      %4289 = vmatprep.subr.bf16.mxu0 %v3981
      %4290 = vmatpush1.bf16.msra.mxu0 %v3980
      %4291 = vmatprep.subr.bf16.mxu0 %v1486
      %4292 = vmatpush2.bf16.msra.mxu0 %v1485
      %4293 = vmatprep.subr.bf16.mxu0 %v1483
      %4294 = vmatpush2.bf16.msra.mxu0 %v1482
      %4295 = vmatprep.subr.bf16.mxu0 %v4110
      %4296 = vmatpush2.bf16.msra.mxu0 %v4109
      %4297 = vmatprep.subr.bf16.mxu0 %v4107
      %4298 = vmatpush2.bf16.msra.mxu0 %v4106
      %4299 = vmatprep.subr.bf16.mxu0 %v1444
      %4300 = vmatpush2.bf16.msra.mxu0 %v1443
      %4301 = vmatprep.subr.bf16.mxu0 %v1441
      %4302 = vmatpush2.bf16.msra.mxu0 %v1440
      %4303 = vmatprep.subr.bf16.mxu0 %v4068
      %4304 = vmatpush2.bf16.msra.mxu0 %v4067
      %4305 = vmatprep.subr.bf16.mxu0 %v4065
      %4306 = vmatpush2.bf16.msra.mxu0 %v4064
      %4307 = vmatprep.mubr.bf16.mxu0 %v4201
      %4308 = vmatmul.mubr.bf16.gmra.mxu0 %v4200
      %v4309 = vpop.f32.mrf.mxu0
      %v4310 = vadd.f32 %v4257, %v4309
      %v4311 = vpop.f32.mrf.mxu0
      %v4312 = vadd.f32 %v4259, %v4311
      %v4313 = vpop.f32.mrf.mxu0
      %v4314 = vadd.f32 %v4261, %v4313
      %v4315 = vpop.f32.mrf.mxu0
      %v4316 = vadd.f32 %v4263, %v4315
      %4317 = vmatprep.mubr.bf16.mxu0 %v4206
      %4318 = vmatmul.mubr.bf16.gmra.mxu0 %v4205
      %v4319 = vpop.f32.mrf.mxu0
      %v4320 = vadd.f32 %v4267, %v4319
      %v4321 = vpop.f32.mrf.mxu0
      %v4322 = vadd.f32 %v4269, %v4321
      %v4323 = vpop.f32.mrf.mxu0
      %v4324 = vadd.f32 %v4271, %v4323
      %v4325 = vpop.f32.mrf.mxu0
      %v4326 = vadd.f32 %v4273, %v4325
      %4327 = vdwg.mxu0
      %4328 = vmatprep.subr.bf16.mxu0 0
      %4329 = vmatpush1.bf16.msra.mxu0 0
      %4330 = vmatprep.subr.bf16.mxu0 0
      %4331 = vmatpush1.bf16.msra.mxu0 0
      %4332 = vmatprep.subr.bf16.mxu0 0
      %4333 = vmatpush1.bf16.msra.mxu0 0
      %4334 = vmatprep.subr.bf16.mxu0 0
      %4335 = vmatpush1.bf16.msra.mxu0 0
      %4336 = vmatprep.subr.bf16.mxu0 %v1528
      %4337 = vmatpush1.bf16.msra.mxu0 %v1527
      %4338 = vmatprep.subr.bf16.mxu0 %v1525
      %4339 = vmatpush1.bf16.msra.mxu0 %v1524
      %4340 = vmatprep.subr.bf16.mxu0 %v4152
      %4341 = vmatpush1.bf16.msra.mxu0 %v4151
      %4342 = vmatprep.subr.bf16.mxu0 %v4149
      %4343 = vmatpush1.bf16.msra.mxu0 %v4148
      %4344 = vmatprep.subr.bf16.mxu0 0
      %4345 = vmatpush2.bf16.msra.mxu0 0
      %4346 = vmatprep.subr.bf16.mxu0 0
      %4347 = vmatpush2.bf16.msra.mxu0 0
      %4348 = vmatprep.subr.bf16.mxu0 0
      %4349 = vmatpush2.bf16.msra.mxu0 0
      %4350 = vmatprep.subr.bf16.mxu0 0
      %4351 = vmatpush2.bf16.msra.mxu0 0
      %4352 = vmatprep.subr.bf16.mxu0 0
      %4353 = vmatpush2.bf16.msra.mxu0 0
      %4354 = vmatprep.subr.bf16.mxu0 0
      %4355 = vmatpush2.bf16.msra.mxu0 0
      %4356 = vmatprep.subr.bf16.mxu0 0
      %4357 = vmatpush2.bf16.msra.mxu0 0
      %4358 = vmatprep.subr.bf16.mxu0 0
      %4359 = vmatpush2.bf16.msra.mxu0 0
      %4360 = vmatprep.mubr.bf16.mxu0 0
      %4361 = vmatmul.mubr.bf16.gmra.mxu0 %v4217
      %v4362 = vpop.f32.mrf.mxu0
      %v4363 = vadd.f32 %v4310, %v4362
      %v4364 = vpop.f32.mrf.mxu0
      %v4365 = vadd.f32 %v4312, %v4364
      %v4366 = vpop.f32.mrf.mxu0
      %v4367 = vadd.f32 %v4314, %v4366
      %v4368 = vpop.f32.mrf.mxu0
      %v4369 = vadd.f32 %v4316, %v4368
      %4370 = vmatprep.mubr.bf16.mxu0 0
      %4371 = vmatmul.mubr.bf16.gmra.mxu0 %v4220
      %v4372 = vpop.f32.mrf.mxu0
      %v4373 = vadd.f32 %v4320, %v4372
      %v4374 = vpop.f32.mrf.mxu0
      %v4375 = vadd.f32 %v4322, %v4374
      %v4376 = vpop.f32.mrf.mxu0
      %v4377 = vadd.f32 %v4324, %v4376
      %v4378 = vpop.f32.mrf.mxu0
      %v4379 = vadd.f32 %v4326, %v4378
      %4380 = vdwg.mxu0
      %4381 = vmatprep.subr.bf16.mxu0 0
      %4382 = vmatpush1.bf16.msra.mxu0 %v1271
      %4383 = vmatprep.subr.bf16.mxu0 0
      %4384 = vmatpush1.bf16.msra.mxu0 %v1268
      %4385 = vmatprep.subr.bf16.mxu0 0
      %4386 = vmatpush1.bf16.msra.mxu0 %v3895
      %4387 = vmatprep.subr.bf16.mxu0 0
      %4388 = vmatpush1.bf16.msra.mxu0 %v3892
      %4389 = vmatprep.subr.bf16.mxu0 0
      %4390 = vmatpush1.bf16.msra.mxu0 %v1229
      %4391 = vmatprep.subr.bf16.mxu0 0
      %4392 = vmatpush1.bf16.msra.mxu0 %v1226
      %4393 = vmatprep.subr.bf16.mxu0 0
      %4394 = vmatpush1.bf16.msra.mxu0 %v3853
      %4395 = vmatprep.subr.bf16.mxu0 0
      %4396 = vmatpush1.bf16.msra.mxu0 %v3850
      %4397 = vmatprep.subr.bf16.mxu0 0
      %4398 = vmatpush2.bf16.msra.mxu0 %v1355
      %4399 = vmatprep.subr.bf16.mxu0 0
      %4400 = vmatpush2.bf16.msra.mxu0 %v1352
      %4401 = vmatprep.subr.bf16.mxu0 0
      %4402 = vmatpush2.bf16.msra.mxu0 %v3979
      %4403 = vmatprep.subr.bf16.mxu0 0
      %4404 = vmatpush2.bf16.msra.mxu0 %v3976
      %4405 = vmatprep.subr.bf16.mxu0 0
      %4406 = vmatpush2.bf16.msra.mxu0 %v1313
      %4407 = vmatprep.subr.bf16.mxu0 0
      %4408 = vmatpush2.bf16.msra.mxu0 %v1310
      %4409 = vmatprep.subr.bf16.mxu0 0
      %4410 = vmatpush2.bf16.msra.mxu0 %v3937
      %4411 = vmatprep.subr.bf16.mxu0 0
      %4412 = vmatpush2.bf16.msra.mxu0 %v3934
      %4413 = vmatprep.mubr.bf16.mxu0 %v4199
      %4414 = vmatmul.mubr.bf16.gmra.mxu0 %v4198
      %v4415 = vpop.f32.mrf.mxu0
      %v4416 = vadd.f32 0.0, %v4415
      %v4417 = vpop.f32.mrf.mxu0
      %v4418 = vpop.f32.mrf.mxu0
      %v4419 = vadd.f32 0.0, %v4418
      %v4420 = vpop.f32.mrf.mxu0
      %4421 = vmatprep.mubr.bf16.mxu0 %v4204
      %4422 = vmatmul.mubr.bf16.gmra.mxu0 %v4203
      %v4423 = vpop.f32.mrf.mxu0
      %v4424 = vadd.f32 0.0, %v4423
      %v4425 = vpop.f32.mrf.mxu0
      %v4426 = vpop.f32.mrf.mxu0
      %v4427 = vadd.f32 0.0, %v4426
      %v4428 = vpop.f32.mrf.mxu0
      %4429 = vdwg.mxu0
      %4430 = vmatprep.subr.bf16.mxu0 0
      %4431 = vmatpush1.bf16.msra.mxu0 %v1403
      %4432 = vmatprep.subr.bf16.mxu0 0
      %4433 = vmatpush1.bf16.msra.mxu0 %v1400
      %4434 = vmatprep.subr.bf16.mxu0 0
      %4435 = vmatpush1.bf16.msra.mxu0 %v4027
      %4436 = vmatprep.subr.bf16.mxu0 0
      %4437 = vmatpush1.bf16.msra.mxu0 %v4024
      %4438 = vmatprep.subr.bf16.mxu0 0
      %4439 = vmatpush1.bf16.msra.mxu0 %v1361
      %4440 = vmatprep.subr.bf16.mxu0 0
      %4441 = vmatpush1.bf16.msra.mxu0 %v1358
      %4442 = vmatprep.subr.bf16.mxu0 0
      %4443 = vmatpush1.bf16.msra.mxu0 %v3985
      %4444 = vmatprep.subr.bf16.mxu0 0
      %4445 = vmatpush1.bf16.msra.mxu0 %v3982
      %4446 = vmatprep.subr.bf16.mxu0 0
      %4447 = vmatpush2.bf16.msra.mxu0 %v1487
      %4448 = vmatprep.subr.bf16.mxu0 0
      %4449 = vmatpush2.bf16.msra.mxu0 %v1484
      %4450 = vmatprep.subr.bf16.mxu0 0
      %4451 = vmatpush2.bf16.msra.mxu0 %v4111
      %4452 = vmatprep.subr.bf16.mxu0 0
      %4453 = vmatpush2.bf16.msra.mxu0 %v4108
      %4454 = vmatprep.subr.bf16.mxu0 0
      %4455 = vmatpush2.bf16.msra.mxu0 %v1445
      %4456 = vmatprep.subr.bf16.mxu0 0
      %4457 = vmatpush2.bf16.msra.mxu0 %v1442
      %4458 = vmatprep.subr.bf16.mxu0 0
      %4459 = vmatpush2.bf16.msra.mxu0 %v4069
      %4460 = vmatprep.subr.bf16.mxu0 0
      %4461 = vmatpush2.bf16.msra.mxu0 %v4066
      %4462 = vmatprep.mubr.bf16.mxu0 %v4201
      %4463 = vmatmul.mubr.bf16.gmra.mxu0 %v4200
      %v4464 = vpop.f32.mrf.mxu0
      %v4465 = vadd.f32 %v4416, %v4464
      %v4466 = vpop.f32.mrf.mxu0
      %v4467 = vpop.f32.mrf.mxu0
      %v4468 = vadd.f32 %v4419, %v4467
      %v4469 = vpop.f32.mrf.mxu0
      %4470 = vmatprep.mubr.bf16.mxu0 %v4206
      %4471 = vmatmul.mubr.bf16.gmra.mxu0 %v4205
      %v4472 = vpop.f32.mrf.mxu0
      %v4473 = vadd.f32 %v4424, %v4472
      %v4474 = vpop.f32.mrf.mxu0
      %v4475 = vpop.f32.mrf.mxu0
      %v4476 = vadd.f32 %v4427, %v4475
      %v4477 = vpop.f32.mrf.mxu0
      %4478 = vdwg.mxu0
      %4479 = vmatprep.subr.bf16.mxu0 0
      %4480 = vmatpush1.bf16.msra.mxu0 0
      %4481 = vmatprep.subr.bf16.mxu0 0
      %4482 = vmatpush1.bf16.msra.mxu0 0
      %4483 = vmatprep.subr.bf16.mxu0 0
      %4484 = vmatpush1.bf16.msra.mxu0 0
      %4485 = vmatprep.subr.bf16.mxu0 0
      %4486 = vmatpush1.bf16.msra.mxu0 0
      %4487 = vmatprep.subr.bf16.mxu0 0
      %4488 = vmatpush1.bf16.msra.mxu0 %v1529
      %4489 = vmatprep.subr.bf16.mxu0 0
      %4490 = vmatpush1.bf16.msra.mxu0 %v1526
      %4491 = vmatprep.subr.bf16.mxu0 0
      %4492 = vmatpush1.bf16.msra.mxu0 %v4153
      %4493 = vmatprep.subr.bf16.mxu0 0
      %4494 = vmatpush1.bf16.msra.mxu0 %v4150
      %4495 = vmatprep.subr.bf16.mxu0 0
      %4496 = vmatpush2.bf16.msra.mxu0 0
      %4497 = vmatprep.subr.bf16.mxu0 0
      %4498 = vmatpush2.bf16.msra.mxu0 0
      %4499 = vmatprep.subr.bf16.mxu0 0
      %4500 = vmatpush2.bf16.msra.mxu0 0
      %4501 = vmatprep.subr.bf16.mxu0 0
      %4502 = vmatpush2.bf16.msra.mxu0 0
      %4503 = vmatprep.subr.bf16.mxu0 0
      %4504 = vmatpush2.bf16.msra.mxu0 0
      %4505 = vmatprep.subr.bf16.mxu0 0
      %4506 = vmatpush2.bf16.msra.mxu0 0
      %4507 = vmatprep.subr.bf16.mxu0 0
      %4508 = vmatpush2.bf16.msra.mxu0 0
      %4509 = vmatprep.subr.bf16.mxu0 0
      %4510 = vmatpush2.bf16.msra.mxu0 0
      %4511 = vmatprep.mubr.bf16.mxu0 0
      %4512 = vmatmul.mubr.bf16.gmra.mxu0 %v4217
      %v4513 = vpop.f32.mrf.mxu0
      %v4514 = vadd.f32 %v4465, %v4513
      %v4515 = vpop.f32.mrf.mxu0
      %v4516 = vpop.f32.mrf.mxu0
      %v4517 = vadd.f32 %v4468, %v4516
      %v4518 = vpop.f32.mrf.mxu0
      %4519 = vmatprep.mubr.bf16.mxu0 0
      %4520 = vmatmul.mubr.bf16.gmra.mxu0 %v4220
      %v4521 = vpop.f32.mrf.mxu0
      %v4522 = vadd.f32 %v4473, %v4521
      %v4523 = vpop.f32.mrf.mxu0
      %v4524 = vpop.f32.mrf.mxu0
      %v4525 = vadd.f32 %v4476, %v4524
      %v4526 = vpop.f32.mrf.mxu0
      %4527 = vdwg.mxu0
      %v4528 = vld [vmem:[%s12] sm:$0xff]
      %v4529 = vld [vmem:[%s12 + $0x8] sm:$0xff]
      %v4530 = vld [vmem:[%s12 + $0x10] sm:$0xff]
      %v4531 = vld [vmem:[%s12 + $0x18] sm:$0xff]
      %v4532 = vld [vmem:[%s13] sm:$0xff]
      %v4533 = vld [vmem:[%s13 + $0x8] sm:$0xff]
      %v4534 = vld [vmem:[%s13 + $0x10] sm:$0xff]
      %v4535 = vld [vmem:[%s13 + $0x18] sm:$0xff]
      %v4536 = vadd.f32 %v4363, %v4367
      %v4537 = vadd.f32 %v4536, %v4373
      %v4538 = vadd.f32 %v4537, %v4377
      %v4539 = vrot.slane %v4538, 4
      %v4540 = vadd.f32 %v4538, %v4539
      %v4541 = vrot.slane %v4540, 2
      %v4542 = vadd.f32 %v4540, %v4541
      %v4543 = vrot.slane %v4542, 1
      %v4544 = vadd.f32 %v4542, %v4543
      %v4545 = vadd.f32 %v4365, %v4369
      %v4546 = vadd.f32 %v4545, %v4375
      %v4547 = vadd.f32 %v4546, %v4379
      %v4548 = vrot.slane %v4547, 4
      %v4549 = vadd.f32 %v4547, %v4548
      %v4550 = vrot.slane %v4549, 2
      %v4551 = vadd.f32 %v4549, %v4550
      %v4552 = vrot.slane %v4551, 1
      %v4553 = vadd.f32 %v4551, %v4552
      %v4554 = vadd.f32 %v4514, %v4517
      %v4555 = vadd.f32 %v4554, %v4522
      %v4556 = vadd.f32 %v4555, %v4525
      %v4557 = vrot.slane %v4556, 4
      %v4558 = vadd.f32 %v4556, %v4557
      %v4559 = vrot.slane %v4558, 2
      %v4560 = vadd.f32 %v4558, %v4559
      %v4561 = vrot.slane %v4560, 1
      %v4562 = vadd.f32 %v4560, %v4561
      %v4563 = vmul.f32 %v4544, 0.03125
      %v4564 = vmul.f32 %v4553, 0.03125
      %v4565 = vmul.f32 %v4562, 0.03125
      %v4566 = vmul.f32 %v4363, %v4363
      %v4567 = vmul.f32 %v4365, %v4365
      %v4568 = vmul.f32 %v4514, %v4514
      %v4569 = vmul.f32 %v4367, %v4367
      %v4570 = vmul.f32 %v4369, %v4369
      %v4571 = vmul.f32 %v4517, %v4517
      %v4572 = vmul.f32 %v4373, %v4373
      %v4573 = vmul.f32 %v4375, %v4375
      %v4574 = vmul.f32 %v4522, %v4522
      %v4575 = vmul.f32 %v4377, %v4377
      %v4576 = vmul.f32 %v4379, %v4379
      %v4577 = vmul.f32 %v4525, %v4525
      %v4578 = vadd.f32 %v4566, %v4569
      %v4579 = vadd.f32 %v4578, %v4572
      %v4580 = vadd.f32 %v4579, %v4575
      %v4581 = vrot.slane %v4580, 4
      %v4582 = vadd.f32 %v4580, %v4581
      %v4583 = vrot.slane %v4582, 2
      %v4584 = vadd.f32 %v4582, %v4583
      %v4585 = vrot.slane %v4584, 1
      %v4586 = vadd.f32 %v4584, %v4585
      %v4587 = vadd.f32 %v4567, %v4570
      %v4588 = vadd.f32 %v4587, %v4573
      %v4589 = vadd.f32 %v4588, %v4576
      %v4590 = vrot.slane %v4589, 4
      %v4591 = vadd.f32 %v4589, %v4590
      %v4592 = vrot.slane %v4591, 2
      %v4593 = vadd.f32 %v4591, %v4592
      %v4594 = vrot.slane %v4593, 1
      %v4595 = vadd.f32 %v4593, %v4594
      %v4596 = vadd.f32 %v4568, %v4571
      %v4597 = vadd.f32 %v4596, %v4574
      %v4598 = vadd.f32 %v4597, %v4577
      %v4599 = vrot.slane %v4598, 4
      %v4600 = vadd.f32 %v4598, %v4599
      %v4601 = vrot.slane %v4600, 2
      %v4602 = vadd.f32 %v4600, %v4601
      %v4603 = vrot.slane %v4602, 1
      %v4604 = vadd.f32 %v4602, %v4603
      %v4605 = vmul.f32 %v4586, 0.03125
      %v4606 = vmul.f32 %v4595, 0.03125
      %v4607 = vmul.f32 %v4604, 0.03125
      %v4608 = vmul.f32 %v4563, %v4563
      %v4609 = vmul.f32 %v4564, %v4564
      %v4610 = vmul.f32 %v4565, %v4565
      %v4611 = vsub.f32 %v4605, %v4608
      %v4612 = vsub.f32 %v4606, %v4609
      %v4613 = vsub.f32 %v4607, %v4610
      %v4614 = vmax.f32 %v4611, 0.0
      %v4615 = vmax.f32 %v4612, 0.0
      %v4616 = vmax.f32 %v4613, 0.0
      %v4617 = vsub.f32 %v4363, %v4563
      %v4618 = vsub.f32 %v4365, %v4564
      %v4619 = vsub.f32 %v4514, %v4565
      %v4620 = vsub.f32 %v4367, %v4563
      %v4621 = vsub.f32 %v4369, %v4564
      %v4622 = vsub.f32 %v4517, %v4565
      %v4623 = vsub.f32 %v4373, %v4563
      %v4624 = vsub.f32 %v4375, %v4564
      %v4625 = vsub.f32 %v4522, %v4565
      %v4626 = vsub.f32 %v4377, %v4563
      %v4627 = vsub.f32 %v4379, %v4564
      %v4628 = vsub.f32 %v4525, %v4565
      %v4629 = vadd.f32 %v4614, 1e-06
      %v4630 = vadd.f32 %v4615, 1e-06
      %v4631 = vadd.f32 %v4616, 1e-06
      %v4632 = vrsqrt.pop %v4629
      %v4633 = vrsqrt.pop %v4630
      %v4634 = vrsqrt.pop %v4631
      %v4635 = vmul.f32 %v4617, %v4632
      %v4636 = vmul.f32 %v4618, %v4633
      %v4637 = vmul.f32 %v4619, %v4634
      %v4638 = vmul.f32 %v4620, %v4632
      %v4639 = vmul.f32 %v4621, %v4633
      %v4640 = vmul.f32 %v4622, %v4634
      %v4641 = vmul.f32 %v4623, %v4632
      %v4642 = vmul.f32 %v4624, %v4633
      %v4643 = vmul.f32 %v4625, %v4634
      %v4644 = vmul.f32 %v4626, %v4632
      %v4645 = vmul.f32 %v4627, %v4633
      %v4646 = vmul.f32 %v4628, %v4634
      %4648 = vset.pattern.permute.xlu0 0
      %4649 = vperm.xlu0 %4648, %v4528
      %v4650 = vpop.permute.xlu0 %4649
      %4653 = vset.pattern.permute.xlu0 0
      %4654 = vperm.xlu0 %4653, %v4529
      %v4655 = vpop.permute.xlu0 %4654
      %4658 = vset.pattern.permute.xlu0 0
      %4659 = vperm.xlu0 %4658, %v4530
      %v4660 = vpop.permute.xlu0 %4659
      %4663 = vset.pattern.permute.xlu0 0
      %4664 = vperm.xlu0 %4663, %v4531
      %v4665 = vpop.permute.xlu0 %4664
      %v4667 = vmul.f32 %v4650, %v4635
      %v4668 = vmul.f32 %v4650, %v4636
      %v4669 = vmul.f32 %v4650, %v4637
      %v4670 = vmul.f32 %v4655, %v4638
      %v4671 = vmul.f32 %v4655, %v4639
      %v4672 = vmul.f32 %v4655, %v4640
      %v4673 = vmul.f32 %v4660, %v4641
      %v4674 = vmul.f32 %v4660, %v4642
      %v4675 = vmul.f32 %v4660, %v4643
      %v4676 = vmul.f32 %v4665, %v4644
      %v4677 = vmul.f32 %v4665, %v4645
      %v4678 = vmul.f32 %v4665, %v4646
      %4680 = vset.pattern.permute.xlu0 0
      %4681 = vperm.xlu0 %4680, %v4532
      %v4682 = vpop.permute.xlu0 %4681
      %4685 = vset.pattern.permute.xlu0 0
      %4686 = vperm.xlu0 %4685, %v4533
      %v4687 = vpop.permute.xlu0 %4686
      %4690 = vset.pattern.permute.xlu0 0
      %4691 = vperm.xlu0 %4690, %v4534
      %v4692 = vpop.permute.xlu0 %4691
      %4695 = vset.pattern.permute.xlu0 0
      %4696 = vperm.xlu0 %4695, %v4535
      %v4697 = vpop.permute.xlu0 %4696
      %v4699 = vadd.f32 %v4667, %v4682
      %v4700 = vadd.f32 %v4668, %v4682
      %v4701 = vadd.f32 %v4669, %v4682
      %v4702 = vadd.f32 %v4670, %v4687
      %v4703 = vadd.f32 %v4671, %v4687
      %v4704 = vadd.f32 %v4672, %v4687
      %v4705 = vadd.f32 %v4673, %v4692
      %v4706 = vadd.f32 %v4674, %v4692
      %v4707 = vadd.f32 %v4675, %v4692
      %v4708 = vadd.f32 %v4676, %v4697
      %v4709 = vadd.f32 %v4677, %v4697
      %v4710 = vadd.f32 %v4678, %v4697
      %v4711 = vmul.f32 %v4699, 0.5
      %v4712 = vmul.f32 %v4700, 0.5
      %v4713 = vmul.f32 %v4701, 0.5
      %v4714 = vmul.f32 %v4702, 0.5
      %v4715 = vmul.f32 %v4703, 0.5
      %v4716 = vmul.f32 %v4704, 0.5
      %v4717 = vmul.f32 %v4705, 0.5
      %v4718 = vmul.f32 %v4706, 0.5
      %v4719 = vmul.f32 %v4707, 0.5
      %v4720 = vmul.f32 %v4708, 0.5
      %v4721 = vmul.f32 %v4709, 0.5
      %v4722 = vmul.f32 %v4710, 0.5
      %v4723 = vmul.f32 %v4699, %v4699
      %v4724 = vmul.f32 %v4700, %v4700
      %v4725 = vmul.f32 %v4701, %v4701
      %v4726 = vmul.f32 %v4702, %v4702
      %v4727 = vmul.f32 %v4703, %v4703
      %v4728 = vmul.f32 %v4704, %v4704
      %v4729 = vmul.f32 %v4705, %v4705
      %v4730 = vmul.f32 %v4706, %v4706
      %v4731 = vmul.f32 %v4707, %v4707
      %v4732 = vmul.f32 %v4708, %v4708
      %v4733 = vmul.f32 %v4709, %v4709
      %v4734 = vmul.f32 %v4710, %v4710
      %v4735 = vmul.f32 %v4723, %v4699
      %v4736 = vmul.f32 %v4724, %v4700
      %v4737 = vmul.f32 %v4725, %v4701
      %v4738 = vmul.f32 %v4726, %v4702
      %v4739 = vmul.f32 %v4727, %v4703
      %v4740 = vmul.f32 %v4728, %v4704
      %v4741 = vmul.f32 %v4729, %v4705
      %v4742 = vmul.f32 %v4730, %v4706
      %v4743 = vmul.f32 %v4731, %v4707
      %v4744 = vmul.f32 %v4732, %v4708
      %v4745 = vmul.f32 %v4733, %v4709
      %v4746 = vmul.f32 %v4734, %v4710
      %v4747 = vmul.f32 %v4735, 0.044715
      %v4748 = vmul.f32 %v4736, 0.044715
      %v4749 = vmul.f32 %v4737, 0.044715
      %v4750 = vmul.f32 %v4738, 0.044715
      %v4751 = vmul.f32 %v4739, 0.044715
      %v4752 = vmul.f32 %v4740, 0.044715
      %v4753 = vmul.f32 %v4741, 0.044715
      %v4754 = vmul.f32 %v4742, 0.044715
      %v4755 = vmul.f32 %v4743, 0.044715
      %v4756 = vmul.f32 %v4744, 0.044715
      %v4757 = vmul.f32 %v4745, 0.044715
      %v4758 = vmul.f32 %v4746, 0.044715
      %v4759 = vadd.f32 %v4699, %v4747
      %v4760 = vadd.f32 %v4700, %v4748
      %v4761 = vadd.f32 %v4701, %v4749
      %v4762 = vadd.f32 %v4702, %v4750
      %v4763 = vadd.f32 %v4703, %v4751
      %v4764 = vadd.f32 %v4704, %v4752
      %v4765 = vadd.f32 %v4705, %v4753
      %v4766 = vadd.f32 %v4706, %v4754
      %v4767 = vadd.f32 %v4707, %v4755
      %v4768 = vadd.f32 %v4708, %v4756
      %v4769 = vadd.f32 %v4709, %v4757
      %v4770 = vadd.f32 %v4710, %v4758
      %v4771 = vmul.f32 %v4759, 0.7978846
      %v4772 = vmul.f32 %v4760, 0.7978846
      %v4773 = vmul.f32 %v4761, 0.7978846
      %v4774 = vmul.f32 %v4762, 0.7978846
      %v4775 = vmul.f32 %v4763, 0.7978846
      %v4776 = vmul.f32 %v4764, 0.7978846
      %v4777 = vmul.f32 %v4765, 0.7978846
      %v4778 = vmul.f32 %v4766, 0.7978846
      %v4779 = vmul.f32 %v4767, 0.7978846
      %v4780 = vmul.f32 %v4768, 0.7978846
      %v4781 = vmul.f32 %v4769, 0.7978846
      %v4782 = vmul.f32 %v4770, 0.7978846
      %v4783 = vtanh.pop %v4771
      %v4784 = vtanh.pop %v4772
      %v4785 = vtanh.pop %v4773
      %v4786 = vtanh.pop %v4774
      %v4787 = vtanh.pop %v4775
      %v4788 = vtanh.pop %v4776
      %v4789 = vtanh.pop %v4777
      %v4790 = vtanh.pop %v4778
      %v4791 = vtanh.pop %v4779
      %v4792 = vtanh.pop %v4780
      %v4793 = vtanh.pop %v4781
      %v4794 = vtanh.pop %v4782
      %v4795 = vadd.f32 %v4783, 1.0
      %v4796 = vadd.f32 %v4784, 1.0
      %v4797 = vadd.f32 %v4785, 1.0
      %v4798 = vadd.f32 %v4786, 1.0
      %v4799 = vadd.f32 %v4787, 1.0
      %v4800 = vadd.f32 %v4788, 1.0
      %v4801 = vadd.f32 %v4789, 1.0
      %v4802 = vadd.f32 %v4790, 1.0
      %v4803 = vadd.f32 %v4791, 1.0
      %v4804 = vadd.f32 %v4792, 1.0
      %v4805 = vadd.f32 %v4793, 1.0
      %v4806 = vadd.f32 %v4794, 1.0
      %v4807 = vmul.f32 %v4711, %v4795
      %v4808 = vmul.f32 %v4712, %v4796
      %v4809 = vmul.f32 %v4713, %v4797
      %v4810 = vmul.f32 %v4714, %v4798
      %v4811 = vmul.f32 %v4715, %v4799
      %v4812 = vmul.f32 %v4716, %v4800
      %v4813 = vmul.f32 %v4717, %v4801
      %v4814 = vmul.f32 %v4718, %v4802
      %v4815 = vmul.f32 %v4719, %v4803
      %v4816 = vmul.f32 %v4720, %v4804
      %v4817 = vmul.f32 %v4721, %v4805
      %v4818 = vmul.f32 %v4722, %v4806
      %v4819 = vmul.f32 %v4807, %v1164
      %v4820 = vmul.f32 %v4808, %v1168
      %v4821 = vmul.f32 %v4809, %v1172
      %v4822 = vmul.f32 %v4810, %v1164
      %v4823 = vmul.f32 %v4811, %v1168
      %v4824 = vmul.f32 %v4812, %v1172
      %v4825 = vmul.f32 %v4813, %v1164
      %v4826 = vmul.f32 %v4814, %v1168
      %v4827 = vmul.f32 %v4815, %v1172
      %v4828 = vmul.f32 %v4816, %v1164
      %v4829 = vmul.f32 %v4817, %v1168
      %v4830 = vmul.f32 %v4818, %v1172
      %v4831 = vld [vmem:[%s14] sm:$0xf]
      %v4832 = vpack.c.bf16 %v4822, %v4819
      %v4833 = vpack.c.bf16 %v4823, %v4820
      %v4834 = vpack.c.bf16 %v4824, %v4821
      %v4835 = vpack.c.bf16 %v4828, %v4825
      %v4836 = vpack.c.bf16 %v4829, %v4826
      %v4837 = vpack.c.bf16 %v4830, %v4827
      %v4839 = vsel %vm1606, %v4831, 0
      %4841 = vmatprep.subr.bf16.mxu0 0
      %4842 = vmatpush1.bf16.msra.mxu0 0
      %4843 = vmatprep.subr.bf16.mxu0 0
      %4844 = vmatpush1.bf16.msra.mxu0 0
      %4845 = vmatprep.subr.bf16.mxu0 0
      %4846 = vmatpush1.bf16.msra.mxu0 0
      %4847 = vmatprep.subr.bf16.mxu0 0
      %4848 = vmatpush1.bf16.msra.mxu0 0
      %4849 = vmatprep.subr.bf16.mxu0 0
      %4850 = vmatpush1.bf16.msra.mxu0 0
      %4851 = vmatprep.subr.bf16.mxu0 0
      %4852 = vmatpush1.bf16.msra.mxu0 0
      %4853 = vmatprep.subr.bf16.mxu0 %v4836
      %4854 = vmatpush1.bf16.msra.mxu0 %v4835
      %4855 = vmatprep.subr.bf16.mxu0 %v4833
      %4856 = vmatpush1.bf16.msra.mxu0 %v4832
      %4857 = vmatprep.subr.bf16.mxu0 0
      %4858 = vmatpush2.bf16.msra.mxu0 0
      %4859 = vmatprep.subr.bf16.mxu0 0
      %4860 = vmatpush2.bf16.msra.mxu0 0
      %4861 = vmatprep.subr.bf16.mxu0 0
      %4862 = vmatpush2.bf16.msra.mxu0 0
      %4863 = vmatprep.subr.bf16.mxu0 0
      %4864 = vmatpush2.bf16.msra.mxu0 0
      %4865 = vmatprep.subr.bf16.mxu0 0
      %4866 = vmatpush2.bf16.msra.mxu0 0
      %4867 = vmatprep.subr.bf16.mxu0 0
      %4868 = vmatpush2.bf16.msra.mxu0 0
      %4869 = vmatprep.subr.bf16.mxu0 0
      %4870 = vmatpush2.bf16.msra.mxu0 0
      %4871 = vmatprep.subr.bf16.mxu0 0
      %4872 = vmatpush2.bf16.msra.mxu0 0
      %4873 = vmatprep.mubr.bf16.mxu0 0
      %4874 = vmatmul.mubr.bf16.gmra.mxu0 %v4839
      %v4875 = vpop.f32.mrf.mxu0
      %v4876 = vadd.f32 0.0, %v4875
      %v4877 = vpop.f32.mrf.mxu0
      %v4878 = vadd.f32 0.0, %v4877
      %v4879 = vpop.f32.mrf.mxu0
      %v4880 = vpop.f32.mrf.mxu0
      %4881 = vdwg.mxu0
      %4882 = vmatprep.subr.bf16.mxu0 0
      %4883 = vmatpush1.bf16.msra.mxu0 0
      %4884 = vmatprep.subr.bf16.mxu0 0
      %4885 = vmatpush1.bf16.msra.mxu0 0
      %4886 = vmatprep.subr.bf16.mxu0 0
      %4887 = vmatpush1.bf16.msra.mxu0 0
      %4888 = vmatprep.subr.bf16.mxu0 0
      %4889 = vmatpush1.bf16.msra.mxu0 0
      %4890 = vmatprep.subr.bf16.mxu0 0
      %4891 = vmatpush1.bf16.msra.mxu0 0
      %4892 = vmatprep.subr.bf16.mxu0 0
      %4893 = vmatpush1.bf16.msra.mxu0 0
      %4894 = vmatprep.subr.bf16.mxu0 0
      %4895 = vmatpush1.bf16.msra.mxu0 %v4837
      %4896 = vmatprep.subr.bf16.mxu0 0
      %4897 = vmatpush1.bf16.msra.mxu0 %v4834
      %4898 = vmatprep.subr.bf16.mxu0 0
      %4899 = vmatpush2.bf16.msra.mxu0 0
      %4900 = vmatprep.subr.bf16.mxu0 0
      %4901 = vmatpush2.bf16.msra.mxu0 0
      %4902 = vmatprep.subr.bf16.mxu0 0
      %4903 = vmatpush2.bf16.msra.mxu0 0
      %4904 = vmatprep.subr.bf16.mxu0 0
      %4905 = vmatpush2.bf16.msra.mxu0 0
      %4906 = vmatprep.subr.bf16.mxu0 0
      %4907 = vmatpush2.bf16.msra.mxu0 0
      %4908 = vmatprep.subr.bf16.mxu0 0
      %4909 = vmatpush2.bf16.msra.mxu0 0
      %4910 = vmatprep.subr.bf16.mxu0 0
      %4911 = vmatpush2.bf16.msra.mxu0 0
      %4912 = vmatprep.subr.bf16.mxu0 0
      %4913 = vmatpush2.bf16.msra.mxu0 0
      %4914 = vmatprep.mubr.bf16.mxu0 0
      %4915 = vmatmul.mubr.bf16.gmra.mxu0 %v4839
      %v4916 = vpop.f32.mrf.mxu0
      %v4917 = vadd.f32 0.0, %v4916
      %v4918 = vpop.f32.mrf.mxu0
      %v4919 = vpop.f32.mrf.mxu0
      %v4920 = vpop.f32.mrf.mxu0
      %4921 = vdwg.mxu0
      %v4922 = vld [vmem:[%s15] sm:$0xff]
      %v4923 = vld [vmem:[%s16] sm:$0xff]
      %v4924 = vrot.slane %v4876, 4
      %v4925 = vadd.f32 %v4876, %v4924
      %v4926 = vrot.slane %v4925, 2
      %v4927 = vadd.f32 %v4925, %v4926
      %v4928 = vrot.slane %v4927, 1
      %v4929 = vadd.f32 %v4927, %v4928
      %v4930 = vrot.slane %v4878, 4
      %v4931 = vadd.f32 %v4878, %v4930
      %v4932 = vrot.slane %v4931, 2
      %v4933 = vadd.f32 %v4931, %v4932
      %v4934 = vrot.slane %v4933, 1
      %v4935 = vadd.f32 %v4933, %v4934
      %v4936 = vrot.slane %v4917, 4
      %v4937 = vadd.f32 %v4917, %v4936
      %v4938 = vrot.slane %v4937, 2
      %v4939 = vadd.f32 %v4937, %v4938
      %v4940 = vrot.slane %v4939, 1
      %v4941 = vadd.f32 %v4939, %v4940
      %v4942 = vmul.f32 %v4929, 0.33333334
      %v4943 = vmul.f32 %v4935, 0.33333334
      %v4944 = vmul.f32 %v4941, 0.33333334
      %v4945 = vmul.f32 %v4876, %v4876
      %v4946 = vmul.f32 %v4878, %v4878
      %v4947 = vmul.f32 %v4917, %v4917
      %v4948 = vrot.slane %v4945, 4
      %v4949 = vadd.f32 %v4945, %v4948
      %v4950 = vrot.slane %v4949, 2
      %v4951 = vadd.f32 %v4949, %v4950
      %v4952 = vrot.slane %v4951, 1
      %v4953 = vadd.f32 %v4951, %v4952
      %v4954 = vrot.slane %v4946, 4
      %v4955 = vadd.f32 %v4946, %v4954
      %v4956 = vrot.slane %v4955, 2
      %v4957 = vadd.f32 %v4955, %v4956
      %v4958 = vrot.slane %v4957, 1
      %v4959 = vadd.f32 %v4957, %v4958
      %v4960 = vrot.slane %v4947, 4
      %v4961 = vadd.f32 %v4947, %v4960
      %v4962 = vrot.slane %v4961, 2
      %v4963 = vadd.f32 %v4961, %v4962
      %v4964 = vrot.slane %v4963, 1
      %v4965 = vadd.f32 %v4963, %v4964
      %v4966 = vmul.f32 %v4953, 0.33333334
      %v4967 = vmul.f32 %v4959, 0.33333334
      %v4968 = vmul.f32 %v4965, 0.33333334
      %v4969 = vmul.f32 %v4942, %v4942
      %v4970 = vmul.f32 %v4943, %v4943
      %v4971 = vmul.f32 %v4944, %v4944
      %v4972 = vsub.f32 %v4966, %v4969
      %v4973 = vsub.f32 %v4967, %v4970
      %v4974 = vsub.f32 %v4968, %v4971
      %v4975 = vmax.f32 %v4972, 0.0
      %v4976 = vmax.f32 %v4973, 0.0
      %v4977 = vmax.f32 %v4974, 0.0
      %v4978 = vsub.f32 %v4876, %v4942
      %v4979 = vsub.f32 %v4878, %v4943
      %v4980 = vsub.f32 %v4917, %v4944
      %v4981 = vadd.f32 %v4975, 1e-06
      %v4982 = vadd.f32 %v4976, 1e-06
      %v4983 = vadd.f32 %v4977, 1e-06
      %v4984 = vrsqrt.pop %v4981
      %v4985 = vrsqrt.pop %v4982
      %v4986 = vrsqrt.pop %v4983
      %v4987 = vmul.f32 %v4978, %v4984
      %v4988 = vmul.f32 %v4979, %v4985
      %v4989 = vmul.f32 %v4980, %v4986
      %4991 = vset.pattern.permute.xlu0 0
      %4992 = vperm.xlu0 %4991, %v4922
      %v4993 = vpop.permute.xlu0 %4992
      %v4995 = vmul.f32 %v4993, %v4987
      %v4996 = vmul.f32 %v4993, %v4988
      %v4997 = vmul.f32 %v4993, %v4989
      %4999 = vset.pattern.permute.xlu0 0
      %5000 = vperm.xlu0 %4999, %v4923
      %v5001 = vpop.permute.xlu0 %5000
      %v5003 = vadd.f32 %v4995, %v5001
      %v5004 = vadd.f32 %v4996, %v5001
      %v5005 = vadd.f32 %v4997, %v5001
      %v5006 = vrot.slane %v5003, 4
      %v5007 = vmax.f32 %v5003, %v5006
      %v5008 = vrot.slane %v5007, 2
      %v5009 = vmax.f32 %v5007, %v5008
      %v5010 = vrot.slane %v5009, 1
      %v5011 = vmax.f32 %v5009, %v5010
      %v5012 = vrot.slane %v5004, 4
      %v5013 = vmax.f32 %v5004, %v5012
      %v5014 = vrot.slane %v5013, 2
      %v5015 = vmax.f32 %v5013, %v5014
      %v5016 = vrot.slane %v5015, 1
      %v5017 = vmax.f32 %v5015, %v5016
      %v5018 = vrot.slane %v5005, 4
      %v5019 = vmax.f32 %v5005, %v5018
      %v5020 = vrot.slane %v5019, 2
      %v5021 = vmax.f32 %v5019, %v5020
      %v5022 = vrot.slane %v5021, 1
      %v5023 = vmax.f32 %v5021, %v5022
      %v5024 = vsub.f32 %v5003, %v5011
      %v5025 = vsub.f32 %v5004, %v5017
      %v5026 = vsub.f32 %v5005, %v5023
      %v5027 = vmul.f32 %v5024, 1.442695
      %v5028 = vpow.pop %v5027
      %v5029 = vmul.f32 %v5025, 1.442695
      %v5030 = vpow.pop %v5029
      %v5031 = vmul.f32 %v5026, 1.442695
      %v5032 = vpow.pop %v5031
      %v5033 = vrot.slane %v5028, 4
      %v5034 = vadd.f32 %v5028, %v5033
      %v5035 = vrot.slane %v5034, 2
      %v5036 = vadd.f32 %v5034, %v5035
      %v5037 = vrot.slane %v5036, 1
      %v5038 = vadd.f32 %v5036, %v5037
      %v5039 = vrot.slane %v5030, 4
      %v5040 = vadd.f32 %v5030, %v5039
      %v5041 = vrot.slane %v5040, 2
      %v5042 = vadd.f32 %v5040, %v5041
      %v5043 = vrot.slane %v5042, 1
      %v5044 = vadd.f32 %v5042, %v5043
      %v5045 = vrot.slane %v5032, 4
      %v5046 = vadd.f32 %v5032, %v5045
      %v5047 = vrot.slane %v5046, 2
      %v5048 = vadd.f32 %v5046, %v5047
      %v5049 = vrot.slane %v5048, 1
      %v5050 = vadd.f32 %v5048, %v5049
      %v5051 = vrcp.pop %v5038
      %v5052 = vmul.f32 %v5028, %v5051
      %v5053 = vrcp.pop %v5044
      %v5054 = vmul.f32 %v5030, %v5053
      %v5055 = vrcp.pop %v5050
      %v5056 = vmul.f32 %v5032, %v5055
      %5057 = vst [vmem:[%s548] sm:$0xff] %v5052
      %5058 = vst [vmem:[%s548 + $0x8] sm:$0xff] %v5054
      %5059 = vst [vmem:[%s548 + $0x10] sm:$0xff] %v5056
      %p5060 = scmp.lt.s32.totalorder %s28, 1
      %s5061 = scalar_select %p5060, %s28, 1
      %s5062 = smul.addr %s5061, 3
      %s5063 = smul.addr %s5062, 8
      %s5064 = scalar_lea.vmem %s17, %s5063
      // Predicated region
      $region89: #{ssgnet_forward.1} parent=87 // pred_check
        %p5065 = pneg %p408
      $region90: #{ssgnet_forward.1} parent=87 // pred_check_branch
        %5067 = sbr.rel (%p5065) target = $region92
      $region91: #{ssgnet_forward.1} parent=87 // pred_region
        _
      $region92: #{ssgnet_forward.1} parent=87 // pred_fallthru
        _
    $region88: #{ssgnet_forward.1} parent=5 // pred_fallthru
      _
    %p5068 = scmp.le.s32.totalorder 2, %s23
    // Predicated region
    $region93: #{ssgnet_forward.1} parent=5 // pred_check
      %p5069 = pneg %p5068
    $region94: #{ssgnet_forward.1} parent=5 // pred_check_branch
      %5071 = sbr.rel (%p5069) target = $region96
    $region95: #{ssgnet_forward.1} parent=5 // pred_region
      %s5072 = ssub.s32 %s23, 2
      // Predicated region
      $region97: #{ssgnet_forward.1} parent=95 // pred_check
        %p5073 = pneg %p414
      $region98: #{ssgnet_forward.1} parent=95 // pred_check_branch
        %5075 = sbr.rel (%p5073) target = $region100
      $region99: #{ssgnet_forward.1} parent=95 // pred_region
        %p5076 = scmp.lt.s32.totalorder %s29, 1
        %s5077 = scalar_select %p5076, %s29, 1
        %s5078 = smul.addr %s5077, 3
        %s5079 = smul.addr %s5078, 8
        %s5080 = scalar_lea.vmem %s17, %s5079
      $region100: #{ssgnet_forward.1} parent=95 // pred_fallthru
        _
    $region96: #{ssgnet_forward.1} parent=5 // pred_fallthru
      _
  $region6: #{ssgnet_forward.1} parent=0 // loop_footer
    %s27 = sadd.s32 1, %s23
  $region7: #{ssgnet_forward.1} parent=0 // loop_footer_branch
    %22 = sbr.rel target = $region3
  $region8: #{ssgnet_forward.1} parent=0 // loop_exit
    _

</llo_original>
